<compile_context>
chip_gen: v7x
topology: tpu7x:2x2x1
jax: 0.10.0
libtpu: 0.0.40
codegen_flags: <defaults>
</compile_context>

<pallas_src>
import math
import functools

import jax
import jax.numpy as jnp
from jax import lax
from jax.experimental import pallas as pl
from jax.experimental.pallas import tpu as pltpu

LN_EPS = 1e-5  # torch.nn.LayerNorm / TransformerEncoderLayer default eps


# ----------------------------------------------------------------------------
# in-kernel helpers
# ----------------------------------------------------------------------------
def _layernorm(x, g, b):
    mu = jnp.mean(x, axis=-1, keepdims=True)
    var = jnp.mean((x - mu) ** 2, axis=-1, keepdims=True)
    return (x - mu) * lax.rsqrt(var + LN_EPS) * g + b


def _erf(x):
    # float32 rational approximation of erf (max abs err ~1.5e-7): reproduces
    # torch's exact (erf-based) GELU with primitives that lower in Mosaic.
    a1, a2, a3, a4, a5 = 0.254829592, -0.284496736, 1.421413741, -1.453152027, 1.061405429
    p = 0.3275911
    sgn = jnp.where(x >= 0.0, 1.0, -1.0)
    ax = jnp.abs(x)
    t = 1.0 / (1.0 + p * ax)
    poly = ((((a5 * t + a4) * t + a3) * t + a2) * t + a1) * t
    return sgn * (1.0 - poly * jnp.exp(-ax * ax))


def _gelu_exact(x):
    return 0.5 * x * (1.0 + _erf(x * (1.0 / math.sqrt(2.0))))


def _full_spec(shape):
    shape = tuple(shape)
    zeros = (0,) * len(shape)

    def idx(l):
        return zeros

    return pl.BlockSpec(shape, idx)


def _layer_spec(shape):
    # shape = (L, ...) -> block (None, ...) selecting layer l each grid step.
    rest = tuple(shape[1:])
    zeros = (0,) * len(rest)

    def idx(l):
        return (l,) + zeros

    return pl.BlockSpec((None,) + rest, idx)


# ----------------------------------------------------------------------------
# Fused forward kernel: prelude + one transformer layer per grid step + heads
# ----------------------------------------------------------------------------
def _lm_fwd_kernel(x_ref, pos_ref, ning_ref, ninb_ref, past_ref,
                   wq_ref, bq_ref, wkv_ref, bkv_ref, wo_ref, bo_ref,
                   n1g_ref, n1b_ref, w1_ref, b1_ref, w2_ref, b2_ref,
                   n2g_ref, n2b_ref, wh_ref, bh_ref,
                   probs_ref, states_ref, x_scr,
                   *, batch, num_heads, past_len, past_context, card):
    f32 = jnp.float32
    bf16 = jnp.bfloat16

    l = pl.program_id(0)
    n_layers = pl.num_programs(0)

    BT, C = x_ref.shape
    B = batch
    T = BT // B
    _, Pp, _ = past_ref.shape          # padded past length
    Sp = Pp + T                        # sublane-aligned kv length
    H = num_heads
    hd = C // H
    P = past_len                       # real past length
    pad = Pp - P                       # zero-pad rows at the front of the past
    KC = wh_ref.shape[1]
    K = KC // card
    scale = 1.0 / math.sqrt(hd)

    # ---- prelude (first grid step only): norm_in + positional embedding ----
    @pl.when(l == 0)
    def _():
        x_scr[...] = (_layernorm(x_ref[...], ning_ref[...], ninb_ref[...])
                      + pos_ref[...])

    x = x_scr[...]                                              # (B*T, C) f32

    # ---- streaming attention bias (pad rows + past_context window) ---------
    q_pos = lax.broadcasted_iota(jnp.int32, (T, Sp), 0) + P
    k_idx = lax.broadcasted_iota(jnp.int32, (T, Sp), 1)
    delta = q_pos - (k_idx - pad)
    valid = (k_idx >= pad) & (delta >= 0) & (delta <= past_context)
    bias = jnp.where(valid, 0.0, -1e30)[None].astype(f32)       # (1, T, Sp)

    # ---- Q projection over all B*T rows (one lane/MXU matmul) --------------
    q = jnp.dot(x.astype(bf16), wq_ref[...],
                preferred_element_type=f32) + bq_ref[...]       # (B*T, C)

    # ---- kv = [zero-pad ; past ; x], built in registers, stored ONCE -------
    kv = jnp.concatenate([past_ref[...], x.reshape(B, T, C)], axis=1)  # (B,Sp,C)
    states_ref[...] = kv

    # fused K/V projection, batched over all B rows: one (B*Sp, C) @ (C, 2C)
    kvp = jnp.dot(kv.reshape(B * Sp, C).astype(bf16), wkv_ref[...],
                  preferred_element_type=f32) + bkv_ref[...]    # (B*Sp, 2C)
    kvp = kvp.reshape(B, Sp, 2 * C)
    q3 = q.reshape(B, T, C)

    # ---- attention: per head, batched over B; head re-assembly folded into
    #      the output projection (no attn scratch, no masked head stores) ----
    attn = jnp.zeros((BT, C), f32)
    for h in range(H):
        lo = h * hd
        qh = q3[:, :, lo:lo + hd]                               # (B, T, hd)
        kh = kvp[:, :, lo:lo + hd]                              # (B, Sp, hd)
        vh = kvp[:, :, C + lo:C + lo + hd]                      # (B, Sp, hd)
        s = jnp.einsum('btd,bsd->bts', qh.astype(bf16), kh.astype(bf16),
                       preferred_element_type=f32) * scale + bias
        s = s - jnp.max(s, axis=-1, keepdims=True)
        p = jnp.exp(s)
        p = p * pl.reciprocal(jnp.sum(p, axis=-1, keepdims=True), approx=True)
        o = jnp.einsum('bts,bsd->btd', p.astype(bf16), vh.astype(bf16),
                       preferred_element_type=f32)              # (B, T, hd)
        attn = attn + jnp.dot(o.reshape(BT, hd).astype(bf16), wo_ref[h],
                              preferred_element_type=f32)
    attn = attn + bo_ref[...]

    # ---- post-norm residual blocks (norm_first=False) -----------------------
    y = _layernorm(x + attn, n1g_ref[...], n1b_ref[...])
    hmid = jnp.dot(y.astype(bf16), w1_ref[...],
                   preferred_element_type=f32) + b1_ref[...]
    hmid = _gelu_exact(hmid)
    z = jnp.dot(hmid.astype(bf16), w2_ref[...],
                preferred_element_type=f32) + b2_ref[...]
    x_new = _layernorm(y + z, n2g_ref[...], n2b_ref[...])
    x_scr[...] = x_new

    # ---- epilogue (last grid step): fused output heads + exact softmax -----
    @pl.when(l == n_layers - 1)
    def _():
        logits = jnp.dot(x_new.astype(bf16), wh_ref[...],
                         preferred_element_type=f32) + bh_ref[...]  # (B*T, K*card)
        parts = []
        for k in range(K):
            lk = logits[:, k * card:(k + 1) * card]
            lk = lk - jnp.max(lk, axis=-1, keepdims=True)
            e = jnp.exp(lk)
            parts.append(e / jnp.sum(e, axis=-1, keepdims=True))   # exact divide
        probs_ref[...] = jnp.concatenate(parts, axis=-1)           # lane-dense store


# ----------------------------------------------------------------------------
# Model (plain-Python container; forward = one fused Pallas kernel + JAX glue)
# ----------------------------------------------------------------------------
class LMModelPallas:
    def __init__(self, key, *, n_q=4, card=32, dim=32, num_heads=4, num_layers=2,
                 hidden_scale=4.0, max_period=10000.0, past_context=1000):
        assert dim % num_heads == 0 and dim % 2 == 0
        self.n_q, self.card, self.dim = n_q, card, dim
        self.num_heads, self.num_layers = num_heads, num_layers
        self.max_period, self.past_context = max_period, past_context
        hidden = int(dim * hidden_scale)
        self.hidden = hidden
        L = num_layers
        hd = dim // num_heads

        keys = iter(jax.random.split(key, 4096))

        def nrm(shape, scale=0.02):
            return (scale * jax.random.normal(next(keys), shape)).astype(jnp.float32)

        # embedding tables: (n_q, card + 1, dim)  (gather done in plain JAX)
        self.emb = jnp.stack([nrm((card + 1, dim), 1.0) for _ in range(n_q)])

        # norm_in (LayerNorm)
        self.norm_in_g = jnp.ones((1, dim), jnp.float32)
        self.norm_in_b = jnp.zeros((1, dim), jnp.float32)

        # transformer layers, stacked along a leading L axis; matmul weights
        # stored pre-transposed as (in, out) and in bf16 (f32 accumulation).
        bf16 = jnp.bfloat16
        self.wq = jnp.stack([nrm((dim, dim)) for _ in range(L)]).astype(bf16)
        self.bq = jnp.stack([nrm((1, dim)) for _ in range(L)])
        self.wkv = jnp.stack([nrm((dim, 2 * dim)) for _ in range(L)]).astype(bf16)
        self.bkv = jnp.stack([nrm((1, 2 * dim)) for _ in range(L)])
        # wo stored (L, H, hd, dim): head re-assembly folds into the contraction
        self.wo = (jnp.stack([nrm((dim, dim)) for _ in range(L)])
                   .reshape(L, num_heads, hd, dim).astype(bf16))
        self.bo = jnp.stack([nrm((1, dim)) for _ in range(L)])
        self.n1g = jnp.ones((L, 1, dim), jnp.float32)
        self.n1b = jnp.zeros((L, 1, dim), jnp.float32)
        self.w1 = jnp.stack([nrm((dim, hidden)) for _ in range(L)]).astype(bf16)
        self.b1 = jnp.stack([nrm((1, hidden)) for _ in range(L)])
        self.w2 = jnp.stack([nrm((hidden, dim)) for _ in range(L)]).astype(bf16)
        self.b2 = jnp.stack([nrm((1, dim)) for _ in range(L)])
        self.n2g = jnp.ones((L, 1, dim), jnp.float32)
        self.n2b = jnp.zeros((L, 1, dim), jnp.float32)

        # fused output heads: one lane-dense (dim, n_q*card) matrix + bias
        self.lin_w = jnp.concatenate([nrm((dim, card)) for _ in range(n_q)],
                                     axis=1).astype(bf16)        # (dim, K*card)
        self.lin_b = jnp.concatenate([nrm((1, card)) for _ in range(n_q)], axis=1)

    def __call__(self, indices, states=None, offset=0):
        B, K, T = indices.shape
        assert K == self.n_q
        C, L, H = self.dim, self.num_layers, self.num_heads
        hid = self.hidden
        KC = K * self.card

        # embedding lookup + sum over codebooks (data-dependent gather -> glue)
        x = jnp.zeros((B, T, C), jnp.float32)
        for k in range(K):
            x = x + self.emb[k][indices[:, k, :]]
        x_flat = x.reshape(B * T, C)

        if states is None:
            states = [jnp.zeros((B, 1, C), jnp.float32) for _ in range(L)]
        past = jnp.stack(states, axis=0)                        # (L, B, P, C)
        P = past.shape[2]
        S = P + T
        # pad the past at the FRONT so S is sublane (8) aligned; padded rows
        # are masked in-kernel and sliced off the returned states.
        Sp = -(-S // 8) * 8
        Pp = Sp - T
        pad = Pp - P
        past_pad = jnp.pad(past, ((0, 0), (0, 0), (pad, 0), (0, 0)))

        # create_sin_embedding (glue), tiled to match the flattened rows
        half = C // 2
        pos = (jnp.arange(T, dtype=jnp.float32) + float(offset)).reshape(T, 1)
        adim = jnp.arange(half, dtype=jnp.float32).reshape(1, half)
        phase = pos / (self.max_period ** (adim / (half - 1)))
        pos_emb = jnp.concatenate([jnp.cos(phase), jnp.sin(phase)], axis=-1)
        pos_flat = jnp.tile(pos_emb, (B, 1))                    # (B*T, C)

        kern = functools.partial(_lm_fwd_kernel, batch=B, num_heads=H,
                                 past_len=P, past_context=self.past_context,
                                 card=self.card)

        in_specs = [
            _full_spec((B * T, C)), _full_spec((B * T, C)),
            _full_spec((1, C)), _full_spec((1, C)),
            _layer_spec((L, B, Pp, C)),
            _layer_spec((L, C, C)), _layer_spec((L, 1, C)),
            _layer_spec((L, C, 2 * C)), _layer_spec((L, 1, 2 * C)),
            _layer_spec((L, H, C // H, C)), _layer_spec((L, 1, C)),
            _layer_spec((L, 1, C)), _layer_spec((L, 1, C)),
            _layer_spec((L, C, hid)), _layer_spec((L, 1, hid)),
            _layer_spec((L, hid, C)), _layer_spec((L, 1, C)),
            _layer_spec((L, 1, C)), _layer_spec((L, 1, C)),
            _full_spec((C, KC)), _full_spec((1, KC)),
        ]
        out_specs = (_full_spec((B * T, KC)),
                     _layer_spec((L, B, Sp, C)))

        probs_flat, states_out = pl.pallas_call(
            kern,
            out_shape=(jax.ShapeDtypeStruct((B * T, KC), jnp.float32),
                       jax.ShapeDtypeStruct((L, B, Sp, C), jnp.float32)),
            grid=(L,),
            in_specs=in_specs,
            out_specs=out_specs,
            scratch_shapes=[pltpu.VMEM((B * T, C), jnp.float32)],
            compiler_params=pltpu.CompilerParams(
                dimension_semantics=("arbitrary",),
                # modest limit: per-layer streaming keeps the footprint small
                # (v7x has only 64 MiB physical VMEM per TensorCore)
                vmem_limit_bytes=32 * 1024 * 1024),
        )(x_flat, pos_flat, self.norm_in_g, self.norm_in_b, past_pad,
          self.wq, self.bq, self.wkv, self.bkv, self.wo, self.bo,
          self.n1g, self.n1b, self.w1, self.b1, self.w2, self.b2,
          self.n2g, self.n2b, self.lin_w, self.lin_b)

        # strip the sublane padding; keep reference streaming-state semantics
        # (raw [past ; x], truncated to past_context)
        new_states = [states_out[l][:, pad:, :][:, -self.past_context:, :]
                      for l in range(L)]

        # (B*T, K*card) -> (B, card, K, T) PyTorch output layout (layout glue;
        # the per-card softmax was done exactly in-kernel)
        probs = probs_flat.reshape(B, T, K, self.card).transpose(0, 3, 2, 1)
        return probs, new_states, offset + T


if __name__ == "__main__":
    key = jax.random.PRNGKey(0)
    k_model, k_idx = jax.random.split(key)

    # small shapes consistent with LMModel defaults (n_q, card, dim scaled down)
    n_q, card, dim = 4, 32, 32
    B, T = 2, 8

    model = LMModelPallas(k_model, n_q=n_q, card=card, dim=dim,
                          num_heads=4, num_layers=2)
    indices = jax.random.randint(k_idx, (B, n_q, T), 0, card + 1, dtype=jnp.int32)

    probs, states, offset = model(indices, states=None, offset=0)
    jax.block_until_ready(probs)
    jax.block_until_ready(states)

    assert probs.shape == (B, card, n_q, T)
    assert offset == T
    assert len(states) == 2 and states[0].shape == (B, 1 + T, dim)
    # probabilities over the card axis must sum to ~1 (exact in-kernel softmax)
    s = jnp.sum(probs, axis=1)
    assert bool(jnp.all(jnp.abs(s - 1.0) < 1e-3))
    print("KERNEL_OK")
</pallas_src>

<mosaic_0001>
module attributes {stable_mosaic.version = 11 : i64} {
  func.func @_lm_fwd_kernel(%arg0: i32, %arg1: memref<16x32xf32, #tpu.memory_space<vmem>>, %arg2: memref<16x32xf32, #tpu.memory_space<vmem>>, %arg3: memref<1x32xf32, #tpu.memory_space<vmem>>, %arg4: memref<1x32xf32, #tpu.memory_space<vmem>>, %arg5: memref<1x2x8x32xf32, #tpu.memory_space<vmem>>, %arg6: memref<1x32x32xbf16, #tpu.memory_space<vmem>>, %arg7: memref<1x1x32xf32, #tpu.memory_space<vmem>>, %arg8: memref<1x32x64xbf16, #tpu.memory_space<vmem>>, %arg9: memref<1x1x64xf32, #tpu.memory_space<vmem>>, %arg10: memref<1x4x8x32xbf16, #tpu.memory_space<vmem>>, %arg11: memref<1x1x32xf32, #tpu.memory_space<vmem>>, %arg12: memref<1x1x32xf32, #tpu.memory_space<vmem>>, %arg13: memref<1x1x32xf32, #tpu.memory_space<vmem>>, %arg14: memref<1x32x128xbf16, #tpu.memory_space<vmem>>, %arg15: memref<1x1x128xf32, #tpu.memory_space<vmem>>, %arg16: memref<1x128x32xbf16, #tpu.memory_space<vmem>>, %arg17: memref<1x1x32xf32, #tpu.memory_space<vmem>>, %arg18: memref<1x1x32xf32, #tpu.memory_space<vmem>>, %arg19: memref<1x1x32xf32, #tpu.memory_space<vmem>>, %arg20: memref<32x128xbf16, #tpu.memory_space<vmem>>, %arg21: memref<1x128xf32, #tpu.memory_space<vmem>>, %arg22: memref<16x128xf32, #tpu.memory_space<vmem>>, %arg23: memref<1x2x16x32xf32, #tpu.memory_space<vmem>>, %arg24: memref<16x32xf32, #tpu.memory_space<vmem>>) attributes {dimension_semantics = [#tpu.dimension_semantics<arbitrary>], iteration_bounds = array<i64: 2>, scalar_prefetch = 0 : i64, scratch_operands = 1 : i64, tpu.core_type = #tpu.core_type<tc>, window_params = [{pipeline_mode = #tpu.pipeline_mode<synchronous>, transform_indices = @transform_0, window_bounds = array<i64: 16, 32>}, {pipeline_mode = #tpu.pipeline_mode<synchronous>, transform_indices = @transform_1, window_bounds = array<i64: 16, 32>}, {pipeline_mode = #tpu.pipeline_mode<synchronous>, transform_indices = @transform_2, window_bounds = array<i64: 1, 32>}, {pipeline_mode = #tpu.pipeline_mode<synchronous>, transform_indices = @transform_3, window_bounds = array<i64: 1, 32>}, {transform_indices = @transform_4, window_bounds = array<i64: 1, 2, 8, 32>}, {transform_indices = @transform_5, window_bounds = array<i64: 1, 32, 32>}, {transform_indices = @transform_6, window_bounds = array<i64: 1, 1, 32>}, {transform_indices = @transform_7, window_bounds = array<i64: 1, 32, 64>}, {transform_indices = @transform_8, window_bounds = array<i64: 1, 1, 64>}, {transform_indices = @transform_9, window_bounds = array<i64: 1, 4, 8, 32>}, {transform_indices = @transform_10, window_bounds = array<i64: 1, 1, 32>}, {transform_indices = @transform_11, window_bounds = array<i64: 1, 1, 32>}, {transform_indices = @transform_12, window_bounds = array<i64: 1, 1, 32>}, {transform_indices = @transform_13, window_bounds = array<i64: 1, 32, 128>}, {transform_indices = @transform_14, window_bounds = array<i64: 1, 1, 128>}, {transform_indices = @transform_15, window_bounds = array<i64: 1, 128, 32>}, {transform_indices = @transform_16, window_bounds = array<i64: 1, 1, 32>}, {transform_indices = @transform_17, window_bounds = array<i64: 1, 1, 32>}, {transform_indices = @transform_18, window_bounds = array<i64: 1, 1, 32>}, {pipeline_mode = #tpu.pipeline_mode<synchronous>, transform_indices = @transform_19, window_bounds = array<i64: 32, 128>}, {pipeline_mode = #tpu.pipeline_mode<synchronous>, transform_indices = @transform_20, window_bounds = array<i64: 1, 128>}, {pipeline_mode = #tpu.pipeline_mode<synchronous>, transform_indices = @transform_21, window_bounds = array<i64: 16, 128>}, {transform_indices = @transform_22, window_bounds = array<i64: 1, 2, 16, 32>}]} {
    %c0_i32 = arith.constant 0 : i32
    %0 = arith.cmpi eq, %arg0, %c0_i32 : i32
    %1 = arith.extui %0 : i1 to i32
    %c0_i32_0 = arith.constant 0 : i32
    %2 = arith.cmpi ne, %1, %c0_i32_0 : i32
    scf.if %2 {
      %c0_124 = arith.constant 0 : index
      %c0_125 = arith.constant 0 : index
      %285 = vector.load %arg1[%c0_124, %c0_125] : memref<16x32xf32, #tpu.memory_space<vmem>>, vector<16x32xf32>
      %c0_126 = arith.constant 0 : index
      %c0_127 = arith.constant 0 : index
      %286 = vector.load %arg3[%c0_126, %c0_127] : memref<1x32xf32, #tpu.memory_space<vmem>>, vector<1x32xf32>
      %c0_128 = arith.constant 0 : index
      %c0_129 = arith.constant 0 : index
      %287 = vector.load %arg4[%c0_128, %c0_129] : memref<1x32xf32, #tpu.memory_space<vmem>>, vector<1x32xf32>
      %cst_130 = arith.constant dense<0.000000e+00> : vector<16xf32>
      %288 = vector.multi_reduction <add>, %285, %cst_130 [1] : vector<16x32xf32> to vector<16xf32>
      %289 = vector.shape_cast %288 : vector<16xf32> to vector<16x1xf32>
      %cst_131 = arith.constant 3.200000e+01 : f32
      %290 = vector.broadcast %cst_131 : f32 to vector<16x1xf32>
      %291 = arith.divf %289, %290 : vector<16x1xf32>
      %292 = vector.broadcast %291 : vector<16x1xf32> to vector<16x32xf32>
      %293 = arith.subf %285, %292 : vector<16x32xf32>
      %294 = arith.mulf %293, %293 : vector<16x32xf32>
      %cst_132 = arith.constant dense<0.000000e+00> : vector<16xf32>
      %295 = vector.multi_reduction <add>, %294, %cst_132 [1] : vector<16x32xf32> to vector<16xf32>
      %296 = vector.shape_cast %295 : vector<16xf32> to vector<16x1xf32>
      %cst_133 = arith.constant 3.200000e+01 : f32
      %297 = vector.broadcast %cst_133 : f32 to vector<16x1xf32>
      %298 = arith.divf %296, %297 : vector<16x1xf32>
      %299 = vector.broadcast %291 : vector<16x1xf32> to vector<16x32xf32>
      %300 = arith.subf %285, %299 : vector<16x32xf32>
      %cst_134 = arith.constant 9.99999974E-6 : f32
      %301 = vector.broadcast %cst_134 : f32 to vector<16x1xf32>
      %302 = arith.addf %298, %301 : vector<16x1xf32>
      %303 = math.rsqrt %302 : vector<16x1xf32>
      %304 = vector.broadcast %303 : vector<16x1xf32> to vector<16x32xf32>
      %305 = arith.mulf %300, %304 : vector<16x32xf32>
      %306 = vector.broadcast %286 : vector<1x32xf32> to vector<16x32xf32>
      %307 = arith.mulf %305, %306 : vector<16x32xf32>
      %308 = vector.broadcast %287 : vector<1x32xf32> to vector<16x32xf32>
      %309 = arith.addf %307, %308 : vector<16x32xf32>
      %c0_135 = arith.constant 0 : index
      %c0_136 = arith.constant 0 : index
      %310 = vector.load %arg2[%c0_135, %c0_136] : memref<16x32xf32, #tpu.memory_space<vmem>>, vector<16x32xf32>
      %311 = arith.addf %309, %310 : vector<16x32xf32>
      %c0_137 = arith.constant 0 : index
      %c0_138 = arith.constant 0 : index
      %312 = vector.load %arg24[%c0_137, %c0_138] : memref<16x32xf32, #tpu.memory_space<vmem>>, vector<16x32xf32>
      tpu.vector_store %arg24[%c0_137, %c0_138], %311 {strides = array<i32>} : memref<16x32xf32, #tpu.memory_space<vmem>>, vector<16x32xf32>,
    } else {
    }
    %c0 = arith.constant 0 : index
    %c0_1 = arith.constant 0 : index
    %3 = vector.load %arg24[%c0, %c0_1] : memref<16x32xf32, #tpu.memory_space<vmem>>, vector<16x32xf32>
    %4 = tpu.iota {dimensions = array<i32: 0>} : vector<8x16xi32>
    %c1_i32 = arith.constant 1 : i32
    %5 = vector.broadcast %c1_i32 : i32 to vector<8x16xi32>
    %6 = arith.addi %4, %5 : vector<8x16xi32>
    %7 = tpu.iota {dimensions = array<i32: 1>} : vector<8x16xi32>
    %c7_i32 = arith.constant 7 : i32
    %8 = vector.broadcast %c7_i32 : i32 to vector<8x16xi32>
    %9 = arith.subi %7, %8 : vector<8x16xi32>
    %10 = arith.subi %6, %9 : vector<8x16xi32>
    %c7_i32_2 = arith.constant 7 : i32
    %11 = vector.broadcast %c7_i32_2 : i32 to vector<8x16xi32>
    %12 = arith.cmpi sge, %7, %11 : vector<8x16xi32>
    %c0_i32_3 = arith.constant 0 : i32
    %13 = vector.broadcast %c0_i32_3 : i32 to vector<8x16xi32>
    %14 = arith.cmpi sge, %10, %13 : vector<8x16xi32>
    %15 = arith.andi %12, %14 : vector<8x16xi1>
    %c1000_i32 = arith.constant 1000 : i32
    %16 = vector.broadcast %c1000_i32 : i32 to vector<8x16xi32>
    %17 = arith.cmpi sle, %10, %16 : vector<8x16xi32>
    %18 = arith.andi %15, %17 : vector<8x16xi1>
    %cst = arith.constant 0.000000e+00 : f32
    %cst_4 = arith.constant -1.000000e+30 : f32
    %19 = vector.broadcast %cst : f32 to vector<8x16xf32>
    %20 = vector.broadcast %cst_4 : f32 to vector<8x16xf32>
    %21 = arith.select %18, %19, %20 : vector<8x16xi1>, vector<8x16xf32>
    %22 = vector.shape_cast %21 : vector<8x16xf32> to vector<1x8x16xf32>
    %23 = arith.truncf %3 : vector<16x32xf32> to vector<16x32xbf16>
    %c0_5 = arith.constant 0 : index
    %c0_6 = arith.constant 0 : index
    %c0_7 = arith.constant 0 : index
    %24 = vector.load %arg6[%c0_5, %c0_6, %c0_7] : memref<1x32x32xbf16, #tpu.memory_space<vmem>>, vector<1x32x32xbf16>
    %25 = vector.shape_cast %24 : vector<1x32x32xbf16> to vector<32x32xbf16>
    %cst_8 = arith.constant dense<0.000000e+00> : vector<16x32xf32>
    %26 = tpu.matmul %23, %25, %cst_8 {dimension_numbers = #tpu.dot_dimension_numbers<[1], [0], [0], [1], [0, 0, 1, 1], [], []>} : vector<16x32xbf16>, vector<32x32xbf16>, vector<16x32xf32> -> vector<16x32xf32>
    %c0_9 = arith.constant 0 : index
    %c0_10 = arith.constant 0 : index
    %c0_11 = arith.constant 0 : index
    %27 = vector.load %arg7[%c0_9, %c0_10, %c0_11] : memref<1x1x32xf32, #tpu.memory_space<vmem>>, vector<1x1x32xf32>
    %28 = vector.shape_cast %27 : vector<1x1x32xf32> to vector<1x32xf32>
    %29 = vector.broadcast %28 : vector<1x32xf32> to vector<16x32xf32>
    %30 = arith.addf %26, %29 : vector<16x32xf32>
    %c0_12 = arith.constant 0 : index
    %c0_13 = arith.constant 0 : index
    %c0_14 = arith.constant 0 : index
    %c0_15 = arith.constant 0 : index
    %31 = vector.load %arg5[%c0_12, %c0_13, %c0_14, %c0_15] : memref<1x2x8x32xf32, #tpu.memory_space<vmem>>, vector<1x2x8x32xf32>
    %32 = vector.shape_cast %31 : vector<1x2x8x32xf32> to vector<2x8x32xf32>
    %33 = vector.shape_cast %3 : vector<16x32xf32> to vector<2x8x32xf32>
    %34 = tpu.concatenate %32, %33 in 1 : vector<2x8x32xf32>, vector<2x8x32xf32> -> vector<2x16x32xf32>
    %c0_16 = arith.constant 0 : index
    %c0_17 = arith.constant 0 : index
    %c0_18 = arith.constant 0 : index
    %c0_19 = arith.constant 0 : index
    %35 = vector.load %arg23[%c0_16, %c0_17, %c0_18, %c0_19] : memref<1x2x16x32xf32, #tpu.memory_space<vmem>>, vector<1x2x16x32xf32>
    %36 = vector.shape_cast %35 : vector<1x2x16x32xf32> to vector<2x16x32xf32>
    %37 = vector.shape_cast %34 : vector<2x16x32xf32> to vector<1x2x16x32xf32>
    tpu.vector_store %arg23[%c0_16, %c0_17, %c0_18, %c0_19], %37 {strides = array<i32>} : memref<1x2x16x32xf32, #tpu.memory_space<vmem>>, vector<1x2x16x32xf32>,
    %38 = vector.shape_cast %34 : vector<2x16x32xf32> to vector<32x32xf32>
    %39 = arith.truncf %38 : vector<32x32xf32> to vector<32x32xbf16>
    %c0_20 = arith.constant 0 : index
    %c0_21 = arith.constant 0 : index
    %c0_22 = arith.constant 0 : index
    %40 = vector.load %arg8[%c0_20, %c0_21, %c0_22] : memref<1x32x64xbf16, #tpu.memory_space<vmem>>, vector<1x32x64xbf16>
    %41 = vector.shape_cast %40 : vector<1x32x64xbf16> to vector<32x64xbf16>
    %cst_23 = arith.constant dense<0.000000e+00> : vector<32x64xf32>
    %42 = tpu.matmul %39, %41, %cst_23 {dimension_numbers = #tpu.dot_dimension_numbers<[1], [0], [0], [1], [0, 0, 1, 1], [], []>} : vector<32x32xbf16>, vector<32x64xbf16>, vector<32x64xf32> -> vector<32x64xf32>
    %c0_24 = arith.constant 0 : index
    %c0_25 = arith.constant 0 : index
    %c0_26 = arith.constant 0 : index
    %43 = vector.load %arg9[%c0_24, %c0_25, %c0_26] : memref<1x1x64xf32, #tpu.memory_space<vmem>>, vector<1x1x64xf32>
    %44 = vector.shape_cast %43 : vector<1x1x64xf32> to vector<1x64xf32>
    %45 = vector.broadcast %44 : vector<1x64xf32> to vector<32x64xf32>
    %46 = arith.addf %42, %45 : vector<32x64xf32>
    %47 = vector.shape_cast %46 : vector<32x64xf32> to vector<2x16x64xf32>
    %48 = vector.shape_cast %30 : vector<16x32xf32> to vector<2x8x32xf32>
    %cst_27 = arith.constant 0.000000e+00 : f32
    %49 = vector.broadcast %cst_27 : f32 to vector<16x32xf32>
    %50 = vector.extract_strided_slice %48 {offsets = [0, 0, 0], sizes = [2, 8, 8], strides = [1, 1, 1]} : vector<2x8x32xf32> to vector<2x8x8xf32>
    %51 = vector.extract_strided_slice %47 {offsets = [0, 0, 0], sizes = [2, 16, 8], strides = [1, 1, 1]} : vector<2x16x64xf32> to vector<2x16x8xf32>
    %52 = vector.extract_strided_slice %47 {offsets = [0, 0, 32], sizes = [2, 16, 8], strides = [1, 1, 1]} : vector<2x16x64xf32> to vector<2x16x8xf32>
    %53 = arith.truncf %50 : vector<2x8x8xf32> to vector<2x8x8xbf16>
    %54 = arith.truncf %51 : vector<2x16x8xf32> to vector<2x16x8xbf16>
    "tpu.trace_start"() <{level = 10 : i32, message = "btd,bsd->bts"}> : () -> ()
    %cst_28 = arith.constant dense<0.000000e+00> : vector<2x8x16xf32>
    %55 = tpu.matmul %53, %54, %cst_28 {dimension_numbers = #tpu.dot_dimension_numbers<[2], [2], [1], [1], [0, 0, 0, 1, 1, 1], [0], [0]>} : vector<2x8x8xbf16>, vector<2x16x8xbf16>, vector<2x8x16xf32> -> vector<2x8x16xf32>
    "tpu.trace_stop"() : () -> ()
    %cst_29 = arith.constant 0.353553385 : f32
    %56 = vector.broadcast %cst_29 : f32 to vector<2x8x16xf32>
    %57 = arith.mulf %55, %56 : vector<2x8x16xf32>
    %58 = vector.broadcast %22 : vector<1x8x16xf32> to vector<2x8x16xf32>
    %59 = arith.addf %57, %58 : vector<2x8x16xf32>
    %cst_30 = arith.constant dense<0xFF800000> : vector<2x8xf32>
    %60 = vector.multi_reduction <maximumf>, %59, %cst_30 [2] : vector<2x8x16xf32> to vector<2x8xf32>
    %61 = vector.shape_cast %60 : vector<2x8xf32> to vector<2x8x1xf32>
    %62 = vector.broadcast %61 : vector<2x8x1xf32> to vector<2x8x16xf32>
    %63 = arith.subf %59, %62 : vector<2x8x16xf32>
    %64 = math.exp %63 : vector<2x8x16xf32>
    %cst_31 = arith.constant dense<0.000000e+00> : vector<2x8xf32>
    %65 = vector.multi_reduction <add>, %64, %cst_31 [2] : vector<2x8x16xf32> to vector<2x8xf32>
    %66 = vector.shape_cast %65 : vector<2x8xf32> to vector<2x8x1xf32>
    %67 = tpu.reciprocal %66 {approx = true} : vector<2x8x1xf32> -> vector<2x8x1xf32>
    %68 = vector.broadcast %67 : vector<2x8x1xf32> to vector<2x8x16xf32>
    %69 = arith.mulf %64, %68 : vector<2x8x16xf32>
    %70 = arith.truncf %69 : vector<2x8x16xf32> to vector<2x8x16xbf16>
    %71 = arith.truncf %52 : vector<2x16x8xf32> to vector<2x16x8xbf16>
    "tpu.trace_start"() <{level = 10 : i32, message = "bts,bsd->btd"}> : () -> ()
    %cst_32 = arith.constant dense<0.000000e+00> : vector<2x8x8xf32>
    %72 = tpu.matmul %70, %71, %cst_32 {dimension_numbers = #tpu.dot_dimension_numbers<[2], [1], [1], [2], [0, 0, 0, 1, 1, 2], [0], [0]>} : vector<2x8x16xbf16>, vector<2x16x8xbf16>, vector<2x8x8xf32> -> vector<2x8x8xf32>
    "tpu.trace_stop"() : () -> ()
    %73 = vector.shape_cast %72 : vector<2x8x8xf32> to vector<16x8xf32>
    %74 = arith.truncf %73 : vector<16x8xf32> to vector<16x8xbf16>
    %c0_33 = arith.constant 0 : index
    %c0_34 = arith.constant 0 : index
    %c0_35 = arith.constant 0 : index
    %c0_36 = arith.constant 0 : index
    %75 = vector.load %arg10[%c0_33, %c0_34, %c0_35, %c0_36] : memref<1x4x8x32xbf16, #tpu.memory_space<vmem>>, vector<1x1x8x32xbf16>
    %76 = vector.shape_cast %75 : vector<1x1x8x32xbf16> to vector<8x32xbf16>
    %cst_37 = arith.constant dense<0.000000e+00> : vector<16x32xf32>
    %77 = tpu.matmul %74, %76, %cst_37 {dimension_numbers = #tpu.dot_dimension_numbers<[1], [0], [0], [1], [0, 0, 1, 1], [], []>} : vector<16x8xbf16>, vector<8x32xbf16>, vector<16x32xf32> -> vector<16x32xf32>
    %78 = arith.addf %49, %77 : vector<16x32xf32>
    %79 = vector.extract_strided_slice %48 {offsets = [0, 0, 8], sizes = [2, 8, 8], strides = [1, 1, 1]} : vector<2x8x32xf32> to vector<2x8x8xf32>
    %80 = vector.extract_strided_slice %47 {offsets = [0, 0, 8], sizes = [2, 16, 8], strides = [1, 1, 1]} : vector<2x16x64xf32> to vector<2x16x8xf32>
    %81 = vector.extract_strided_slice %47 {offsets = [0, 0, 40], sizes = [2, 16, 8], strides = [1, 1, 1]} : vector<2x16x64xf32> to vector<2x16x8xf32>
    %82 = arith.truncf %79 : vector<2x8x8xf32> to vector<2x8x8xbf16>
    %83 = arith.truncf %80 : vector<2x16x8xf32> to vector<2x16x8xbf16>
    "tpu.trace_start"() <{level = 10 : i32, message = "btd,bsd->bts"}> : () -> ()
    %cst_38 = arith.constant dense<0.000000e+00> : vector<2x8x16xf32>
    %84 = tpu.matmul %82, %83, %cst_38 {dimension_numbers = #tpu.dot_dimension_numbers<[2], [2], [1], [1], [0, 0, 0, 1, 1, 1], [0], [0]>} : vector<2x8x8xbf16>, vector<2x16x8xbf16>, vector<2x8x16xf32> -> vector<2x8x16xf32>
    "tpu.trace_stop"() : () -> ()
    %cst_39 = arith.constant 0.353553385 : f32
    %85 = vector.broadcast %cst_39 : f32 to vector<2x8x16xf32>
    %86 = arith.mulf %84, %85 : vector<2x8x16xf32>
    %87 = vector.broadcast %22 : vector<1x8x16xf32> to vector<2x8x16xf32>
    %88 = arith.addf %86, %87 : vector<2x8x16xf32>
    %cst_40 = arith.constant dense<0xFF800000> : vector<2x8xf32>
    %89 = vector.multi_reduction <maximumf>, %88, %cst_40 [2] : vector<2x8x16xf32> to vector<2x8xf32>
    %90 = vector.shape_cast %89 : vector<2x8xf32> to vector<2x8x1xf32>
    %91 = vector.broadcast %90 : vector<2x8x1xf32> to vector<2x8x16xf32>
    %92 = arith.subf %88, %91 : vector<2x8x16xf32>
    %93 = math.exp %92 : vector<2x8x16xf32>
    %cst_41 = arith.constant dense<0.000000e+00> : vector<2x8xf32>
    %94 = vector.multi_reduction <add>, %93, %cst_41 [2] : vector<2x8x16xf32> to vector<2x8xf32>
    %95 = vector.shape_cast %94 : vector<2x8xf32> to vector<2x8x1xf32>
    %96 = tpu.reciprocal %95 {approx = true} : vector<2x8x1xf32> -> vector<2x8x1xf32>
    %97 = vector.broadcast %96 : vector<2x8x1xf32> to vector<2x8x16xf32>
    %98 = arith.mulf %93, %97 : vector<2x8x16xf32>
    %99 = arith.truncf %98 : vector<2x8x16xf32> to vector<2x8x16xbf16>
    %100 = arith.truncf %81 : vector<2x16x8xf32> to vector<2x16x8xbf16>
    "tpu.trace_start"() <{level = 10 : i32, message = "bts,bsd->btd"}> : () -> ()
    %cst_42 = arith.constant dense<0.000000e+00> : vector<2x8x8xf32>
    %101 = tpu.matmul %99, %100, %cst_42 {dimension_numbers = #tpu.dot_dimension_numbers<[2], [1], [1], [2], [0, 0, 0, 1, 1, 2], [0], [0]>} : vector<2x8x16xbf16>, vector<2x16x8xbf16>, vector<2x8x8xf32> -> vector<2x8x8xf32>
    "tpu.trace_stop"() : () -> ()
    %102 = vector.shape_cast %101 : vector<2x8x8xf32> to vector<16x8xf32>
    %103 = arith.truncf %102 : vector<16x8xf32> to vector<16x8xbf16>
    %c0_43 = arith.constant 0 : index
    %c1 = arith.constant 1 : index
    %c0_44 = arith.constant 0 : index
    %c0_45 = arith.constant 0 : index
    %104 = vector.load %arg10[%c0_43, %c1, %c0_44, %c0_45] : memref<1x4x8x32xbf16, #tpu.memory_space<vmem>>, vector<1x1x8x32xbf16>
    %105 = vector.shape_cast %104 : vector<1x1x8x32xbf16> to vector<8x32xbf16>
    %cst_46 = arith.constant dense<0.000000e+00> : vector<16x32xf32>
    %106 = tpu.matmul %103, %105, %cst_46 {dimension_numbers = #tpu.dot_dimension_numbers<[1], [0], [0], [1], [0, 0, 1, 1], [], []>} : vector<16x8xbf16>, vector<8x32xbf16>, vector<16x32xf32> -> vector<16x32xf32>
    %107 = arith.addf %78, %106 : vector<16x32xf32>
    %108 = vector.extract_strided_slice %48 {offsets = [0, 0, 16], sizes = [2, 8, 8], strides = [1, 1, 1]} : vector<2x8x32xf32> to vector<2x8x8xf32>
    %109 = vector.extract_strided_slice %47 {offsets = [0, 0, 16], sizes = [2, 16, 8], strides = [1, 1, 1]} : vector<2x16x64xf32> to vector<2x16x8xf32>
    %110 = vector.extract_strided_slice %47 {offsets = [0, 0, 48], sizes = [2, 16, 8], strides = [1, 1, 1]} : vector<2x16x64xf32> to vector<2x16x8xf32>
    %111 = arith.truncf %108 : vector<2x8x8xf32> to vector<2x8x8xbf16>
    %112 = arith.truncf %109 : vector<2x16x8xf32> to vector<2x16x8xbf16>
    "tpu.trace_start"() <{level = 10 : i32, message = "btd,bsd->bts"}> : () -> ()
    %cst_47 = arith.constant dense<0.000000e+00> : vector<2x8x16xf32>
    %113 = tpu.matmul %111, %112, %cst_47 {dimension_numbers = #tpu.dot_dimension_numbers<[2], [2], [1], [1], [0, 0, 0, 1, 1, 1], [0], [0]>} : vector<2x8x8xbf16>, vector<2x16x8xbf16>, vector<2x8x16xf32> -> vector<2x8x16xf32>
    "tpu.trace_stop"() : () -> ()
    %cst_48 = arith.constant 0.353553385 : f32
    %114 = vector.broadcast %cst_48 : f32 to vector<2x8x16xf32>
    %115 = arith.mulf %113, %114 : vector<2x8x16xf32>
    %116 = vector.broadcast %22 : vector<1x8x16xf32> to vector<2x8x16xf32>
    %117 = arith.addf %115, %116 : vector<2x8x16xf32>
    %cst_49 = arith.constant dense<0xFF800000> : vector<2x8xf32>
    %118 = vector.multi_reduction <maximumf>, %117, %cst_49 [2] : vector<2x8x16xf32> to vector<2x8xf32>
    %119 = vector.shape_cast %118 : vector<2x8xf32> to vector<2x8x1xf32>
    %120 = vector.broadcast %119 : vector<2x8x1xf32> to vector<2x8x16xf32>
    %121 = arith.subf %117, %120 : vector<2x8x16xf32>
    %122 = math.exp %121 : vector<2x8x16xf32>
    %cst_50 = arith.constant dense<0.000000e+00> : vector<2x8xf32>
    %123 = vector.multi_reduction <add>, %122, %cst_50 [2] : vector<2x8x16xf32> to vector<2x8xf32>
    %124 = vector.shape_cast %123 : vector<2x8xf32> to vector<2x8x1xf32>
    %125 = tpu.reciprocal %124 {approx = true} : vector<2x8x1xf32> -> vector<2x8x1xf32>
    %126 = vector.broadcast %125 : vector<2x8x1xf32> to vector<2x8x16xf32>
    %127 = arith.mulf %122, %126 : vector<2x8x16xf32>
    %128 = arith.truncf %127 : vector<2x8x16xf32> to vector<2x8x16xbf16>
    %129 = arith.truncf %110 : vector<2x16x8xf32> to vector<2x16x8xbf16>
    "tpu.trace_start"() <{level = 10 : i32, message = "bts,bsd->btd"}> : () -> ()
    %cst_51 = arith.constant dense<0.000000e+00> : vector<2x8x8xf32>
    %130 = tpu.matmul %128, %129, %cst_51 {dimension_numbers = #tpu.dot_dimension_numbers<[2], [1], [1], [2], [0, 0, 0, 1, 1, 2], [0], [0]>} : vector<2x8x16xbf16>, vector<2x16x8xbf16>, vector<2x8x8xf32> -> vector<2x8x8xf32>
    "tpu.trace_stop"() : () -> ()
    %131 = vector.shape_cast %130 : vector<2x8x8xf32> to vector<16x8xf32>
    %132 = arith.truncf %131 : vector<16x8xf32> to vector<16x8xbf16>
    %c0_52 = arith.constant 0 : index
    %c2 = arith.constant 2 : index
    %c0_53 = arith.constant 0 : index
    %c0_54 = arith.constant 0 : index
    %133 = vector.load %arg10[%c0_52, %c2, %c0_53, %c0_54] : memref<1x4x8x32xbf16, #tpu.memory_space<vmem>>, vector<1x1x8x32xbf16>
    %134 = vector.shape_cast %133 : vector<1x1x8x32xbf16> to vector<8x32xbf16>
    %cst_55 = arith.constant dense<0.000000e+00> : vector<16x32xf32>
    %135 = tpu.matmul %132, %134, %cst_55 {dimension_numbers = #tpu.dot_dimension_numbers<[1], [0], [0], [1], [0, 0, 1, 1], [], []>} : vector<16x8xbf16>, vector<8x32xbf16>, vector<16x32xf32> -> vector<16x32xf32>
    %136 = arith.addf %107, %135 : vector<16x32xf32>
    %137 = vector.extract_strided_slice %48 {offsets = [0, 0, 24], sizes = [2, 8, 8], strides = [1, 1, 1]} : vector<2x8x32xf32> to vector<2x8x8xf32>
    %138 = vector.extract_strided_slice %47 {offsets = [0, 0, 24], sizes = [2, 16, 8], strides = [1, 1, 1]} : vector<2x16x64xf32> to vector<2x16x8xf32>
    %139 = vector.extract_strided_slice %47 {offsets = [0, 0, 56], sizes = [2, 16, 8], strides = [1, 1, 1]} : vector<2x16x64xf32> to vector<2x16x8xf32>
    %140 = arith.truncf %137 : vector<2x8x8xf32> to vector<2x8x8xbf16>
    %141 = arith.truncf %138 : vector<2x16x8xf32> to vector<2x16x8xbf16>
    "tpu.trace_start"() <{level = 10 : i32, message = "btd,bsd->bts"}> : () -> ()
    %cst_56 = arith.constant dense<0.000000e+00> : vector<2x8x16xf32>
    %142 = tpu.matmul %140, %141, %cst_56 {dimension_numbers = #tpu.dot_dimension_numbers<[2], [2], [1], [1], [0, 0, 0, 1, 1, 1], [0], [0]>} : vector<2x8x8xbf16>, vector<2x16x8xbf16>, vector<2x8x16xf32> -> vector<2x8x16xf32>
    "tpu.trace_stop"() : () -> ()
    %cst_57 = arith.constant 0.353553385 : f32
    %143 = vector.broadcast %cst_57 : f32 to vector<2x8x16xf32>
    %144 = arith.mulf %142, %143 : vector<2x8x16xf32>
    %145 = vector.broadcast %22 : vector<1x8x16xf32> to vector<2x8x16xf32>
    %146 = arith.addf %144, %145 : vector<2x8x16xf32>
    %cst_58 = arith.constant dense<0xFF800000> : vector<2x8xf32>
    %147 = vector.multi_reduction <maximumf>, %146, %cst_58 [2] : vector<2x8x16xf32> to vector<2x8xf32>
    %148 = vector.shape_cast %147 : vector<2x8xf32> to vector<2x8x1xf32>
    %149 = vector.broadcast %148 : vector<2x8x1xf32> to vector<2x8x16xf32>
    %150 = arith.subf %146, %149 : vector<2x8x16xf32>
    %151 = math.exp %150 : vector<2x8x16xf32>
    %cst_59 = arith.constant dense<0.000000e+00> : vector<2x8xf32>
    %152 = vector.multi_reduction <add>, %151, %cst_59 [2] : vector<2x8x16xf32> to vector<2x8xf32>
    %153 = vector.shape_cast %152 : vector<2x8xf32> to vector<2x8x1xf32>
    %154 = tpu.reciprocal %153 {approx = true} : vector<2x8x1xf32> -> vector<2x8x1xf32>
    %155 = vector.broadcast %154 : vector<2x8x1xf32> to vector<2x8x16xf32>
    %156 = arith.mulf %151, %155 : vector<2x8x16xf32>
    %157 = arith.truncf %156 : vector<2x8x16xf32> to vector<2x8x16xbf16>
    %158 = arith.truncf %139 : vector<2x16x8xf32> to vector<2x16x8xbf16>
    "tpu.trace_start"() <{level = 10 : i32, message = "bts,bsd->btd"}> : () -> ()
    %cst_60 = arith.constant dense<0.000000e+00> : vector<2x8x8xf32>
    %159 = tpu.matmul %157, %158, %cst_60 {dimension_numbers = #tpu.dot_dimension_numbers<[2], [1], [1], [2], [0, 0, 0, 1, 1, 2], [0], [0]>} : vector<2x8x16xbf16>, vector<2x16x8xbf16>, vector<2x8x8xf32> -> vector<2x8x8xf32>
    "tpu.trace_stop"() : () -> ()
    %160 = vector.shape_cast %159 : vector<2x8x8xf32> to vector<16x8xf32>
    %161 = arith.truncf %160 : vector<16x8xf32> to vector<16x8xbf16>
    %c0_61 = arith.constant 0 : index
    %c3 = arith.constant 3 : index
    %c0_62 = arith.constant 0 : index
    %c0_63 = arith.constant 0 : index
    %162 = vector.load %arg10[%c0_61, %c3, %c0_62, %c0_63] : memref<1x4x8x32xbf16, #tpu.memory_space<vmem>>, vector<1x1x8x32xbf16>
    %163 = vector.shape_cast %162 : vector<1x1x8x32xbf16> to vector<8x32xbf16>
    %cst_64 = arith.constant dense<0.000000e+00> : vector<16x32xf32>
    %164 = tpu.matmul %161, %163, %cst_64 {dimension_numbers = #tpu.dot_dimension_numbers<[1], [0], [0], [1], [0, 0, 1, 1], [], []>} : vector<16x8xbf16>, vector<8x32xbf16>, vector<16x32xf32> -> vector<16x32xf32>
    %165 = arith.addf %136, %164 : vector<16x32xf32>
    %c0_65 = arith.constant 0 : index
    %c0_66 = arith.constant 0 : index
    %c0_67 = arith.constant 0 : index
    %166 = vector.load %arg11[%c0_65, %c0_66, %c0_67] : memref<1x1x32xf32, #tpu.memory_space<vmem>>, vector<1x1x32xf32>
    %167 = vector.shape_cast %166 : vector<1x1x32xf32> to vector<1x32xf32>
    %168 = vector.broadcast %167 : vector<1x32xf32> to vector<16x32xf32>
    %169 = arith.addf %165, %168 : vector<16x32xf32>
    %170 = arith.addf %3, %169 : vector<16x32xf32>
    %c0_68 = arith.constant 0 : index
    %c0_69 = arith.constant 0 : index
    %c0_70 = arith.constant 0 : index
    %171 = vector.load %arg12[%c0_68, %c0_69, %c0_70] : memref<1x1x32xf32, #tpu.memory_space<vmem>>, vector<1x1x32xf32>
    %172 = vector.shape_cast %171 : vector<1x1x32xf32> to vector<1x32xf32>
    %c0_71 = arith.constant 0 : index
    %c0_72 = arith.constant 0 : index
    %c0_73 = arith.constant 0 : index
    %173 = vector.load %arg13[%c0_71, %c0_72, %c0_73] : memref<1x1x32xf32, #tpu.memory_space<vmem>>, vector<1x1x32xf32>
    %174 = vector.shape_cast %173 : vector<1x1x32xf32> to vector<1x32xf32>
    %cst_74 = arith.constant dense<0.000000e+00> : vector<16xf32>
    %175 = vector.multi_reduction <add>, %170, %cst_74 [1] : vector<16x32xf32> to vector<16xf32>
    %176 = vector.shape_cast %175 : vector<16xf32> to vector<16x1xf32>
    %cst_75 = arith.constant 3.200000e+01 : f32
    %177 = vector.broadcast %cst_75 : f32 to vector<16x1xf32>
    %178 = arith.divf %176, %177 : vector<16x1xf32>
    %179 = vector.broadcast %178 : vector<16x1xf32> to vector<16x32xf32>
    %180 = arith.subf %170, %179 : vector<16x32xf32>
    %181 = arith.mulf %180, %180 : vector<16x32xf32>
    %cst_76 = arith.constant dense<0.000000e+00> : vector<16xf32>
    %182 = vector.multi_reduction <add>, %181, %cst_76 [1] : vector<16x32xf32> to vector<16xf32>
    %183 = vector.shape_cast %182 : vector<16xf32> to vector<16x1xf32>
    %cst_77 = arith.constant 3.200000e+01 : f32
    %184 = vector.broadcast %cst_77 : f32 to vector<16x1xf32>
    %185 = arith.divf %183, %184 : vector<16x1xf32>
    %186 = vector.broadcast %178 : vector<16x1xf32> to vector<16x32xf32>
    %187 = arith.subf %170, %186 : vector<16x32xf32>
    %cst_78 = arith.constant 9.99999974E-6 : f32
    %188 = vector.broadcast %cst_78 : f32 to vector<16x1xf32>
    %189 = arith.addf %185, %188 : vector<16x1xf32>
    %190 = math.rsqrt %189 : vector<16x1xf32>
    %191 = vector.broadcast %190 : vector<16x1xf32> to vector<16x32xf32>
    %192 = arith.mulf %187, %191 : vector<16x32xf32>
    %193 = vector.broadcast %172 : vector<1x32xf32> to vector<16x32xf32>
    %194 = arith.mulf %192, %193 : vector<16x32xf32>
    %195 = vector.broadcast %174 : vector<1x32xf32> to vector<16x32xf32>
    %196 = arith.addf %194, %195 : vector<16x32xf32>
    %197 = arith.truncf %196 : vector<16x32xf32> to vector<16x32xbf16>
    %c0_79 = arith.constant 0 : index
    %c0_80 = arith.constant 0 : index
    %c0_81 = arith.constant 0 : index
    %198 = vector.load %arg14[%c0_79, %c0_80, %c0_81] : memref<1x32x128xbf16, #tpu.memory_space<vmem>>, vector<1x32x128xbf16>
    %199 = vector.shape_cast %198 : vector<1x32x128xbf16> to vector<32x128xbf16>
    %cst_82 = arith.constant dense<0.000000e+00> : vector<16x128xf32>
    %200 = tpu.matmul %197, %199, %cst_82 {dimension_numbers = #tpu.dot_dimension_numbers<[1], [0], [0], [1], [0, 0, 1, 1], [], []>} : vector<16x32xbf16>, vector<32x128xbf16>, vector<16x128xf32> -> vector<16x128xf32>
    %c0_83 = arith.constant 0 : index
    %c0_84 = arith.constant 0 : index
    %c0_85 = arith.constant 0 : index
    %201 = vector.load %arg15[%c0_83, %c0_84, %c0_85] : memref<1x1x128xf32, #tpu.memory_space<vmem>>, vector<1x1x128xf32>
    %202 = vector.shape_cast %201 : vector<1x1x128xf32> to vector<1x128xf32>
    %203 = vector.broadcast %202 : vector<1x128xf32> to vector<16x128xf32>
    %204 = arith.addf %200, %203 : vector<16x128xf32>
    %cst_86 = arith.constant 5.000000e-01 : f32
    %205 = vector.broadcast %cst_86 : f32 to vector<16x128xf32>
    %206 = arith.mulf %205, %204 : vector<16x128xf32>
    %cst_87 = arith.constant 0.707106769 : f32
    %207 = vector.broadcast %cst_87 : f32 to vector<16x128xf32>
    %208 = arith.mulf %204, %207 : vector<16x128xf32>
    %cst_88 = arith.constant 0.000000e+00 : f32
    %209 = vector.broadcast %cst_88 : f32 to vector<16x128xf32>
    %210 = arith.cmpf oge, %208, %209 : vector<16x128xf32>
    %cst_89 = arith.constant 1.000000e+00 : f32
    %cst_90 = arith.constant -1.000000e+00 : f32
    %211 = vector.broadcast %cst_89 : f32 to vector<16x128xf32>
    %212 = vector.broadcast %cst_90 : f32 to vector<16x128xf32>
    %213 = arith.select %210, %211, %212 : vector<16x128xi1>, vector<16x128xf32>
    %214 = math.absf %208 : vector<16x128xf32>
    %cst_91 = arith.constant 0.327591091 : f32
    %215 = vector.broadcast %cst_91 : f32 to vector<16x128xf32>
    %216 = arith.mulf %215, %214 : vector<16x128xf32>
    %cst_92 = arith.constant 1.000000e+00 : f32
    %217 = vector.broadcast %cst_92 : f32 to vector<16x128xf32>
    %218 = arith.addf %217, %216 : vector<16x128xf32>
    %cst_93 = arith.constant 1.000000e+00 : f32
    %219 = vector.broadcast %cst_93 : f32 to vector<16x128xf32>
    %220 = arith.divf %219, %218 : vector<16x128xf32>
    %cst_94 = arith.constant 1.06140542 : f32
    %221 = vector.broadcast %cst_94 : f32 to vector<16x128xf32>
    %222 = arith.mulf %221, %220 : vector<16x128xf32>
    %cst_95 = arith.constant -1.45315206 : f32
    %223 = vector.broadcast %cst_95 : f32 to vector<16x128xf32>
    %224 = arith.addf %222, %223 : vector<16x128xf32>
    %225 = arith.mulf %224, %220 : vector<16x128xf32>
    %cst_96 = arith.constant 1.42141378 : f32
    %226 = vector.broadcast %cst_96 : f32 to vector<16x128xf32>
    %227 = arith.addf %225, %226 : vector<16x128xf32>
    %228 = arith.mulf %227, %220 : vector<16x128xf32>
    %cst_97 = arith.constant -0.284496725 : f32
    %229 = vector.broadcast %cst_97 : f32 to vector<16x128xf32>
    %230 = arith.addf %228, %229 : vector<16x128xf32>
    %231 = arith.mulf %230, %220 : vector<16x128xf32>
    %cst_98 = arith.constant 0.254829586 : f32
    %232 = vector.broadcast %cst_98 : f32 to vector<16x128xf32>
    %233 = arith.addf %231, %232 : vector<16x128xf32>
    %234 = arith.mulf %233, %220 : vector<16x128xf32>
    %cst_99 = arith.constant 0.000000e+00 : f32
    %235 = vector.broadcast %cst_99 : f32 to vector<16x128xf32>
    %236 = arith.subf %235, %214 : vector<16x128xf32>
    %237 = arith.mulf %236, %214 : vector<16x128xf32>
    %238 = math.exp %237 : vector<16x128xf32>
    %239 = arith.mulf %234, %238 : vector<16x128xf32>
    %cst_100 = arith.constant 1.000000e+00 : f32
    %240 = vector.broadcast %cst_100 : f32 to vector<16x128xf32>
    %241 = arith.subf %240, %239 : vector<16x128xf32>
    %242 = arith.mulf %213, %241 : vector<16x128xf32>
    %cst_101 = arith.constant 1.000000e+00 : f32
    %243 = vector.broadcast %cst_101 : f32 to vector<16x128xf32>
    %244 = arith.addf %243, %242 : vector<16x128xf32>
    %245 = arith.mulf %206, %244 : vector<16x128xf32>
    %246 = arith.truncf %245 : vector<16x128xf32> to vector<16x128xbf16>
    %c0_102 = arith.constant 0 : index
    %c0_103 = arith.constant 0 : index
    %c0_104 = arith.constant 0 : index
    %247 = vector.load %arg16[%c0_102, %c0_103, %c0_104] : memref<1x128x32xbf16, #tpu.memory_space<vmem>>, vector<1x128x32xbf16>
    %248 = vector.shape_cast %247 : vector<1x128x32xbf16> to vector<128x32xbf16>
    %cst_105 = arith.constant dense<0.000000e+00> : vector<16x32xf32>
    %249 = tpu.matmul %246, %248, %cst_105 {dimension_numbers = #tpu.dot_dimension_numbers<[1], [0], [0], [1], [0, 0, 1, 1], [], []>} : vector<16x128xbf16>, vector<128x32xbf16>, vector<16x32xf32> -> vector<16x32xf32>
    %c0_106 = arith.constant 0 : index
    %c0_107 = arith.constant 0 : index
    %c0_108 = arith.constant 0 : index
    %250 = vector.load %arg17[%c0_106, %c0_107, %c0_108] : memref<1x1x32xf32, #tpu.memory_space<vmem>>, vector<1x1x32xf32>
    %251 = vector.shape_cast %250 : vector<1x1x32xf32> to vector<1x32xf32>
    %252 = vector.broadcast %251 : vector<1x32xf32> to vector<16x32xf32>
    %253 = arith.addf %249, %252 : vector<16x32xf32>
    %254 = arith.addf %196, %253 : vector<16x32xf32>
    %c0_109 = arith.constant 0 : index
    %c0_110 = arith.constant 0 : index
    %c0_111 = arith.constant 0 : index
    %255 = vector.load %arg18[%c0_109, %c0_110, %c0_111] : memref<1x1x32xf32, #tpu.memory_space<vmem>>, vector<1x1x32xf32>
    %256 = vector.shape_cast %255 : vector<1x1x32xf32> to vector<1x32xf32>
    %c0_112 = arith.constant 0 : index
    %c0_113 = arith.constant 0 : index
    %c0_114 = arith.constant 0 : index
    %257 = vector.load %arg19[%c0_112, %c0_113, %c0_114] : memref<1x1x32xf32, #tpu.memory_space<vmem>>, vector<1x1x32xf32>
    %258 = vector.shape_cast %257 : vector<1x1x32xf32> to vector<1x32xf32>
    %cst_115 = arith.constant dense<0.000000e+00> : vector<16xf32>
    %259 = vector.multi_reduction <add>, %254, %cst_115 [1] : vector<16x32xf32> to vector<16xf32>
    %260 = vector.shape_cast %259 : vector<16xf32> to vector<16x1xf32>
    %cst_116 = arith.constant 3.200000e+01 : f32
    %261 = vector.broadcast %cst_116 : f32 to vector<16x1xf32>
    %262 = arith.divf %260, %261 : vector<16x1xf32>
    %263 = vector.broadcast %262 : vector<16x1xf32> to vector<16x32xf32>
    %264 = arith.subf %254, %263 : vector<16x32xf32>
    %265 = arith.mulf %264, %264 : vector<16x32xf32>
    %cst_117 = arith.constant dense<0.000000e+00> : vector<16xf32>
    %266 = vector.multi_reduction <add>, %265, %cst_117 [1] : vector<16x32xf32> to vector<16xf32>
    %267 = vector.shape_cast %266 : vector<16xf32> to vector<16x1xf32>
    %cst_118 = arith.constant 3.200000e+01 : f32
    %268 = vector.broadcast %cst_118 : f32 to vector<16x1xf32>
    %269 = arith.divf %267, %268 : vector<16x1xf32>
    %270 = vector.broadcast %262 : vector<16x1xf32> to vector<16x32xf32>
    %271 = arith.subf %254, %270 : vector<16x32xf32>
    %cst_119 = arith.constant 9.99999974E-6 : f32
    %272 = vector.broadcast %cst_119 : f32 to vector<16x1xf32>
    %273 = arith.addf %269, %272 : vector<16x1xf32>
    %274 = math.rsqrt %273 : vector<16x1xf32>
    %275 = vector.broadcast %274 : vector<16x1xf32> to vector<16x32xf32>
    %276 = arith.mulf %271, %275 : vector<16x32xf32>
    %277 = vector.broadcast %256 : vector<1x32xf32> to vector<16x32xf32>
    %278 = arith.mulf %276, %277 : vector<16x32xf32>
    %279 = vector.broadcast %258 : vector<1x32xf32> to vector<16x32xf32>
    %280 = arith.addf %278, %279 : vector<16x32xf32>
    %c0_120 = arith.constant 0 : index
    %c0_121 = arith.constant 0 : index
    %281 = vector.load %arg24[%c0_120, %c0_121] : memref<16x32xf32, #tpu.memory_space<vmem>>, vector<16x32xf32>
    tpu.vector_store %arg24[%c0_120, %c0_121], %280 {strides = array<i32>} : memref<16x32xf32, #tpu.memory_space<vmem>>, vector<16x32xf32>,
    %c1_i32_122 = arith.constant 1 : i32
    %282 = arith.cmpi eq, %arg0, %c1_i32_122 : i32
    %283 = arith.extui %282 : i1 to i32
    %c0_i32_123 = arith.constant 0 : i32
    %284 = arith.cmpi ne, %283, %c0_i32_123 : i32
    scf.if %284 {
      %285 = arith.truncf %280 : vector<16x32xf32> to vector<16x32xbf16>
      %c0_124 = arith.constant 0 : index
      %c0_125 = arith.constant 0 : index
      %286 = vector.load %arg20[%c0_124, %c0_125] : memref<32x128xbf16, #tpu.memory_space<vmem>>, vector<32x128xbf16>
      %cst_126 = arith.constant dense<0.000000e+00> : vector<16x128xf32>
      %287 = tpu.matmul %285, %286, %cst_126 {dimension_numbers = #tpu.dot_dimension_numbers<[1], [0], [0], [1], [0, 0, 1, 1], [], []>} : vector<16x32xbf16>, vector<32x128xbf16>, vector<16x128xf32> -> vector<16x128xf32>
      %c0_127 = arith.constant 0 : index
      %c0_128 = arith.constant 0 : index
      %288 = vector.load %arg21[%c0_127, %c0_128] : memref<1x128xf32, #tpu.memory_space<vmem>>, vector<1x128xf32>
      %289 = vector.broadcast %288 : vector<1x128xf32> to vector<16x128xf32>
      %290 = arith.addf %287, %289 : vector<16x128xf32>
      %291 = vector.extract_strided_slice %290 {offsets = [0, 0], sizes = [16, 32], strides = [1, 1]} : vector<16x128xf32> to vector<16x32xf32>
      %cst_129 = arith.constant dense<0xFF800000> : vector<16xf32>
      %292 = vector.multi_reduction <maximumf>, %291, %cst_129 [1] : vector<16x32xf32> to vector<16xf32>
      %293 = vector.shape_cast %292 : vector<16xf32> to vector<16x1xf32>
      %294 = vector.broadcast %293 : vector<16x1xf32> to vector<16x32xf32>
      %295 = arith.subf %291, %294 : vector<16x32xf32>
      %296 = math.exp %295 : vector<16x32xf32>
      %cst_130 = arith.constant dense<0.000000e+00> : vector<16xf32>
      %297 = vector.multi_reduction <add>, %296, %cst_130 [1] : vector<16x32xf32> to vector<16xf32>
      %298 = vector.shape_cast %297 : vector<16xf32> to vector<16x1xf32>
      %299 = vector.broadcast %298 : vector<16x1xf32> to vector<16x32xf32>
      %300 = arith.divf %296, %299 : vector<16x32xf32>
      %301 = vector.extract_strided_slice %290 {offsets = [0, 32], sizes = [16, 32], strides = [1, 1]} : vector<16x128xf32> to vector<16x32xf32>
      %cst_131 = arith.constant dense<0xFF800000> : vector<16xf32>
      %302 = vector.multi_reduction <maximumf>, %301, %cst_131 [1] : vector<16x32xf32> to vector<16xf32>
      %303 = vector.shape_cast %302 : vector<16xf32> to vector<16x1xf32>
      %304 = vector.broadcast %303 : vector<16x1xf32> to vector<16x32xf32>
      %305 = arith.subf %301, %304 : vector<16x32xf32>
      %306 = math.exp %305 : vector<16x32xf32>
      %cst_132 = arith.constant dense<0.000000e+00> : vector<16xf32>
      %307 = vector.multi_reduction <add>, %306, %cst_132 [1] : vector<16x32xf32> to vector<16xf32>
      %308 = vector.shape_cast %307 : vector<16xf32> to vector<16x1xf32>
      %309 = vector.broadcast %308 : vector<16x1xf32> to vector<16x32xf32>
      %310 = arith.divf %306, %309 : vector<16x32xf32>
      %311 = vector.extract_strided_slice %290 {offsets = [0, 64], sizes = [16, 32], strides = [1, 1]} : vector<16x128xf32> to vector<16x32xf32>
      %cst_133 = arith.constant dense<0xFF800000> : vector<16xf32>
      %312 = vector.multi_reduction <maximumf>, %311, %cst_133 [1] : vector<16x32xf32> to vector<16xf32>
      %313 = vector.shape_cast %312 : vector<16xf32> to vector<16x1xf32>
      %314 = vector.broadcast %313 : vector<16x1xf32> to vector<16x32xf32>
      %315 = arith.subf %311, %314 : vector<16x32xf32>
      %316 = math.exp %315 : vector<16x32xf32>
      %cst_134 = arith.constant dense<0.000000e+00> : vector<16xf32>
      %317 = vector.multi_reduction <add>, %316, %cst_134 [1] : vector<16x32xf32> to vector<16xf32>
      %318 = vector.shape_cast %317 : vector<16xf32> to vector<16x1xf32>
      %319 = vector.broadcast %318 : vector<16x1xf32> to vector<16x32xf32>
      %320 = arith.divf %316, %319 : vector<16x32xf32>
      %321 = vector.extract_strided_slice %290 {offsets = [0, 96], sizes = [16, 32], strides = [1, 1]} : vector<16x128xf32> to vector<16x32xf32>
      %cst_135 = arith.constant dense<0xFF800000> : vector<16xf32>
      %322 = vector.multi_reduction <maximumf>, %321, %cst_135 [1] : vector<16x32xf32> to vector<16xf32>
      %323 = vector.shape_cast %322 : vector<16xf32> to vector<16x1xf32>
      %324 = vector.broadcast %323 : vector<16x1xf32> to vector<16x32xf32>
      %325 = arith.subf %321, %324 : vector<16x32xf32>
      %326 = math.exp %325 : vector<16x32xf32>
      %cst_136 = arith.constant dense<0.000000e+00> : vector<16xf32>
      %327 = vector.multi_reduction <add>, %326, %cst_136 [1] : vector<16x32xf32> to vector<16xf32>
      %328 = vector.shape_cast %327 : vector<16xf32> to vector<16x1xf32>
      %329 = vector.broadcast %328 : vector<16x1xf32> to vector<16x32xf32>
      %330 = arith.divf %326, %329 : vector<16x32xf32>
      %331 = tpu.concatenate %300, %310, %320, %330 in 1 : vector<16x32xf32>, vector<16x32xf32>, vector<16x32xf32>, vector<16x32xf32> -> vector<16x128xf32>
      %c0_137 = arith.constant 0 : index
      %c0_138 = arith.constant 0 : index
      %332 = vector.load %arg22[%c0_137, %c0_138] : memref<16x128xf32, #tpu.memory_space<vmem>>, vector<16x128xf32>
      tpu.vector_store %arg22[%c0_137, %c0_138], %331 {strides = array<i32>} : memref<16x128xf32, #tpu.memory_space<vmem>>, vector<16x128xf32>,
    } else {
    }
    return
  }
  func.func @transform_0(%arg0: i32) -> (i32, i32) {
    %c0_i32 = arith.constant 0 : i32
    %c0_i32_0 = arith.constant 0 : i32
    %c0_i32_1 = arith.constant 0 : i32
    return %c0_i32, %c0_i32_0 : i32, i32
  }
  func.func @transform_1(%arg0: i32) -> (i32, i32) {
    %c0_i32 = arith.constant 0 : i32
    %c0_i32_0 = arith.constant 0 : i32
    %c0_i32_1 = arith.constant 0 : i32
    return %c0_i32, %c0_i32_0 : i32, i32
  }
  func.func @transform_2(%arg0: i32) -> (i32, i32) {
    %c0_i32 = arith.constant 0 : i32
    %c0_i32_0 = arith.constant 0 : i32
    %c0_i32_1 = arith.constant 0 : i32
    return %c0_i32, %c0_i32_0 : i32, i32
  }
  func.func @transform_3(%arg0: i32) -> (i32, i32) {
    %c0_i32 = arith.constant 0 : i32
    %c0_i32_0 = arith.constant 0 : i32
    %c0_i32_1 = arith.constant 0 : i32
    return %c0_i32, %c0_i32_0 : i32, i32
  }
  func.func @transform_4(%arg0: i32) -> (i32, i32, i32, i32) {
    %c0_i32 = arith.constant 0 : i32
    %c0_i32_0 = arith.constant 0 : i32
    %c0_i32_1 = arith.constant 0 : i32
    %c0_i32_2 = arith.constant 0 : i32
    return %arg0, %c0_i32, %c0_i32_0, %c0_i32_1 : i32, i32, i32, i32
  }
  func.func @transform_5(%arg0: i32) -> (i32, i32, i32) {
    %c0_i32 = arith.constant 0 : i32
    %c0_i32_0 = arith.constant 0 : i32
    %c0_i32_1 = arith.constant 0 : i32
    return %arg0, %c0_i32, %c0_i32_0 : i32, i32, i32
  }
  func.func @transform_6(%arg0: i32) -> (i32, i32, i32) {
    %c0_i32 = arith.constant 0 : i32
    %c0_i32_0 = arith.constant 0 : i32
    %c0_i32_1 = arith.constant 0 : i32
    return %arg0, %c0_i32, %c0_i32_0 : i32, i32, i32
  }
  func.func @transform_7(%arg0: i32) -> (i32, i32, i32) {
    %c0_i32 = arith.constant 0 : i32
    %c0_i32_0 = arith.constant 0 : i32
    %c0_i32_1 = arith.constant 0 : i32
    return %arg0, %c0_i32, %c0_i32_0 : i32, i32, i32
  }
  func.func @transform_8(%arg0: i32) -> (i32, i32, i32) {
    %c0_i32 = arith.constant 0 : i32
    %c0_i32_0 = arith.constant 0 : i32
    %c0_i32_1 = arith.constant 0 : i32
    return %arg0, %c0_i32, %c0_i32_0 : i32, i32, i32
  }
  func.func @transform_9(%arg0: i32) -> (i32, i32, i32, i32) {
    %c0_i32 = arith.constant 0 : i32
    %c0_i32_0 = arith.constant 0 : i32
    %c0_i32_1 = arith.constant 0 : i32
    %c0_i32_2 = arith.constant 0 : i32
    return %arg0, %c0_i32, %c0_i32_0, %c0_i32_1 : i32, i32, i32, i32
  }
  func.func @transform_10(%arg0: i32) -> (i32, i32, i32) {
    %c0_i32 = arith.constant 0 : i32
    %c0_i32_0 = arith.constant 0 : i32
    %c0_i32_1 = arith.constant 0 : i32
    return %arg0, %c0_i32, %c0_i32_0 : i32, i32, i32
  }
  func.func @transform_11(%arg0: i32) -> (i32, i32, i32) {
    %c0_i32 = arith.constant 0 : i32
    %c0_i32_0 = arith.constant 0 : i32
    %c0_i32_1 = arith.constant 0 : i32
    return %arg0, %c0_i32, %c0_i32_0 : i32, i32, i32
  }
  func.func @transform_12(%arg0: i32) -> (i32, i32, i32) {
    %c0_i32 = arith.constant 0 : i32
    %c0_i32_0 = arith.constant 0 : i32
    %c0_i32_1 = arith.constant 0 : i32
    return %arg0, %c0_i32, %c0_i32_0 : i32, i32, i32
  }
  func.func @transform_13(%arg0: i32) -> (i32, i32, i32) {
    %c0_i32 = arith.constant 0 : i32
    %c0_i32_0 = arith.constant 0 : i32
    %c0_i32_1 = arith.constant 0 : i32
    return %arg0, %c0_i32, %c0_i32_0 : i32, i32, i32
  }
  func.func @transform_14(%arg0: i32) -> (i32, i32, i32) {
    %c0_i32 = arith.constant 0 : i32
    %c0_i32_0 = arith.constant 0 : i32
    %c0_i32_1 = arith.constant 0 : i32
    return %arg0, %c0_i32, %c0_i32_0 : i32, i32, i32
  }
  func.func @transform_15(%arg0: i32) -> (i32, i32, i32) {
    %c0_i32 = arith.constant 0 : i32
    %c0_i32_0 = arith.constant 0 : i32
    %c0_i32_1 = arith.constant 0 : i32
    return %arg0, %c0_i32, %c0_i32_0 : i32, i32, i32
  }
  func.func @transform_16(%arg0: i32) -> (i32, i32, i32) {
    %c0_i32 = arith.constant 0 : i32
    %c0_i32_0 = arith.constant 0 : i32
    %c0_i32_1 = arith.constant 0 : i32
    return %arg0, %c0_i32, %c0_i32_0 : i32, i32, i32
  }
  func.func @transform_17(%arg0: i32) -> (i32, i32, i32) {
    %c0_i32 = arith.constant 0 : i32
    %c0_i32_0 = arith.constant 0 : i32
    %c0_i32_1 = arith.constant 0 : i32
    return %arg0, %c0_i32, %c0_i32_0 : i32, i32, i32
  }
  func.func @transform_18(%arg0: i32) -> (i32, i32, i32) {
    %c0_i32 = arith.constant 0 : i32
    %c0_i32_0 = arith.constant 0 : i32
    %c0_i32_1 = arith.constant 0 : i32
    return %arg0, %c0_i32, %c0_i32_0 : i32, i32, i32
  }
  func.func @transform_19(%arg0: i32) -> (i32, i32) {
    %c0_i32 = arith.constant 0 : i32
    %c0_i32_0 = arith.constant 0 : i32
    %c0_i32_1 = arith.constant 0 : i32
    return %c0_i32, %c0_i32_0 : i32, i32
  }
  func.func @transform_20(%arg0: i32) -> (i32, i32) {
    %c0_i32 = arith.constant 0 : i32
    %c0_i32_0 = arith.constant 0 : i32
    %c0_i32_1 = arith.constant 0 : i32
    return %c0_i32, %c0_i32_0 : i32, i32
  }
  func.func @transform_21(%arg0: i32) -> (i32, i32) {
    %c0_i32 = arith.constant 0 : i32
    %c0_i32_0 = arith.constant 0 : i32
    %c0_i32_1 = arith.constant 0 : i32
    return %c0_i32, %c0_i32_0 : i32, i32
  }
  func.func @transform_22(%arg0: i32) -> (i32, i32, i32, i32) {
    %c0_i32 = arith.constant 0 : i32
    %c0_i32_0 = arith.constant 0 : i32
    %c0_i32_1 = arith.constant 0 : i32
    %c0_i32_2 = arith.constant 0 : i32
    return %arg0, %c0_i32, %c0_i32_0, %c0_i32_1 : i32, i32, i32, i32
  }
}

</mosaic_0001>

<llo_original>
// kernel: tpu_custom_call.1
$region0: #{tpu_custom_call.1}
  #allocation0 [shape = 'u32[]', space=smem, size = 0x4, offset = 0x4, fixed_abs, tag = 'smem constant byte address 0x4 - core index']
  #allocation1 [shape = 'u32[144,128]{1,0:T(1,128)}', space=vmem, size = 0x12000, scoped, tag = 'internal scratch']
  #allocation2 [shape = 'f32[16,32]{1,0:T(8,128)}', space=vmem, size = 0x2000, scoped, tag = 'scratch operand']
  %s0 = inlined_call_operand.hbm [shape: f32[16,32], index: 0, kind: input, shape index: {}]
  %s1 = inlined_call_operand.hbm [shape: f32[16,32], index: 1, kind: input, shape index: {}]
  %s2 = inlined_call_operand.hbm [shape: f32[1,32], index: 2, kind: input, shape index: {}]
  %s3 = inlined_call_operand.hbm [shape: f32[1,32], index: 3, kind: input, shape index: {}]
  %s4 = inlined_call_operand.vmem [shape: f32[2,2,8,32], index: 4, kind: input, shape index: {}]
  %s5 = inlined_call_operand.vmem [shape: bf16[2,32,32], index: 5, kind: input, shape index: {}]
  %s6 = inlined_call_operand.vmem [shape: f32[2,1,32], index: 6, kind: input, shape index: {}]
  %s7 = inlined_call_operand.vmem [shape: bf16[2,32,64], index: 7, kind: input, shape index: {}]
  %s8 = inlined_call_operand.vmem [shape: f32[2,1,64], index: 8, kind: input, shape index: {}]
  %s9 = inlined_call_operand.vmem [shape: bf16[2,4,8,32], index: 9, kind: input, shape index: {}]
  %s10 = inlined_call_operand.vmem [shape: f32[2,1,32], index: 10, kind: input, shape index: {}]
  %s11 = inlined_call_operand.vmem [shape: f32[2,1,32], index: 11, kind: input, shape index: {}]
  %s12 = inlined_call_operand.hbm [shape: f32[2,1,32], index: 12, kind: input, shape index: {}]
  %s13 = inlined_call_operand.vmem [shape: bf16[2,32,128], index: 13, kind: input, shape index: {}]
  %s14 = inlined_call_operand.hbm [shape: f32[2,1,128], index: 14, kind: input, shape index: {}]
  %s15 = inlined_call_operand.vmem [shape: bf16[2,128,32], index: 15, kind: input, shape index: {}]
  %s16 = inlined_call_operand.vmem [shape: f32[2,1,32], index: 16, kind: input, shape index: {}]
  %s17 = inlined_call_operand.vmem [shape: f32[2,1,32], index: 17, kind: input, shape index: {}]
  %s18 = inlined_call_operand.vmem [shape: f32[2,1,32], index: 18, kind: input, shape index: {}]
  %s19 = inlined_call_operand.vmem [shape: bf16[32,128], index: 19, kind: input, shape index: {}]
  %s20 = inlined_call_operand.vmem [shape: f32[1,128], index: 20, kind: input, shape index: {}]
  %s21 = inlined_call_operand.hbm [shape: f32[16,128], index: 21, kind: output, shape index: {0}]
  %s22 = inlined_call_operand.hbm [shape: f32[2,2,16,32], index: 22, kind: output, shape index: {1}]
  %23 = xla_tuple %s21, %s22
  %s24 = sld [smem:[#allocation0]]
  $region157: #{tpu_custom_call.1} parent=0
    _
  %s26 = ssub.s32 1, %s24
  %s27 = scalar_select 0, %s26, %s24
  $region1: #{tpu_custom_call.1} parent=0
    #allocation3 [shape = 'u8[8192]{0}', space=vmem, size = 0x2000, scoped, tag = 'input window, operand 0, single buffered']
    #allocation4 [shape = 's32[2]{0}', space=sflag, size = 0x8, scoped, tag = 'scoped memory for tpu_custom_call.1']
    #allocation5 [shape = 's32[2]{0}', space=sflag, size = 0x8, scoped, tag = 'scoped memory for tpu_custom_call.1']
    #allocation6 [shape = 'u8[8192]{0}', space=vmem, size = 0x2000, scoped, tag = 'input window, operand 1, single buffered']
    #allocation7 [shape = 's32[1]{0}', space=sflag, size = 0x4, scoped, tag = 'scoped memory for tpu_custom_call.1']
    #allocation8 [shape = 'u8[512]{0}', space=vmem, size = 0x400, scoped, tag = 'input window, operand 2, single buffered']
    #allocation9 [shape = 'u8[512]{0}', space=vmem, size = 0x400, scoped, tag = 'input window, operand 3, single buffered']
    #allocation10 [shape = 's32[1]{0}', space=sflag, size = 0x4, scoped, tag = 'scoped memory for tpu_custom_call.1']
    #allocation11 [shape = 'u8[1024]{0}', space=vmem, size = 0x400, scoped, tag = 'input window, operand 12']
    #allocation12 [shape = 'u8[1024]{0}', space=vmem, size = 0x400, scoped, tag = 'input window, operand 14']
    #allocation13 [shape = 'u8[8192]{0}', space=vmem, size = 0x2000, scoped, tag = 'output window, operand 0, single buffered']
    #allocation14 [shape = 'u8[32768]{0}', space=vmem, size = 0x8000, scoped, tag = 'output window, operand 1']
    #allocation15 [shape = 's32[2]{0}', space=sflag, size = 0x8, scoped, tag = 'scoped memory for tpu_custom_call.1']
    %28 = vsyncpa [#allocation4], 0
    %29 = vsyncpa [#allocation7], 0
    %30 = vsyncpa [#allocation10], 0
    %31 = vsyncpa [#allocation5], 0
    %32 = vsyncpa [#allocation15], 0
    %s33 = scalar_lea.sflag [#allocation15], 1
    %34 = vsyncpa %s33, 0
    loop: start=0, step=1, limit=4
    $region2: #{tpu_custom_call.1} parent=1 // loop_pre_header
      _
    $region3: #{tpu_custom_call.1} parent=1 // loop_header
      %s36 = sphi 0, %s40
      %p37 = scmp.ge.s32.totalorder %s36, 4
      %s44 = sphi 0, %s44
      %s46 = sphi 0, %s44
      %s47 = sphi 0, %s46
      %s61 = sphi 0, %s47
      %s65 = sphi 0, %s65
      %s67 = sphi 0, %s65
      %s68 = sphi 0, %s67
      %s82 = sphi 0, %s68
      %s86 = sphi 0, %s86
      %s88 = sphi 0, %s86
      %s89 = sphi 0, %s88
      %s103 = sphi 0, %s89
      %s107 = sphi 0, %s107
      %s109 = sphi 0, %s107
      %s110 = sphi 0, %s109
      %s124 = sphi 0, %s110
      %s130 = sphi 0, %s132
      %s133 = sphi 0, %s130
      %s134 = sphi 0, %s133
      %s150 = sphi 0, %s134
      %s156 = sphi 0, %s158
      %s159 = sphi 0, %s156
      %s160 = sphi 0, %s159
      %s176 = sphi 0, %s160
      %s182 = sphi 0, %s184
      %s185 = sphi 0, %s182
      %s186 = sphi 0, %s185
      %s202 = sphi 0, %s186
      %s208 = sphi 0, %s210
      %s211 = sphi 0, %s208
      %s212 = sphi 0, %s211
      %s228 = sphi 0, %s212
      %s234 = sphi 0, %s236
      %s237 = sphi 0, %s234
      %s238 = sphi 0, %s237
      %s254 = sphi 0, %s238
      %s260 = sphi 0, %s262
      %s263 = sphi 0, %s260
      %s264 = sphi 0, %s263
      %s280 = sphi 0, %s264
      %s286 = sphi 0, %s288
      %s289 = sphi 0, %s286
      %s290 = sphi 0, %s289
      %s306 = sphi 0, %s290
      %s312 = sphi 0, %s314
      %s315 = sphi 0, %s312
      %s316 = sphi 0, %s315
      %s332 = sphi 0, %s316
      %s338 = sphi 0, %s340
      %s341 = sphi 0, %s338
      %s342 = sphi 0, %s341
      %s358 = sphi 0, %s342
      %s364 = sphi 0, %s366
      %s367 = sphi 0, %s364
      %s368 = sphi 0, %s367
      %s384 = sphi 0, %s368
      %s390 = sphi 0, %s392
      %s393 = sphi 0, %s390
      %s394 = sphi 0, %s393
      %s410 = sphi 0, %s394
      %s416 = sphi 0, %s418
      %s419 = sphi 0, %s416
      %s420 = sphi 0, %s419
      %s436 = sphi 0, %s420
      %s442 = sphi 0, %s444
      %s445 = sphi 0, %s442
      %s446 = sphi 0, %s445
      %s462 = sphi 0, %s446
      %s468 = sphi 0, %s470
      %s471 = sphi 0, %s468
      %s472 = sphi 0, %s471
      %s488 = sphi 0, %s472
      %s494 = sphi 0, %s496
      %s497 = sphi 0, %s494
      %s498 = sphi 0, %s497
      %s514 = sphi 0, %s498
      %s518 = sphi 0, %s518
      %s520 = sphi 0, %s518
      %s521 = sphi 0, %s520
      %s535 = sphi 0, %s521
      %s539 = sphi 0, %s539
      %s541 = sphi 0, %s539
      %s542 = sphi 0, %s541
      %s556 = sphi 0, %s542
      %s560 = sphi 0, %s560
      %s562 = sphi 0, %s560
      %s563 = sphi 0, %s562
      %s577 = sphi 0, %s563
      %s583 = sphi 0, %s585
      %s586 = sphi 0, %s583
      %s587 = sphi 0, %s586
      %s603 = sphi 0, %s587
    $region4: #{tpu_custom_call.1} parent=1 // loop_header_branch
      %39 = sbr.rel (%p37) target = $region8
    $region5: #{tpu_custom_call.1} parent=1 // loop_body
      %s41 = ssub.s32 %s36, 1
      %s42 = ssub.s32 %s36, 2
      %s43 = sadd.s32 %s36, 1
      %s45 = sadd.s32 %s44, 1
      %p48 = scmp.eq.s32.totalorder %s36, 1
      %p49 = scmp.ne.s32.totalorder %s44, %s46
      %p50 = scmp.eq.s32.totalorder %s36, 0
      %p51 = por %p49, %p50
      %p52 = scmp.ne.s32.totalorder %s44, %s46
      %p53 = scmp.eq.s32.totalorder %s41, 1
      %p54 = por %p52, %p53
      %p55 = scmp.ne.s32.totalorder %s46, %s47
      %p56 = scmp.eq.s32.totalorder %s41, 0
      %p57 = por %p55, %p56
      %p58 = scmp.ne.s32.totalorder %s46, %s47
      %p59 = scmp.eq.s32.totalorder %s42, 1
      %p60 = por %p58, %p59
      %p62 = scmp.ne.s32.totalorder %s47, %s61
      %p63 = scmp.eq.s32.totalorder %s42, 0
      %p64 = por %p62, %p63
      %s66 = sadd.s32 %s65, 1
      %p69 = scmp.eq.s32.totalorder %s36, 1
      %p70 = scmp.ne.s32.totalorder %s65, %s67
      %p71 = scmp.eq.s32.totalorder %s36, 0
      %p72 = por %p70, %p71
      %p73 = scmp.ne.s32.totalorder %s65, %s67
      %p74 = scmp.eq.s32.totalorder %s41, 1
      %p75 = por %p73, %p74
      %p76 = scmp.ne.s32.totalorder %s67, %s68
      %p77 = scmp.eq.s32.totalorder %s41, 0
      %p78 = por %p76, %p77
      %p79 = scmp.ne.s32.totalorder %s67, %s68
      %p80 = scmp.eq.s32.totalorder %s42, 1
      %p81 = por %p79, %p80
      %p83 = scmp.ne.s32.totalorder %s68, %s82
      %p84 = scmp.eq.s32.totalorder %s42, 0
      %p85 = por %p83, %p84
      %s87 = sadd.s32 %s86, 1
      %p90 = scmp.eq.s32.totalorder %s36, 1
      %p91 = scmp.ne.s32.totalorder %s86, %s88
      %p92 = scmp.eq.s32.totalorder %s36, 0
      %p93 = por %p91, %p92
      %p94 = scmp.ne.s32.totalorder %s86, %s88
      %p95 = scmp.eq.s32.totalorder %s41, 1
      %p96 = por %p94, %p95
      %p97 = scmp.ne.s32.totalorder %s88, %s89
      %p98 = scmp.eq.s32.totalorder %s41, 0
      %p99 = por %p97, %p98
      %p100 = scmp.ne.s32.totalorder %s88, %s89
      %p101 = scmp.eq.s32.totalorder %s42, 1
      %p102 = por %p100, %p101
      %p104 = scmp.ne.s32.totalorder %s89, %s103
      %p105 = scmp.eq.s32.totalorder %s42, 0
      %p106 = por %p104, %p105
      %s108 = sadd.s32 %s107, 1
      %p111 = scmp.eq.s32.totalorder %s36, 1
      %p112 = scmp.ne.s32.totalorder %s107, %s109
      %p113 = scmp.eq.s32.totalorder %s36, 0
      %p114 = por %p112, %p113
      %p115 = scmp.ne.s32.totalorder %s107, %s109
      %p116 = scmp.eq.s32.totalorder %s41, 1
      %p117 = por %p115, %p116
      %p118 = scmp.ne.s32.totalorder %s109, %s110
      %p119 = scmp.eq.s32.totalorder %s41, 0
      %p120 = por %p118, %p119
      %p121 = scmp.ne.s32.totalorder %s109, %s110
      %p122 = scmp.eq.s32.totalorder %s42, 1
      %p123 = por %p121, %p122
      %p125 = scmp.ne.s32.totalorder %s110, %s124
      %p126 = scmp.eq.s32.totalorder %s42, 0
      %p127 = por %p125, %p126
      %s128 = ssub.s32 %s36, %s43
      %p129 = scmp.eq.s32.totalorder %s128, 0
      %s131 = sadd.s32 %s130, 1
      %s132 = scalar_select %p129, %s130, %s131
      %p135 = pneg %p129
      %p136 = scmp.eq.s32.totalorder %s36, 1
      %p137 = por %p135, %p136
      %p138 = scmp.ne.s32.totalorder %s130, %s133
      %p139 = scmp.eq.s32.totalorder %s36, 0
      %p140 = por %p138, %p139
      %p141 = scmp.ne.s32.totalorder %s130, %s133
      %p142 = scmp.eq.s32.totalorder %s41, 1
      %p143 = por %p141, %p142
      %p144 = scmp.ne.s32.totalorder %s133, %s134
      %p145 = scmp.eq.s32.totalorder %s41, 0
      %p146 = por %p144, %p145
      %p147 = scmp.ne.s32.totalorder %s133, %s134
      %p148 = scmp.eq.s32.totalorder %s42, 1
      %p149 = por %p147, %p148
      %p151 = scmp.ne.s32.totalorder %s134, %s150
      %p152 = scmp.eq.s32.totalorder %s42, 0
      %p153 = por %p151, %p152
      %s154 = ssub.s32 %s36, %s43
      %p155 = scmp.eq.s32.totalorder %s154, 0
      %s157 = sadd.s32 %s156, 1
      %s158 = scalar_select %p155, %s156, %s157
      %p161 = pneg %p155
      %p162 = scmp.eq.s32.totalorder %s36, 1
      %p163 = por %p161, %p162
      %p164 = scmp.ne.s32.totalorder %s156, %s159
      %p165 = scmp.eq.s32.totalorder %s36, 0
      %p166 = por %p164, %p165
      %p167 = scmp.ne.s32.totalorder %s156, %s159
      %p168 = scmp.eq.s32.totalorder %s41, 1
      %p169 = por %p167, %p168
      %p170 = scmp.ne.s32.totalorder %s159, %s160
      %p171 = scmp.eq.s32.totalorder %s41, 0
      %p172 = por %p170, %p171
      %p173 = scmp.ne.s32.totalorder %s159, %s160
      %p174 = scmp.eq.s32.totalorder %s42, 1
      %p175 = por %p173, %p174
      %p177 = scmp.ne.s32.totalorder %s160, %s176
      %p178 = scmp.eq.s32.totalorder %s42, 0
      %p179 = por %p177, %p178
      %s180 = ssub.s32 %s36, %s43
      %p181 = scmp.eq.s32.totalorder %s180, 0
      %s183 = sadd.s32 %s182, 1
      %s184 = scalar_select %p181, %s182, %s183
      %p187 = pneg %p181
      %p188 = scmp.eq.s32.totalorder %s36, 1
      %p189 = por %p187, %p188
      %p190 = scmp.ne.s32.totalorder %s182, %s185
      %p191 = scmp.eq.s32.totalorder %s36, 0
      %p192 = por %p190, %p191
      %p193 = scmp.ne.s32.totalorder %s182, %s185
      %p194 = scmp.eq.s32.totalorder %s41, 1
      %p195 = por %p193, %p194
      %p196 = scmp.ne.s32.totalorder %s185, %s186
      %p197 = scmp.eq.s32.totalorder %s41, 0
      %p198 = por %p196, %p197
      %p199 = scmp.ne.s32.totalorder %s185, %s186
      %p200 = scmp.eq.s32.totalorder %s42, 1
      %p201 = por %p199, %p200
      %p203 = scmp.ne.s32.totalorder %s186, %s202
      %p204 = scmp.eq.s32.totalorder %s42, 0
      %p205 = por %p203, %p204
      %s206 = ssub.s32 %s36, %s43
      %p207 = scmp.eq.s32.totalorder %s206, 0
      %s209 = sadd.s32 %s208, 1
      %s210 = scalar_select %p207, %s208, %s209
      %p213 = pneg %p207
      %p214 = scmp.eq.s32.totalorder %s36, 1
      %p215 = por %p213, %p214
      %p216 = scmp.ne.s32.totalorder %s208, %s211
      %p217 = scmp.eq.s32.totalorder %s36, 0
      %p218 = por %p216, %p217
      %p219 = scmp.ne.s32.totalorder %s208, %s211
      %p220 = scmp.eq.s32.totalorder %s41, 1
      %p221 = por %p219, %p220
      %p222 = scmp.ne.s32.totalorder %s211, %s212
      %p223 = scmp.eq.s32.totalorder %s41, 0
      %p224 = por %p222, %p223
      %p225 = scmp.ne.s32.totalorder %s211, %s212
      %p226 = scmp.eq.s32.totalorder %s42, 1
      %p227 = por %p225, %p226
      %p229 = scmp.ne.s32.totalorder %s212, %s228
      %p230 = scmp.eq.s32.totalorder %s42, 0
      %p231 = por %p229, %p230
      %s232 = ssub.s32 %s36, %s43
      %p233 = scmp.eq.s32.totalorder %s232, 0
      %s235 = sadd.s32 %s234, 1
      %s236 = scalar_select %p233, %s234, %s235
      %p239 = pneg %p233
      %p240 = scmp.eq.s32.totalorder %s36, 1
      %p241 = por %p239, %p240
      %p242 = scmp.ne.s32.totalorder %s234, %s237
      %p243 = scmp.eq.s32.totalorder %s36, 0
      %p244 = por %p242, %p243
      %p245 = scmp.ne.s32.totalorder %s234, %s237
      %p246 = scmp.eq.s32.totalorder %s41, 1
      %p247 = por %p245, %p246
      %p248 = scmp.ne.s32.totalorder %s237, %s238
      %p249 = scmp.eq.s32.totalorder %s41, 0
      %p250 = por %p248, %p249
      %p251 = scmp.ne.s32.totalorder %s237, %s238
      %p252 = scmp.eq.s32.totalorder %s42, 1
      %p253 = por %p251, %p252
      %p255 = scmp.ne.s32.totalorder %s238, %s254
      %p256 = scmp.eq.s32.totalorder %s42, 0
      %p257 = por %p255, %p256
      %s258 = ssub.s32 %s36, %s43
      %p259 = scmp.eq.s32.totalorder %s258, 0
      %s261 = sadd.s32 %s260, 1
      %s262 = scalar_select %p259, %s260, %s261
      %p265 = pneg %p259
      %p266 = scmp.eq.s32.totalorder %s36, 1
      %p267 = por %p265, %p266
      %p268 = scmp.ne.s32.totalorder %s260, %s263
      %p269 = scmp.eq.s32.totalorder %s36, 0
      %p270 = por %p268, %p269
      %p271 = scmp.ne.s32.totalorder %s260, %s263
      %p272 = scmp.eq.s32.totalorder %s41, 1
      %p273 = por %p271, %p272
      %p274 = scmp.ne.s32.totalorder %s263, %s264
      %p275 = scmp.eq.s32.totalorder %s41, 0
      %p276 = por %p274, %p275
      %p277 = scmp.ne.s32.totalorder %s263, %s264
      %p278 = scmp.eq.s32.totalorder %s42, 1
      %p279 = por %p277, %p278
      %p281 = scmp.ne.s32.totalorder %s264, %s280
      %p282 = scmp.eq.s32.totalorder %s42, 0
      %p283 = por %p281, %p282
      %s284 = ssub.s32 %s36, %s43
      %p285 = scmp.eq.s32.totalorder %s284, 0
      %s287 = sadd.s32 %s286, 1
      %s288 = scalar_select %p285, %s286, %s287
      %p291 = pneg %p285
      %p292 = scmp.eq.s32.totalorder %s36, 1
      %p293 = por %p291, %p292
      %p294 = scmp.ne.s32.totalorder %s286, %s289
      %p295 = scmp.eq.s32.totalorder %s36, 0
      %p296 = por %p294, %p295
      %p297 = scmp.ne.s32.totalorder %s286, %s289
      %p298 = scmp.eq.s32.totalorder %s41, 1
      %p299 = por %p297, %p298
      %p300 = scmp.ne.s32.totalorder %s289, %s290
      %p301 = scmp.eq.s32.totalorder %s41, 0
      %p302 = por %p300, %p301
      %p303 = scmp.ne.s32.totalorder %s289, %s290
      %p304 = scmp.eq.s32.totalorder %s42, 1
      %p305 = por %p303, %p304
      %p307 = scmp.ne.s32.totalorder %s290, %s306
      %p308 = scmp.eq.s32.totalorder %s42, 0
      %p309 = por %p307, %p308
      %s310 = ssub.s32 %s36, %s43
      %p311 = scmp.eq.s32.totalorder %s310, 0
      %s313 = sadd.s32 %s312, 1
      %s314 = scalar_select %p311, %s312, %s313
      %p317 = pneg %p311
      %p318 = scmp.eq.s32.totalorder %s36, 1
      %p319 = por %p317, %p318
      %p320 = scmp.ne.s32.totalorder %s312, %s315
      %p321 = scmp.eq.s32.totalorder %s36, 0
      %p322 = por %p320, %p321
      %p323 = scmp.ne.s32.totalorder %s312, %s315
      %p324 = scmp.eq.s32.totalorder %s41, 1
      %p325 = por %p323, %p324
      %p326 = scmp.ne.s32.totalorder %s315, %s316
      %p327 = scmp.eq.s32.totalorder %s41, 0
      %p328 = por %p326, %p327
      %p329 = scmp.ne.s32.totalorder %s315, %s316
      %p330 = scmp.eq.s32.totalorder %s42, 1
      %p331 = por %p329, %p330
      %p333 = scmp.ne.s32.totalorder %s316, %s332
      %p334 = scmp.eq.s32.totalorder %s42, 0
      %p335 = por %p333, %p334
      %s336 = ssub.s32 %s36, %s43
      %p337 = scmp.eq.s32.totalorder %s336, 0
      %s339 = sadd.s32 %s338, 1
      %s340 = scalar_select %p337, %s338, %s339
      %p343 = pneg %p337
      %p344 = scmp.eq.s32.totalorder %s36, 1
      %p345 = por %p343, %p344
      %p346 = scmp.ne.s32.totalorder %s338, %s341
      %p347 = scmp.eq.s32.totalorder %s36, 0
      %p348 = por %p346, %p347
      %p349 = scmp.ne.s32.totalorder %s338, %s341
      %p350 = scmp.eq.s32.totalorder %s41, 1
      %p351 = por %p349, %p350
      %p352 = scmp.ne.s32.totalorder %s341, %s342
      %p353 = scmp.eq.s32.totalorder %s41, 0
      %p354 = por %p352, %p353
      %p355 = scmp.ne.s32.totalorder %s341, %s342
      %p356 = scmp.eq.s32.totalorder %s42, 1
      %p357 = por %p355, %p356
      %p359 = scmp.ne.s32.totalorder %s342, %s358
      %p360 = scmp.eq.s32.totalorder %s42, 0
      %p361 = por %p359, %p360
      %s362 = ssub.s32 %s36, %s43
      %p363 = scmp.eq.s32.totalorder %s362, 0
      %s365 = sadd.s32 %s364, 1
      %s366 = scalar_select %p363, %s364, %s365
      %p369 = pneg %p363
      %p370 = scmp.eq.s32.totalorder %s36, 1
      %p371 = por %p369, %p370
      %p372 = scmp.ne.s32.totalorder %s364, %s367
      %p373 = scmp.eq.s32.totalorder %s36, 0
      %p374 = por %p372, %p373
      %p375 = scmp.ne.s32.totalorder %s364, %s367
      %p376 = scmp.eq.s32.totalorder %s41, 1
      %p377 = por %p375, %p376
      %p378 = scmp.ne.s32.totalorder %s367, %s368
      %p379 = scmp.eq.s32.totalorder %s41, 0
      %p380 = por %p378, %p379
      %p381 = scmp.ne.s32.totalorder %s367, %s368
      %p382 = scmp.eq.s32.totalorder %s42, 1
      %p383 = por %p381, %p382
      %p385 = scmp.ne.s32.totalorder %s368, %s384
      %p386 = scmp.eq.s32.totalorder %s42, 0
      %p387 = por %p385, %p386
      %s388 = ssub.s32 %s36, %s43
      %p389 = scmp.eq.s32.totalorder %s388, 0
      %s391 = sadd.s32 %s390, 1
      %s392 = scalar_select %p389, %s390, %s391
      %p395 = pneg %p389
      %p396 = scmp.eq.s32.totalorder %s36, 1
      %p397 = por %p395, %p396
      %p398 = scmp.ne.s32.totalorder %s390, %s393
      %p399 = scmp.eq.s32.totalorder %s36, 0
      %p400 = por %p398, %p399
      %p401 = scmp.ne.s32.totalorder %s390, %s393
      %p402 = scmp.eq.s32.totalorder %s41, 1
      %p403 = por %p401, %p402
      %p404 = scmp.ne.s32.totalorder %s393, %s394
      %p405 = scmp.eq.s32.totalorder %s41, 0
      %p406 = por %p404, %p405
      %p407 = scmp.ne.s32.totalorder %s393, %s394
      %p408 = scmp.eq.s32.totalorder %s42, 1
      %p409 = por %p407, %p408
      %p411 = scmp.ne.s32.totalorder %s394, %s410
      %p412 = scmp.eq.s32.totalorder %s42, 0
      %p413 = por %p411, %p412
      %s414 = ssub.s32 %s36, %s43
      %p415 = scmp.eq.s32.totalorder %s414, 0
      %s417 = sadd.s32 %s416, 1
      %s418 = scalar_select %p415, %s416, %s417
      %p421 = pneg %p415
      %p422 = scmp.eq.s32.totalorder %s36, 1
      %p423 = por %p421, %p422
      %p424 = scmp.ne.s32.totalorder %s416, %s419
      %p425 = scmp.eq.s32.totalorder %s36, 0
      %p426 = por %p424, %p425
      %p427 = scmp.ne.s32.totalorder %s416, %s419
      %p428 = scmp.eq.s32.totalorder %s41, 1
      %p429 = por %p427, %p428
      %p430 = scmp.ne.s32.totalorder %s419, %s420
      %p431 = scmp.eq.s32.totalorder %s41, 0
      %p432 = por %p430, %p431
      %p433 = scmp.ne.s32.totalorder %s419, %s420
      %p434 = scmp.eq.s32.totalorder %s42, 1
      %p435 = por %p433, %p434
      %p437 = scmp.ne.s32.totalorder %s420, %s436
      %p438 = scmp.eq.s32.totalorder %s42, 0
      %p439 = por %p437, %p438
      %s440 = ssub.s32 %s36, %s43
      %p441 = scmp.eq.s32.totalorder %s440, 0
      %s443 = sadd.s32 %s442, 1
      %s444 = scalar_select %p441, %s442, %s443
      %p447 = pneg %p441
      %p448 = scmp.eq.s32.totalorder %s36, 1
      %p449 = por %p447, %p448
      %p450 = scmp.ne.s32.totalorder %s442, %s445
      %p451 = scmp.eq.s32.totalorder %s36, 0
      %p452 = por %p450, %p451
      %p453 = scmp.ne.s32.totalorder %s442, %s445
      %p454 = scmp.eq.s32.totalorder %s41, 1
      %p455 = por %p453, %p454
      %p456 = scmp.ne.s32.totalorder %s445, %s446
      %p457 = scmp.eq.s32.totalorder %s41, 0
      %p458 = por %p456, %p457
      %p459 = scmp.ne.s32.totalorder %s445, %s446
      %p460 = scmp.eq.s32.totalorder %s42, 1
      %p461 = por %p459, %p460
      %p463 = scmp.ne.s32.totalorder %s446, %s462
      %p464 = scmp.eq.s32.totalorder %s42, 0
      %p465 = por %p463, %p464
      %s466 = ssub.s32 %s36, %s43
      %p467 = scmp.eq.s32.totalorder %s466, 0
      %s469 = sadd.s32 %s468, 1
      %s470 = scalar_select %p467, %s468, %s469
      %p473 = pneg %p467
      %p474 = scmp.eq.s32.totalorder %s36, 1
      %p475 = por %p473, %p474
      %p476 = scmp.ne.s32.totalorder %s468, %s471
      %p477 = scmp.eq.s32.totalorder %s36, 0
      %p478 = por %p476, %p477
      %p479 = scmp.ne.s32.totalorder %s468, %s471
      %p480 = scmp.eq.s32.totalorder %s41, 1
      %p481 = por %p479, %p480
      %p482 = scmp.ne.s32.totalorder %s471, %s472
      %p483 = scmp.eq.s32.totalorder %s41, 0
      %p484 = por %p482, %p483
      %p485 = scmp.ne.s32.totalorder %s471, %s472
      %p486 = scmp.eq.s32.totalorder %s42, 1
      %p487 = por %p485, %p486
      %p489 = scmp.ne.s32.totalorder %s472, %s488
      %p490 = scmp.eq.s32.totalorder %s42, 0
      %p491 = por %p489, %p490
      %s492 = ssub.s32 %s36, %s43
      %p493 = scmp.eq.s32.totalorder %s492, 0
      %s495 = sadd.s32 %s494, 1
      %s496 = scalar_select %p493, %s494, %s495
      %p499 = pneg %p493
      %p500 = scmp.eq.s32.totalorder %s36, 1
      %p501 = por %p499, %p500
      %p502 = scmp.ne.s32.totalorder %s494, %s497
      %p503 = scmp.eq.s32.totalorder %s36, 0
      %p504 = por %p502, %p503
      %p505 = scmp.ne.s32.totalorder %s494, %s497
      %p506 = scmp.eq.s32.totalorder %s41, 1
      %p507 = por %p505, %p506
      %p508 = scmp.ne.s32.totalorder %s497, %s498
      %p509 = scmp.eq.s32.totalorder %s41, 0
      %p510 = por %p508, %p509
      %p511 = scmp.ne.s32.totalorder %s497, %s498
      %p512 = scmp.eq.s32.totalorder %s42, 1
      %p513 = por %p511, %p512
      %p515 = scmp.ne.s32.totalorder %s498, %s514
      %p516 = scmp.eq.s32.totalorder %s42, 0
      %p517 = por %p515, %p516
      %s519 = sadd.s32 %s518, 1
      %p522 = scmp.eq.s32.totalorder %s36, 1
      %p523 = scmp.ne.s32.totalorder %s518, %s520
      %p524 = scmp.eq.s32.totalorder %s36, 0
      %p525 = por %p523, %p524
      %p526 = scmp.ne.s32.totalorder %s518, %s520
      %p527 = scmp.eq.s32.totalorder %s41, 1
      %p528 = por %p526, %p527
      %p529 = scmp.ne.s32.totalorder %s520, %s521
      %p530 = scmp.eq.s32.totalorder %s41, 0
      %p531 = por %p529, %p530
      %p532 = scmp.ne.s32.totalorder %s520, %s521
      %p533 = scmp.eq.s32.totalorder %s42, 1
      %p534 = por %p532, %p533
      %p536 = scmp.ne.s32.totalorder %s521, %s535
      %p537 = scmp.eq.s32.totalorder %s42, 0
      %p538 = por %p536, %p537
      %s540 = sadd.s32 %s539, 1
      %p543 = scmp.eq.s32.totalorder %s36, 1
      %p544 = scmp.ne.s32.totalorder %s539, %s541
      %p545 = scmp.eq.s32.totalorder %s36, 0
      %p546 = por %p544, %p545
      %p547 = scmp.ne.s32.totalorder %s539, %s541
      %p548 = scmp.eq.s32.totalorder %s41, 1
      %p549 = por %p547, %p548
      %p550 = scmp.ne.s32.totalorder %s541, %s542
      %p551 = scmp.eq.s32.totalorder %s41, 0
      %p552 = por %p550, %p551
      %p553 = scmp.ne.s32.totalorder %s541, %s542
      %p554 = scmp.eq.s32.totalorder %s42, 1
      %p555 = por %p553, %p554
      %p557 = scmp.ne.s32.totalorder %s542, %s556
      %p558 = scmp.eq.s32.totalorder %s42, 0
      %p559 = por %p557, %p558
      %s561 = sadd.s32 %s560, 1
      %p564 = scmp.eq.s32.totalorder %s36, 1
      %p565 = scmp.ne.s32.totalorder %s560, %s562
      %p566 = scmp.eq.s32.totalorder %s36, 0
      %p567 = por %p565, %p566
      %p568 = scmp.ne.s32.totalorder %s560, %s562
      %p569 = scmp.eq.s32.totalorder %s41, 1
      %p570 = por %p568, %p569
      %p571 = scmp.ne.s32.totalorder %s562, %s563
      %p572 = scmp.eq.s32.totalorder %s41, 0
      %p573 = por %p571, %p572
      %p574 = scmp.ne.s32.totalorder %s562, %s563
      %p575 = scmp.eq.s32.totalorder %s42, 1
      %p576 = por %p574, %p575
      %p578 = scmp.ne.s32.totalorder %s563, %s577
      %p579 = scmp.eq.s32.totalorder %s42, 0
      %p580 = por %p578, %p579
      %s581 = ssub.s32 %s36, %s43
      %p582 = scmp.eq.s32.totalorder %s581, 0
      %s584 = sadd.s32 %s583, 1
      %s585 = scalar_select %p582, %s583, %s584
      %p588 = pneg %p582
      %p589 = scmp.eq.s32.totalorder %s36, 1
      %p590 = por %p588, %p589
      %p591 = scmp.ne.s32.totalorder %s583, %s586
      %p592 = scmp.eq.s32.totalorder %s36, 0
      %p593 = por %p591, %p592
      %p594 = scmp.ne.s32.totalorder %s583, %s586
      %p595 = scmp.eq.s32.totalorder %s41, 1
      %p596 = por %p594, %p595
      %p597 = scmp.ne.s32.totalorder %s586, %s587
      %p598 = scmp.eq.s32.totalorder %s41, 0
      %p599 = por %p597, %p598
      %p600 = scmp.ne.s32.totalorder %s586, %s587
      %p601 = scmp.eq.s32.totalorder %s42, 1
      %p602 = por %p600, %p601
      %p604 = scmp.ne.s32.totalorder %s587, %s603
      %p605 = scmp.eq.s32.totalorder %s42, 0
      %p606 = por %p604, %p605
      %p607 = scmp.le.s32.totalorder 1, %s36
      %p608 = scmp.lt.s32.totalorder %s36, 3
      %p609 = pnand %p607, %p608
      %p610 = pneg %p609
      // Predicated region
      $region9: #{tpu_custom_call.1} parent=5 // pred_check
        _
      $region10: #{tpu_custom_call.1} parent=5 // pred_check_branch
        %612 = sbr.rel (%p609) target = $region12
      $region11: #{tpu_custom_call.1} parent=5 // pred_region
        %s613 = ssub.s32 %s36, 1
        // Predicated region
        $region13: #{tpu_custom_call.1} parent=11 // pred_check
          %p614 = pneg %p57
        $region14: #{tpu_custom_call.1} parent=11 // pred_check_branch
          %616 = sbr.rel (%p614) target = $region16
        $region15: #{tpu_custom_call.1} parent=11 // pred_region
          %s618 = ssub.s32 256, 256
          %619 = vsyncadd [#allocation4], %s618
          %s620 = sshll.u32 [#allocation3], 4
          %s621 = int_to_ptr.vmem [resolvable:$true] %s620
          %626 = dma.hbm_to_vmem [thread:$0]  %s0, 256, %s621, [#allocation4], 128, 128, 8
        $region16: #{tpu_custom_call.1} parent=11 // pred_fallthru
          _
        // Predicated region
        $region17: #{tpu_custom_call.1} parent=11 // pred_check
          %p627 = pneg %p78
        $region18: #{tpu_custom_call.1} parent=11 // pred_check_branch
          %629 = sbr.rel (%p627) target = $region20
        $region19: #{tpu_custom_call.1} parent=11 // pred_region
          %s631 = ssub.s32 256, 256
          %632 = vsyncadd [#allocation7], %s631
          %s633 = sshll.u32 [#allocation6], 4
          %s634 = int_to_ptr.vmem [resolvable:$true] %s633
          %639 = dma.hbm_to_vmem [thread:$0]  %s1, 256, %s634, [#allocation7], 128, 128, 8
        $region20: #{tpu_custom_call.1} parent=11 // pred_fallthru
          _
        // Predicated region
        $region21: #{tpu_custom_call.1} parent=11 // pred_check
          %p640 = pneg %p99
        $region22: #{tpu_custom_call.1} parent=11 // pred_check_branch
          %642 = sbr.rel (%p640) target = $region24
        $region23: #{tpu_custom_call.1} parent=11 // pred_region
          %s644 = ssub.s32 16, 16
          %645 = vsyncadd [#allocation7], %s644
          %s647 = sshll.u32 [#allocation8], 4
          %s648 = int_to_ptr.vmem [resolvable:$true] %s647
          %650 = dma.hbm_to_vmem [thread:$0]  %s2, 16, %s648, [#allocation7]
        $region24: #{tpu_custom_call.1} parent=11 // pred_fallthru
          _
        // Predicated region
        $region25: #{tpu_custom_call.1} parent=11 // pred_check
          %p651 = pneg %p120
        $region26: #{tpu_custom_call.1} parent=11 // pred_check_branch
          %653 = sbr.rel (%p651) target = $region28
        $region27: #{tpu_custom_call.1} parent=11 // pred_region
          %s655 = ssub.s32 16, 16
          %656 = vsyncadd [#allocation10], %s655
          %s658 = sshll.u32 [#allocation9], 4
          %s659 = int_to_ptr.vmem [resolvable:$true] %s658
          %661 = dma.hbm_to_vmem [thread:$0]  %s3, 16, %s659, [#allocation10]
        $region28: #{tpu_custom_call.1} parent=11 // pred_fallthru
          _
        // Predicated region
        $region29: #{tpu_custom_call.1} parent=11 // pred_check
          %p662 = pneg %p531
        $region30: #{tpu_custom_call.1} parent=11 // pred_check_branch
          %664 = sbr.rel (%p662) target = $region32
        $region31: #{tpu_custom_call.1} parent=11 // pred_region
          _
        $region32: #{tpu_custom_call.1} parent=11 // pred_fallthru
          _
        // Predicated region
        $region33: #{tpu_custom_call.1} parent=11 // pred_check
          %p665 = pneg %p552
        $region34: #{tpu_custom_call.1} parent=11 // pred_check_branch
          %667 = sbr.rel (%p665) target = $region36
        $region35: #{tpu_custom_call.1} parent=11 // pred_region
          _
        $region36: #{tpu_custom_call.1} parent=11 // pred_fallthru
          _
      $region12: #{tpu_custom_call.1} parent=5 // pred_fallthru
        _
      %p668 = scmp.lt.s32.totalorder %s36, 2
      // Predicated region
      $region37: #{tpu_custom_call.1} parent=5 // pred_check
        %p669 = pneg %p668
      $region38: #{tpu_custom_call.1} parent=5 // pred_check_branch
        %671 = sbr.rel (%p669) target = $region40
      $region39: #{tpu_custom_call.1} parent=5 // pred_region
        // Predicated region
        $region41: #{tpu_custom_call.1} parent=39 // pred_check
          %p672 = pneg %p140
        $region42: #{tpu_custom_call.1} parent=39 // pred_check_branch
          %674 = sbr.rel (%p672) target = $region44
        $region43: #{tpu_custom_call.1} parent=39 // pred_region
          %p675 = scmp.lt.s32.totalorder %s36, 1
          %s676 = scalar_select %p675, %s36, 1
          %s677 = smul.addr %s676, 2
          %s678 = smul.addr %s677, 8
          %s679 = scalar_lea.vmem %s4, %s678
        $region44: #{tpu_custom_call.1} parent=39 // pred_fallthru
          _
        // Predicated region
        $region45: #{tpu_custom_call.1} parent=39 // pred_check
          %p680 = pneg %p166
        $region46: #{tpu_custom_call.1} parent=39 // pred_check_branch
          %682 = sbr.rel (%p680) target = $region48
        $region47: #{tpu_custom_call.1} parent=39 // pred_region
          %p683 = scmp.lt.s32.totalorder %s36, 1
          %s684 = scalar_select %p683, %s36, 1
          %s685 = smul.addr %s684, 4
          %s686 = smul.addr %s685, 4
          %s687 = scalar_lea.vmem %s5, %s686
        $region48: #{tpu_custom_call.1} parent=39 // pred_fallthru
          _
        // Predicated region
        $region49: #{tpu_custom_call.1} parent=39 // pred_check
          %p688 = pneg %p192
        $region50: #{tpu_custom_call.1} parent=39 // pred_check_branch
          %690 = sbr.rel (%p688) target = $region52
        $region51: #{tpu_custom_call.1} parent=39 // pred_region
          %p691 = scmp.lt.s32.totalorder %s36, 1
          %s692 = scalar_select %p691, %s36, 1
          %s693 = scalar_lea.vmem %s6, %s692
        $region52: #{tpu_custom_call.1} parent=39 // pred_fallthru
          _
        // Predicated region
        $region53: #{tpu_custom_call.1} parent=39 // pred_check
          %p694 = pneg %p218
        $region54: #{tpu_custom_call.1} parent=39 // pred_check_branch
          %696 = sbr.rel (%p694) target = $region56
        $region55: #{tpu_custom_call.1} parent=39 // pred_region
          %p697 = scmp.lt.s32.totalorder %s36, 1
          %s698 = scalar_select %p697, %s36, 1
          %s699 = smul.addr %s698, 4
          %s700 = smul.addr %s699, 4
          %s701 = scalar_lea.vmem %s7, %s700
        $region56: #{tpu_custom_call.1} parent=39 // pred_fallthru
          _
        // Predicated region
        $region57: #{tpu_custom_call.1} parent=39 // pred_check
          %p702 = pneg %p244
        $region58: #{tpu_custom_call.1} parent=39 // pred_check_branch
          %704 = sbr.rel (%p702) target = $region60
        $region59: #{tpu_custom_call.1} parent=39 // pred_region
          %p705 = scmp.lt.s32.totalorder %s36, 1
          %s706 = scalar_select %p705, %s36, 1
          %s707 = scalar_lea.vmem %s8, %s706
        $region60: #{tpu_custom_call.1} parent=39 // pred_fallthru
          _
        // Predicated region
        $region61: #{tpu_custom_call.1} parent=39 // pred_check
          %p708 = pneg %p270
        $region62: #{tpu_custom_call.1} parent=39 // pred_check_branch
          %710 = sbr.rel (%p708) target = $region64
        $region63: #{tpu_custom_call.1} parent=39 // pred_region
          %p711 = scmp.lt.s32.totalorder %s36, 1
          %s712 = scalar_select %p711, %s36, 1
          %s713 = smul.addr %s712, 4
          %s714 = smul.addr %s713, 4
          %s715 = scalar_lea.vmem %s9, %s714
        $region64: #{tpu_custom_call.1} parent=39 // pred_fallthru
          _
        // Predicated region
        $region65: #{tpu_custom_call.1} parent=39 // pred_check
          %p716 = pneg %p296
        $region66: #{tpu_custom_call.1} parent=39 // pred_check_branch
          %718 = sbr.rel (%p716) target = $region68
        $region67: #{tpu_custom_call.1} parent=39 // pred_region
          %p719 = scmp.lt.s32.totalorder %s36, 1
          %s720 = scalar_select %p719, %s36, 1
          %s721 = scalar_lea.vmem %s10, %s720
        $region68: #{tpu_custom_call.1} parent=39 // pred_fallthru
          _
        // Predicated region
        $region69: #{tpu_custom_call.1} parent=39 // pred_check
          %p722 = pneg %p322
        $region70: #{tpu_custom_call.1} parent=39 // pred_check_branch
          %724 = sbr.rel (%p722) target = $region72
        $region71: #{tpu_custom_call.1} parent=39 // pred_region
          %p725 = scmp.lt.s32.totalorder %s36, 1
          %s726 = scalar_select %p725, %s36, 1
          %s727 = scalar_lea.vmem %s11, %s726
        $region72: #{tpu_custom_call.1} parent=39 // pred_fallthru
          _
        // Predicated region
        $region73: #{tpu_custom_call.1} parent=39 // pred_check
          %p728 = pneg %p348
        $region74: #{tpu_custom_call.1} parent=39 // pred_check_branch
          %730 = sbr.rel (%p728) target = $region76
        $region75: #{tpu_custom_call.1} parent=39 // pred_region
          %s731 = sand.u32 %s36, 1
          %s732 = scalar_lea.sflag [#allocation4], %s731
          %s733 = sand.u32 %s338, 1
          %s734 = scalar_lea.vmem [#allocation11], %s733
          %s736 = ssub.s32 16, 16
          %737 = vsyncadd %s732, %s736
          %s738 = smul.addr %s36, 16
          %s739 = scalar_lea.hbm %s12, %s738
          %s741 = sshll.u32 %s734, 4
          %s742 = int_to_ptr.vmem [resolvable:$true] %s741
          %744 = dma.hbm_to_vmem [thread:$0]  %s739, 16, %s742, %s732
        $region76: #{tpu_custom_call.1} parent=39 // pred_fallthru
          _
        // Predicated region
        $region77: #{tpu_custom_call.1} parent=39 // pred_check
          %p745 = pneg %p374
        $region78: #{tpu_custom_call.1} parent=39 // pred_check_branch
          %747 = sbr.rel (%p745) target = $region80
        $region79: #{tpu_custom_call.1} parent=39 // pred_region
          %p748 = scmp.lt.s32.totalorder %s36, 1
          %s749 = scalar_select %p748, %s36, 1
          %s750 = smul.addr %s749, 4
          %s751 = smul.addr %s750, 4
          %s752 = scalar_lea.vmem %s13, %s751
        $region80: #{tpu_custom_call.1} parent=39 // pred_fallthru
          _
        // Predicated region
        $region81: #{tpu_custom_call.1} parent=39 // pred_check
          %p753 = pneg %p400
        $region82: #{tpu_custom_call.1} parent=39 // pred_check_branch
          %755 = sbr.rel (%p753) target = $region84
        $region83: #{tpu_custom_call.1} parent=39 // pred_region
          %s756 = sand.u32 %s36, 1
          %s757 = scalar_lea.sflag [#allocation4], %s756
          %s758 = sand.u32 %s390, 1
          %s759 = scalar_lea.vmem [#allocation12], %s758
          %s761 = ssub.s32 16, 16
          %762 = vsyncadd %s757, %s761
          %s763 = smul.addr %s36, 16
          %s764 = scalar_lea.hbm %s14, %s763
          %s766 = sshll.u32 %s759, 4
          %s767 = int_to_ptr.vmem [resolvable:$true] %s766
          %769 = dma.hbm_to_vmem [thread:$0]  %s764, 16, %s767, %s757
        $region84: #{tpu_custom_call.1} parent=39 // pred_fallthru
          _
        // Predicated region
        $region85: #{tpu_custom_call.1} parent=39 // pred_check
          %p770 = pneg %p426
        $region86: #{tpu_custom_call.1} parent=39 // pred_check_branch
          %772 = sbr.rel (%p770) target = $region88
        $region87: #{tpu_custom_call.1} parent=39 // pred_region
          %p773 = scmp.lt.s32.totalorder %s36, 1
          %s774 = scalar_select %p773, %s36, 1
          %s775 = smul.addr %s774, 16
          %s776 = smul.addr %s775, 4
          %s777 = scalar_lea.vmem %s15, %s776
        $region88: #{tpu_custom_call.1} parent=39 // pred_fallthru
          _
        // Predicated region
        $region89: #{tpu_custom_call.1} parent=39 // pred_check
          %p778 = pneg %p452
        $region90: #{tpu_custom_call.1} parent=39 // pred_check_branch
          %780 = sbr.rel (%p778) target = $region92
        $region91: #{tpu_custom_call.1} parent=39 // pred_region
          %p781 = scmp.lt.s32.totalorder %s36, 1
          %s782 = scalar_select %p781, %s36, 1
          %s783 = scalar_lea.vmem %s16, %s782
        $region92: #{tpu_custom_call.1} parent=39 // pred_fallthru
          _
        // Predicated region
        $region93: #{tpu_custom_call.1} parent=39 // pred_check
          %p784 = pneg %p478
        $region94: #{tpu_custom_call.1} parent=39 // pred_check_branch
          %786 = sbr.rel (%p784) target = $region96
        $region95: #{tpu_custom_call.1} parent=39 // pred_region
          %p787 = scmp.lt.s32.totalorder %s36, 1
          %s788 = scalar_select %p787, %s36, 1
          %s789 = scalar_lea.vmem %s17, %s788
        $region96: #{tpu_custom_call.1} parent=39 // pred_fallthru
          _
        // Predicated region
        $region97: #{tpu_custom_call.1} parent=39 // pred_check
          %p790 = pneg %p504
        $region98: #{tpu_custom_call.1} parent=39 // pred_check_branch
          %792 = sbr.rel (%p790) target = $region100
        $region99: #{tpu_custom_call.1} parent=39 // pred_region
          %p793 = scmp.lt.s32.totalorder %s36, 1
          %s794 = scalar_select %p793, %s36, 1
          %s795 = scalar_lea.vmem %s18, %s794
        $region100: #{tpu_custom_call.1} parent=39 // pred_fallthru
          _
      $region40: #{tpu_custom_call.1} parent=5 // pred_fallthru
        _
      %p796 = scmp.le.s32.totalorder 1, %s36
      %p797 = scmp.lt.s32.totalorder %s36, 3
      %p798 = pnand %p796, %p797
      %p799 = pneg %p798
      // Predicated region
      $region101: #{tpu_custom_call.1} parent=5 // pred_check
        _
      $region102: #{tpu_custom_call.1} parent=5 // pred_check_branch
        %801 = sbr.rel (%p798) target = $region104
      $region103: #{tpu_custom_call.1} parent=5 // pred_region
        %s802 = ssub.s32 %s36, 1
        // Predicated region
        $region105: #{tpu_custom_call.1} parent=103 // pred_check
          %p803 = pneg %p57
        $region106: #{tpu_custom_call.1} parent=103 // pred_check_branch
          %805 = sbr.rel (%p803) target = $region108
        $region107: #{tpu_custom_call.1} parent=103 // pred_region
          %806 = dma.done [#allocation4], 256
        $region108: #{tpu_custom_call.1} parent=103 // pred_fallthru
          _
        // Predicated region
        $region109: #{tpu_custom_call.1} parent=103 // pred_check
          %p807 = pneg %p78
        $region110: #{tpu_custom_call.1} parent=103 // pred_check_branch
          %809 = sbr.rel (%p807) target = $region112
        $region111: #{tpu_custom_call.1} parent=103 // pred_region
          %810 = dma.done [#allocation7], 256
        $region112: #{tpu_custom_call.1} parent=103 // pred_fallthru
          _
        // Predicated region
        $region113: #{tpu_custom_call.1} parent=103 // pred_check
          %p811 = pneg %p99
        $region114: #{tpu_custom_call.1} parent=103 // pred_check_branch
          %813 = sbr.rel (%p811) target = $region116
        $region115: #{tpu_custom_call.1} parent=103 // pred_region
          %814 = dma.done [#allocation7], 16
        $region116: #{tpu_custom_call.1} parent=103 // pred_fallthru
          _
        // Predicated region
        $region117: #{tpu_custom_call.1} parent=103 // pred_check
          %p815 = pneg %p120
        $region118: #{tpu_custom_call.1} parent=103 // pred_check_branch
          %817 = sbr.rel (%p815) target = $region120
        $region119: #{tpu_custom_call.1} parent=103 // pred_region
          %818 = dma.done [#allocation10], 16
        $region120: #{tpu_custom_call.1} parent=103 // pred_fallthru
          _
        %s819 = sand.u32 %s41, 1
        %s820 = scalar_lea.sflag [#allocation4], %s819
        %s821 = sand.u32 %s341, 1
        %s822 = scalar_lea.vmem [#allocation11], %s821
        // Predicated region
        $region121: #{tpu_custom_call.1} parent=103 // pred_check
          %p823 = pneg %p354
        $region122: #{tpu_custom_call.1} parent=103 // pred_check_branch
          %825 = sbr.rel (%p823) target = $region124
        $region123: #{tpu_custom_call.1} parent=103 // pred_region
          %826 = dma.done %s820, 16
        $region124: #{tpu_custom_call.1} parent=103 // pred_fallthru
          _
        %s827 = sand.u32 %s41, 1
        %s828 = scalar_lea.sflag [#allocation4], %s827
        %s829 = sand.u32 %s393, 1
        %s830 = scalar_lea.vmem [#allocation12], %s829
        // Predicated region
        $region125: #{tpu_custom_call.1} parent=103 // pred_check
          %p831 = pneg %p406
        $region126: #{tpu_custom_call.1} parent=103 // pred_check_branch
          %833 = sbr.rel (%p831) target = $region128
        $region127: #{tpu_custom_call.1} parent=103 // pred_region
          %834 = dma.done %s828, 16
        $region128: #{tpu_custom_call.1} parent=103 // pred_fallthru
          _
        %p835 = pneg %p57
        %p836 = pneg %p54
        %p837 = pneg %p78
        %p838 = pneg %p75
        %p839 = pneg %p99
        %p840 = pneg %p96
        %p841 = pneg %p120
        %p842 = pneg %p117
        %p843 = scmp.lt.s32.totalorder %s41, 1
        %s844 = scalar_select %p843, %s41, 1
        %s845 = smul.addr %s844, 2
        %s846 = smul.addr %s845, 8
        %s847 = scalar_lea.vmem %s4, %s846
        %p848 = pneg %p146
        %p849 = pneg %p143
        %p850 = scmp.lt.s32.totalorder %s41, 1
        %s851 = scalar_select %p850, %s41, 1
        %s852 = smul.addr %s851, 4
        %s853 = smul.addr %s852, 4
        %s854 = scalar_lea.vmem %s5, %s853
        %p855 = pneg %p172
        %p856 = pneg %p169
        %p857 = scmp.lt.s32.totalorder %s41, 1
        %s858 = scalar_select %p857, %s41, 1
        %s859 = scalar_lea.vmem %s6, %s858
        %p860 = pneg %p198
        %p861 = pneg %p195
        %p862 = scmp.lt.s32.totalorder %s41, 1
        %s863 = scalar_select %p862, %s41, 1
        %s864 = smul.addr %s863, 4
        %s865 = smul.addr %s864, 4
        %s866 = scalar_lea.vmem %s7, %s865
        %p867 = pneg %p224
        %p868 = pneg %p221
        %p869 = scmp.lt.s32.totalorder %s41, 1
        %s870 = scalar_select %p869, %s41, 1
        %s871 = scalar_lea.vmem %s8, %s870
        %p872 = pneg %p250
        %p873 = pneg %p247
        %p874 = scmp.lt.s32.totalorder %s41, 1
        %s875 = scalar_select %p874, %s41, 1
        %s876 = smul.addr %s875, 4
        %s877 = smul.addr %s876, 4
        %s878 = scalar_lea.vmem %s9, %s877
        %p879 = pneg %p276
        %p880 = pneg %p273
        %p881 = scmp.lt.s32.totalorder %s41, 1
        %s882 = scalar_select %p881, %s41, 1
        %s883 = scalar_lea.vmem %s10, %s882
        %p884 = pneg %p302
        %p885 = pneg %p299
        %p886 = scmp.lt.s32.totalorder %s41, 1
        %s887 = scalar_select %p886, %s41, 1
        %s888 = scalar_lea.vmem %s11, %s887
        %p889 = pneg %p328
        %p890 = pneg %p325
        %s891 = sand.u32 %s41, 1
        %s892 = scalar_lea.sflag [#allocation4], %s891
        %s893 = sand.u32 %s341, 1
        %s894 = scalar_lea.vmem [#allocation11], %s893
        %p895 = pneg %p354
        %p896 = pneg %p351
        %p897 = scmp.lt.s32.totalorder %s41, 1
        %s898 = scalar_select %p897, %s41, 1
        %s899 = smul.addr %s898, 4
        %s900 = smul.addr %s899, 4
        %s901 = scalar_lea.vmem %s13, %s900
        %p902 = pneg %p380
        %p903 = pneg %p377
        %s904 = sand.u32 %s41, 1
        %s905 = scalar_lea.sflag [#allocation4], %s904
        %s906 = sand.u32 %s393, 1
        %s907 = scalar_lea.vmem [#allocation12], %s906
        %p908 = pneg %p406
        %p909 = pneg %p403
        %p910 = scmp.lt.s32.totalorder %s41, 1
        %s911 = scalar_select %p910, %s41, 1
        %s912 = smul.addr %s911, 16
        %s913 = smul.addr %s912, 4
        %s914 = scalar_lea.vmem %s15, %s913
        %p915 = pneg %p432
        %p916 = pneg %p429
        %p917 = scmp.lt.s32.totalorder %s41, 1
        %s918 = scalar_select %p917, %s41, 1
        %s919 = scalar_lea.vmem %s16, %s918
        %p920 = pneg %p458
        %p921 = pneg %p455
        %p922 = scmp.lt.s32.totalorder %s41, 1
        %s923 = scalar_select %p922, %s41, 1
        %s924 = scalar_lea.vmem %s17, %s923
        %p925 = pneg %p484
        %p926 = pneg %p481
        %p927 = scmp.lt.s32.totalorder %s41, 1
        %s928 = scalar_select %p927, %s41, 1
        %s929 = scalar_lea.vmem %s18, %s928
        %p930 = pneg %p510
        %p931 = pneg %p507
        %p932 = pneg %p531
        %p933 = pneg %p528
        %p934 = pneg %p552
        %p935 = pneg %p549
        %p936 = pneg %p573
        %p937 = pneg %p570
        %p938 = pneg %p599
        %p939 = pneg %p596
        %s940 = sand.u32 %s586, 1
        %s941 = scalar_lea.sflag [#allocation15], %s940
        %s942 = sand.u32 %s586, 1
        %s943 = smul.addr %s942, 32
        %s944 = scalar_lea.vmem [#allocation14], %s943
        %p945 = scmp.lt.s32.totalorder %s41, 1
        %s946 = scalar_select %p945, %s41, 1
        %s947 = smul.addr %s946, 2
        %s948 = smul.addr %s947, 8
        %s949 = scalar_lea.vmem %s4, %s948
        %p950 = scmp.lt.s32.totalorder %s41, 1
        %s951 = scalar_select %p950, %s41, 1
        %s952 = smul.addr %s951, 4
        %s953 = smul.addr %s952, 4
        %s954 = scalar_lea.vmem %s5, %s953
        %p955 = scmp.lt.s32.totalorder %s41, 1
        %s956 = scalar_select %p955, %s41, 1
        %s957 = scalar_lea.vmem %s6, %s956
        %p958 = scmp.lt.s32.totalorder %s41, 1
        %s959 = scalar_select %p958, %s41, 1
        %s960 = smul.addr %s959, 4
        %s961 = smul.addr %s960, 4
        %s962 = scalar_lea.vmem %s7, %s961
        %p963 = scmp.lt.s32.totalorder %s41, 1
        %s964 = scalar_select %p963, %s41, 1
        %s965 = scalar_lea.vmem %s8, %s964
        %p966 = scmp.lt.s32.totalorder %s41, 1
        %s967 = scalar_select %p966, %s41, 1
        %s968 = smul.addr %s967, 4
        %s969 = smul.addr %s968, 4
        %s970 = scalar_lea.vmem %s9, %s969
        %p971 = scmp.lt.s32.totalorder %s41, 1
        %s972 = scalar_select %p971, %s41, 1
        %s973 = scalar_lea.vmem %s10, %s972
        %p974 = scmp.lt.s32.totalorder %s41, 1
        %s975 = scalar_select %p974, %s41, 1
        %s976 = scalar_lea.vmem %s11, %s975
        %p977 = scmp.lt.s32.totalorder %s41, 1
        %s978 = scalar_select %p977, %s41, 1
        %s979 = smul.addr %s978, 4
        %s980 = smul.addr %s979, 4
        %s981 = scalar_lea.vmem %s13, %s980
        %p982 = scmp.lt.s32.totalorder %s41, 1
        %s983 = scalar_select %p982, %s41, 1
        %s984 = smul.addr %s983, 16
        %s985 = smul.addr %s984, 4
        %s986 = scalar_lea.vmem %s15, %s985
        %p987 = scmp.lt.s32.totalorder %s41, 1
        %s988 = scalar_select %p987, %s41, 1
        %s989 = scalar_lea.vmem %s16, %s988
        %p990 = scmp.lt.s32.totalorder %s41, 1
        %s991 = scalar_select %p990, %s41, 1
        %s992 = scalar_lea.vmem %s17, %s991
        %p993 = scmp.lt.s32.totalorder %s41, 1
        %s994 = scalar_select %p993, %s41, 1
        %s995 = scalar_lea.vmem %s18, %s994
        %p997 = scmp.eq.s32.totalorder %s41, 0
        // Predicated region
        $region129: #{tpu_custom_call.1} parent=103 // pred_check
          %p998 = pneg %p997
        $region130: #{tpu_custom_call.1} parent=103 // pred_check_branch
          %1000 = sbr.rel (%p998) target = $region132
        $region131: #{tpu_custom_call.1} parent=103 // pred_region
          %v1001 = vld [vmem:[#allocation3] sm:$0xff]
          %v1002 = vld [vmem:[#allocation3 + $0x8] sm:$0xff]
          %v1003 = vld [vmem:[#allocation8] sm:$0x1]
          %v1004 = vld [vmem:[#allocation9] sm:$0x1]
          %vm1005 = vcmask 261120
          %v1006 = vsel %vm1005, %v1001, 0.0
          %1007 = vadd.xlane.f32.xlu0 %v1006
          %v1008 = vpop.xlane.xlu0 %1007
          %v1009 = vsel %vm1005, %v1002, 0.0
          %1010 = vadd.xlane.f32.xlu0 %v1009
          %v1011 = vpop.xlane.xlu0 %1010
          %v1012 = vrcp.pop 32.0
          %v1013 = vmul.f32 %v1008, %v1012
          %v1014 = vmul.f32 %v1011, %v1012
          %v1015 = vsub.f32 %v1001, %v1013
          %v1016 = vsub.f32 %v1002, %v1014
          %v1017 = vmul.f32 %v1015, %v1015
          %v1018 = vmul.f32 %v1016, %v1016
          %v1019 = vsel %vm1005, %v1017, 0.0
          %1020 = vadd.xlane.f32.xlu0 %v1019
          %v1021 = vpop.xlane.xlu0 %1020
          %v1022 = vsel %vm1005, %v1018, 0.0
          %1023 = vadd.xlane.f32.xlu0 %v1022
          %v1024 = vpop.xlane.xlu0 %1023
          %v1025 = vmul.f32 %v1021, %v1012
          %v1026 = vmul.f32 %v1024, %v1012
          %v1027 = vadd.f32 %v1025, 1e-05
          %v1028 = vadd.f32 %v1026, 1e-05
          %v1029 = vrsqrt.pop %v1027
          %v1030 = vrsqrt.pop %v1028
          %v1031 = vmul.f32 %v1015, %v1029
          %v1032 = vmul.f32 %v1016, %v1030
          %v1034 = vlaneseq
          %v1035 = vshrl.u32 %v1034, 7
          %v1036 = vsub.s32 0, %v1035
          %v1037 = vrot.slane %v1003, %v1036
          %v1039 = vmul.f32 %v1031, %v1037
          %v1040 = vmul.f32 %v1032, %v1037
          %v1042 = vlaneseq
          %v1043 = vshrl.u32 %v1042, 7
          %v1044 = vsub.s32 0, %v1043
          %v1045 = vrot.slane %v1004, %v1044
          %v1047 = vadd.f32 %v1039, %v1045
          %v1048 = vadd.f32 %v1040, %v1045
          %v1049 = vld [vmem:[#allocation6] sm:$0xff]
          %v1050 = vld [vmem:[#allocation6 + $0x8] sm:$0xff]
          %v1051 = vadd.f32 %v1047, %v1049
          %v1052 = vadd.f32 %v1048, %v1050
          %1053 = vst.msk [vmem:[#allocation2] sm:$0xff] %vm1005, %v1051
          %1054 = vst.msk [vmem:[#allocation2 + $0x8] sm:$0xff] %vm1005, %v1052
        $region132: #{tpu_custom_call.1} parent=103 // pred_fallthru
          _
        %v1055 = vld [vmem:[#allocation2] sm:$0xff]
        %v1056 = vld [vmem:[#allocation2 + $0x8] sm:$0xff]
        %v1057 = vlaneseq
        %v1058 = vshrl.u32 %v1057, 7
        %v1059 = vadd.s32 %v1058, 1
        %v1060 = vlaneseq
        %v1061 = vand.u32 %v1060, 127
        %v1062 = vsub.s32 %v1061, 7
        %v1063 = vsub.s32 %v1059, %v1062
        %vm1064 = vcmp.ge.s32.totalorder %v1061, 7
        %vm1065 = vcmp.ge.s32.totalorder %v1063, 0
        %vm1066 = vmand %vm1064, %vm1065
        %vm1067 = vcmp.le.s32.totalorder %v1063, 1000
        %vm1068 = vmand %vm1066, %vm1067
        %v1069 = vsel %vm1068, 0.0, -1e+30
        %v1070 = vpack.c.bf16 %v1056, %v1055
        %v1071 = vld [vmem:[%s954] sm:$0xf]
        %v1072 = vld [vmem:[%s954 + $0x4] sm:$0xf]
        %v1073 = vld [vmem:[%s954 + $0x8] sm:$0xf]
        %v1074 = vld [vmem:[%s954 + $0xc] sm:$0xf]
        %v1075 = vld [vmem:[%s957] sm:$0x1]
        %v1077 = vlaneseq
        %v1078 = vshrl.u32 %v1077, 7
        %v1079 = vsub.s32 0, %v1078
        %v1080 = vrot.slane %v1075, %v1079
        %v1086 = vunpack.c.l.b16 %v1071
        %v1087 = vunpack.c.l.b16 %v1072
        %v1088 = vunpack.c.l.b16 %v1073
        %v1089 = vunpack.c.l.b16 %v1074
        %v1090 = vpack.c.b16 %v1087, %v1086
        %v1091 = vpack.c.b16 %v1089, %v1088
        %vm1094 = vcmask 261120
        %v1096 = vsel %vm1094, %v1070, 0
        %1098 = vmatprep.subr.bf16.mxu0 0
        %1099 = vmatpush1.bf16.msra.mxu0 %v1090
        %1100 = vmatprep.subr.bf16.mxu0 0
        %1101 = vmatpush1.bf16.msra.mxu0 %v1091
        %1102 = vmatprep.subr.bf16.mxu0 0
        %1103 = vmatpush1.bf16.msra.mxu0 0
        %1104 = vmatprep.subr.bf16.mxu0 0
        %1105 = vmatpush1.bf16.msra.mxu0 0
        %1106 = vmatprep.subr.bf16.mxu0 0
        %1107 = vmatpush1.bf16.msra.mxu0 0
        %1108 = vmatprep.subr.bf16.mxu0 0
        %1109 = vmatpush1.bf16.msra.mxu0 0
        %1110 = vmatprep.subr.bf16.mxu0 0
        %1111 = vmatpush1.bf16.msra.mxu0 0
        %1112 = vmatprep.subr.bf16.mxu0 0
        %1113 = vmatpush1.bf16.msra.mxu0 0
        %1114 = vmatprep.subr.bf16.mxu0 0
        %1115 = vmatpush1.bf16.msra.mxu0 0
        %1116 = vmatprep.subr.bf16.mxu0 0
        %1117 = vmatpush1.bf16.msra.mxu0 0
        %1118 = vmatprep.subr.bf16.mxu0 0
        %1119 = vmatpush1.bf16.msra.mxu0 0
        %1120 = vmatprep.subr.bf16.mxu0 0
        %1121 = vmatpush1.bf16.msra.mxu0 0
        %1122 = vmatprep.subr.bf16.mxu0 0
        %1123 = vmatpush1.bf16.msra.mxu0 0
        %1124 = vmatprep.subr.bf16.mxu0 0
        %1125 = vmatpush1.bf16.msra.mxu0 0
        %1126 = vmatprep.subr.bf16.mxu0 0
        %1127 = vmatpush1.bf16.msra.mxu0 0
        %1128 = vmatprep.subr.bf16.mxu0 0
        %1129 = vmatpush1.bf16.msra.mxu0 0
        %1130 = vmatprep.mubr.bf16.mxu0 0
        %1131 = vmatmul.mubr.bf16.gmra.mrb[0].mxu0 %v1096
        %v1132 = vpop.f32.mrb[0].mxu0
        %v1133 = vadd.f32 %v1080, %v1132
        %v1134 = vpop.f32.mrb[0].mxu0
        %v1135 = vpop.f32.mrb[0].mxu0
        %v1136 = vadd.f32 %v1080, %v1135
        %v1137 = vpop.f32.mrb[0].mxu0
        %1138 = vdwg.mxu0
        %v1139 = vld [vmem:[%s949] sm:$0xff]
        %v1140 = vld [vmem:[%s949 + $0x8] sm:$0xff]
        %1141 = vst.msk [vmem:[%s944] sm:$0xff] %vm1094, %v1139
        %1142 = vst.msk [vmem:[%s944 + $0x8] sm:$0xff] %vm1094, %v1055
        %1143 = vst.msk [vmem:[%s944 + $0x10] sm:$0xff] %vm1094, %v1140
        %1144 = vst.msk [vmem:[%s944 + $0x18] sm:$0xff] %vm1094, %v1056
        %v1145 = vpack.c.bf16 %v1055, %v1139
        %v1146 = vpack.c.bf16 %v1056, %v1140
        %v1147 = vld [vmem:[%s962] sm:$0xf]
        %v1148 = vld [vmem:[%s962 + $0x4] sm:$0xf]
        %v1149 = vld [vmem:[%s962 + $0x8] sm:$0xf]
        %v1150 = vld [vmem:[%s962 + $0xc] sm:$0xf]
        %v1151 = vld [vmem:[%s965] sm:$0x1]
        %v1153 = vlaneseq
        %v1154 = vshrl.u32 %v1153, 7
        %v1155 = vsub.s32 0, %v1154
        %v1156 = vrot.slane %v1151, %v1155
        %v1162 = vunpack.c.l.b16 %v1147
        %v1163 = vunpack.c.l.b16 %v1148
        %v1164 = vunpack.c.l.b16 %v1149
        %v1165 = vunpack.c.l.b16 %v1150
        %v1166 = vpack.c.b16 %v1163, %v1162
        %v1167 = vpack.c.b16 %v1165, %v1164
        %v1171 = vsel %vm1094, %v1145, 0
        %v1174 = vsel %vm1094, %v1146, 0
        %1176 = vmatprep.subr.bf16.mxu0 0
        %1177 = vmatpush1.bf16.msra.mxu0 %v1166
        %1178 = vmatprep.subr.bf16.mxu0 0
        %1179 = vmatpush1.bf16.msra.mxu0 %v1167
        %1180 = vmatprep.subr.bf16.mxu0 0
        %1181 = vmatpush1.bf16.msra.mxu0 0
        %1182 = vmatprep.subr.bf16.mxu0 0
        %1183 = vmatpush1.bf16.msra.mxu0 0
        %1184 = vmatprep.subr.bf16.mxu0 0
        %1185 = vmatpush1.bf16.msra.mxu0 0
        %1186 = vmatprep.subr.bf16.mxu0 0
        %1187 = vmatpush1.bf16.msra.mxu0 0
        %1188 = vmatprep.subr.bf16.mxu0 0
        %1189 = vmatpush1.bf16.msra.mxu0 0
        %1190 = vmatprep.subr.bf16.mxu0 0
        %1191 = vmatpush1.bf16.msra.mxu0 0
        %1192 = vmatprep.subr.bf16.mxu0 0
        %1193 = vmatpush1.bf16.msra.mxu0 0
        %1194 = vmatprep.subr.bf16.mxu0 0
        %1195 = vmatpush1.bf16.msra.mxu0 0
        %1196 = vmatprep.subr.bf16.mxu0 0
        %1197 = vmatpush1.bf16.msra.mxu0 0
        %1198 = vmatprep.subr.bf16.mxu0 0
        %1199 = vmatpush1.bf16.msra.mxu0 0
        %1200 = vmatprep.subr.bf16.mxu0 0
        %1201 = vmatpush1.bf16.msra.mxu0 0
        %1202 = vmatprep.subr.bf16.mxu0 0
        %1203 = vmatpush1.bf16.msra.mxu0 0
        %1204 = vmatprep.subr.bf16.mxu0 0
        %1205 = vmatpush1.bf16.msra.mxu0 0
        %1206 = vmatprep.subr.bf16.mxu0 0
        %1207 = vmatpush1.bf16.msra.mxu0 0
        %1208 = vmatprep.mubr.bf16.mxu0 0
        %1209 = vmatmul.mubr.bf16.gmra.mrb[0].mxu0 %v1171
        %v1210 = vpop.f32.mrb[0].mxu0
        %v1211 = vadd.f32 %v1156, %v1210
        %v1212 = vpop.f32.mrb[0].mxu0
        %v1213 = vpop.f32.mrb[0].mxu0
        %v1214 = vadd.f32 %v1156, %v1213
        %v1215 = vpop.f32.mrb[0].mxu0
        %1216 = vmatprep.mubr.bf16.mxu0 0
        %1217 = vmatmul.mubr.bf16.gmra.mrb[0].mxu0 %v1174
        %v1218 = vpop.f32.mrb[0].mxu0
        %v1219 = vadd.f32 %v1156, %v1218
        %v1220 = vpop.f32.mrb[0].mxu0
        %v1221 = vpop.f32.mrb[0].mxu0
        %v1222 = vadd.f32 %v1156, %v1221
        %v1223 = vpop.f32.mrb[0].mxu0
        %1224 = vdwg.mxu0
        %v1225 = vpack.c.bf16 %v1133, %v1133
        %v1226 = vpack.c.bf16 %v1136, %v1136
        %v1227 = vpack.c.bf16 %v1214, %v1211
        %v1228 = vpack.c.bf16 %v1222, %v1219
        %vm1229 = vcmask 64512
        %v1231 = vsel %vm1229, %v1225, 0
        %v1234 = vsel %vm1229, %v1227, 0
        %1236 = vmatprep.subr.bf16.mxu0 0
        %1237 = vmatpush1.bf16.xpose.msra.mxu0 %v1234
        %1238 = vmatprep.subr.bf16.mxu0 0
        %1239 = vmatpush1.bf16.xpose.msra.mxu0 0
        %1240 = vmatprep.subr.bf16.mxu0 0
        %1241 = vmatpush1.bf16.xpose.msra.mxu0 0
        %1242 = vmatprep.subr.bf16.mxu0 0
        %1243 = vmatpush1.bf16.xpose.msra.mxu0 0
        %1244 = vmatprep.subr.bf16.mxu0 0
        %1245 = vmatpush1.bf16.xpose.msra.mxu0 0
        %1246 = vmatprep.subr.bf16.mxu0 0
        %1247 = vmatpush1.bf16.xpose.msra.mxu0 0
        %1248 = vmatprep.subr.bf16.mxu0 0
        %1249 = vmatpush1.bf16.xpose.msra.mxu0 0
        %1250 = vmatprep.subr.bf16.mxu0 0
        %1251 = vmatpush1.bf16.xpose.msra.mxu0 0
        %1252 = vmatprep.subr.bf16.mxu0 0
        %1253 = vmatpush1.bf16.xpose.msra.mxu0 0
        %1254 = vmatprep.subr.bf16.mxu0 0
        %1255 = vmatpush1.bf16.xpose.msra.mxu0 0
        %1256 = vmatprep.subr.bf16.mxu0 0
        %1257 = vmatpush1.bf16.xpose.msra.mxu0 0
        %1258 = vmatprep.subr.bf16.mxu0 0
        %1259 = vmatpush1.bf16.xpose.msra.mxu0 0
        %1260 = vmatprep.subr.bf16.mxu0 0
        %1261 = vmatpush1.bf16.xpose.msra.mxu0 0
        %1262 = vmatprep.subr.bf16.mxu0 0
        %1263 = vmatpush1.bf16.xpose.msra.mxu0 0
        %1264 = vmatprep.subr.bf16.mxu0 0
        %1265 = vmatpush1.bf16.xpose.msra.mxu0 0
        %1266 = vmatprep.subr.bf16.mxu0 0
        %1267 = vmatpush1.bf16.xpose.msra.mxu0 0
        %1268 = vmatprep.mubr.bf16.mxu0 0
        %1269 = vmatmul.mubr.bf16.gmra.mrb[0].mxu0 %v1231
        %v1270 = vpop.f32.mrb[0].mxu0
        %v1271 = vadd.f32 0.0, %v1270
        %v1272 = vpop.f32.mrb[0].mxu0
        %v1273 = vpop.f32.mrb[0].mxu0
        %v1274 = vpop.f32.mrb[0].mxu0
        %1275 = vdwg.mxu0
        %v1277 = vsel %vm1229, %v1226, 0
        %v1280 = vsel %vm1229, %v1228, 0
        %1282 = vmatprep.subr.bf16.mxu0 0
        %1283 = vmatpush1.bf16.xpose.msra.mxu0 %v1280
        %1284 = vmatprep.subr.bf16.mxu0 0
        %1285 = vmatpush1.bf16.xpose.msra.mxu0 0
        %1286 = vmatprep.subr.bf16.mxu0 0
        %1287 = vmatpush1.bf16.xpose.msra.mxu0 0
        %1288 = vmatprep.subr.bf16.mxu0 0
        %1289 = vmatpush1.bf16.xpose.msra.mxu0 0
        %1290 = vmatprep.subr.bf16.mxu0 0
        %1291 = vmatpush1.bf16.xpose.msra.mxu0 0
        %1292 = vmatprep.subr.bf16.mxu0 0
        %1293 = vmatpush1.bf16.xpose.msra.mxu0 0
        %1294 = vmatprep.subr.bf16.mxu0 0
        %1295 = vmatpush1.bf16.xpose.msra.mxu0 0
        %1296 = vmatprep.subr.bf16.mxu0 0
        %1297 = vmatpush1.bf16.xpose.msra.mxu0 0
        %1298 = vmatprep.subr.bf16.mxu0 0
        %1299 = vmatpush1.bf16.xpose.msra.mxu0 0
        %1300 = vmatprep.subr.bf16.mxu0 0
        %1301 = vmatpush1.bf16.xpose.msra.mxu0 0
        %1302 = vmatprep.subr.bf16.mxu0 0
        %1303 = vmatpush1.bf16.xpose.msra.mxu0 0
        %1304 = vmatprep.subr.bf16.mxu0 0
        %1305 = vmatpush1.bf16.xpose.msra.mxu0 0
        %1306 = vmatprep.subr.bf16.mxu0 0
        %1307 = vmatpush1.bf16.xpose.msra.mxu0 0
        %1308 = vmatprep.subr.bf16.mxu0 0
        %1309 = vmatpush1.bf16.xpose.msra.mxu0 0
        %1310 = vmatprep.subr.bf16.mxu0 0
        %1311 = vmatpush1.bf16.xpose.msra.mxu0 0
        %1312 = vmatprep.subr.bf16.mxu0 0
        %1313 = vmatpush1.bf16.xpose.msra.mxu0 0
        %1314 = vmatprep.mubr.bf16.mxu0 0
        %1315 = vmatmul.mubr.bf16.gmra.mrb[0].mxu0 %v1277
        %v1316 = vpop.f32.mrb[0].mxu0
        %v1317 = vadd.f32 0.0, %v1316
        %v1318 = vpop.f32.mrb[0].mxu0
        %v1319 = vpop.f32.mrb[0].mxu0
        %v1320 = vpop.f32.mrb[0].mxu0
        %1321 = vdwg.mxu0
        %v1322 = vmul.f32 %v1271, 0.35355338
        %v1323 = vmul.f32 %v1317, 0.35355338
        %v1324 = vadd.f32 %v1322, %v1069
        %v1325 = vadd.f32 %v1323, %v1069
        %vm1326 = vcmask 130048
        %v1327 = vsel %vm1326, %v1324, -inf
        %1328 = vmax.xlane.f32.xlu0 %v1327
        %v1329 = vpop.xlane.xlu0 %1328
        %v1330 = vsel %vm1326, %v1325, -inf
        %1331 = vmax.xlane.f32.xlu0 %v1330
        %v1332 = vpop.xlane.xlu0 %1331
        %v1333 = vsub.f32 %v1324, %v1329
        %v1334 = vsub.f32 %v1325, %v1332
        %v1335 = vmul.f32 %v1333, 1.442695
        %v1336 = vpow.pop %v1335
        %v1337 = vmul.f32 %v1334, 1.442695
        %v1338 = vpow.pop %v1337
        %v1339 = vsel %vm1326, %v1336, 0.0
        %1340 = vadd.xlane.f32.xlu0 %v1339
        %v1341 = vpop.xlane.xlu0 %1340
        %v1342 = vsel %vm1326, %v1338, 0.0
        %1343 = vadd.xlane.f32.xlu0 %v1342
        %v1344 = vpop.xlane.xlu0 %1343
        %v1345 = vrcp.pop %v1341
        %v1346 = vrcp.pop %v1344
        %v1347 = vmul.f32 %v1336, %v1345
        %v1348 = vmul.f32 %v1338, %v1346
        %v1349 = vpack.c.bf16 %v1347, %v1347
        %v1350 = vpack.c.bf16 %v1348, %v1348
        %1352 = vrot.lane.b32.xlu0 %v1227, 96
        %v1353 = vpop.permute.xlu0 %1352
        %v1356 = vsel %vm1326, %v1349, 0
        %1358 = vmatprep.subr.bf16.mxu0 0
        %1359 = vmatpush1.bf16.msra.mxu0 %v1353
        %1360 = vmatprep.subr.bf16.mxu0 0
        %1361 = vmatpush1.bf16.msra.mxu0 0
        %1362 = vmatprep.subr.bf16.mxu0 0
        %1363 = vmatpush1.bf16.msra.mxu0 0
        %1364 = vmatprep.subr.bf16.mxu0 0
        %1365 = vmatpush1.bf16.msra.mxu0 0
        %1366 = vmatprep.subr.bf16.mxu0 0
        %1367 = vmatpush1.bf16.msra.mxu0 0
        %1368 = vmatprep.subr.bf16.mxu0 0
        %1369 = vmatpush1.bf16.msra.mxu0 0
        %1370 = vmatprep.subr.bf16.mxu0 0
        %1371 = vmatpush1.bf16.msra.mxu0 0
        %1372 = vmatprep.subr.bf16.mxu0 0
        %1373 = vmatpush1.bf16.msra.mxu0 0
        %1374 = vmatprep.subr.bf16.mxu0 0
        %1375 = vmatpush1.bf16.msra.mxu0 0
        %1376 = vmatprep.subr.bf16.mxu0 0
        %1377 = vmatpush1.bf16.msra.mxu0 0
        %1378 = vmatprep.subr.bf16.mxu0 0
        %1379 = vmatpush1.bf16.msra.mxu0 0
        %1380 = vmatprep.subr.bf16.mxu0 0
        %1381 = vmatpush1.bf16.msra.mxu0 0
        %1382 = vmatprep.subr.bf16.mxu0 0
        %1383 = vmatpush1.bf16.msra.mxu0 0
        %1384 = vmatprep.subr.bf16.mxu0 0
        %1385 = vmatpush1.bf16.msra.mxu0 0
        %1386 = vmatprep.subr.bf16.mxu0 0
        %1387 = vmatpush1.bf16.msra.mxu0 0
        %1388 = vmatprep.subr.bf16.mxu0 0
        %1389 = vmatpush1.bf16.msra.mxu0 0
        %1390 = vmatprep.mubr.bf16.mxu0 0
        %1391 = vmatmul.mubr.bf16.gmra.mrb[0].mxu0 %v1356
        %v1392 = vpop.f32.mrb[0].mxu0
        %v1393 = vadd.f32 0.0, %v1392
        %v1394 = vpop.f32.mrb[0].mxu0
        %v1395 = vpop.f32.mrb[0].mxu0
        %v1396 = vpop.f32.mrb[0].mxu0
        %1397 = vdwg.mxu0
        %1399 = vrot.lane.b32.xlu0 %v1228, 96
        %v1400 = vpop.permute.xlu0 %1399
        %v1403 = vsel %vm1326, %v1350, 0
        %1405 = vmatprep.subr.bf16.mxu0 0
        %1406 = vmatpush1.bf16.msra.mxu0 %v1400
        %1407 = vmatprep.subr.bf16.mxu0 0
        %1408 = vmatpush1.bf16.msra.mxu0 0
        %1409 = vmatprep.subr.bf16.mxu0 0
        %1410 = vmatpush1.bf16.msra.mxu0 0
        %1411 = vmatprep.subr.bf16.mxu0 0
        %1412 = vmatpush1.bf16.msra.mxu0 0
        %1413 = vmatprep.subr.bf16.mxu0 0
        %1414 = vmatpush1.bf16.msra.mxu0 0
        %1415 = vmatprep.subr.bf16.mxu0 0
        %1416 = vmatpush1.bf16.msra.mxu0 0
        %1417 = vmatprep.subr.bf16.mxu0 0
        %1418 = vmatpush1.bf16.msra.mxu0 0
        %1419 = vmatprep.subr.bf16.mxu0 0
        %1420 = vmatpush1.bf16.msra.mxu0 0
        %1421 = vmatprep.subr.bf16.mxu0 0
        %1422 = vmatpush1.bf16.msra.mxu0 0
        %1423 = vmatprep.subr.bf16.mxu0 0
        %1424 = vmatpush1.bf16.msra.mxu0 0
        %1425 = vmatprep.subr.bf16.mxu0 0
        %1426 = vmatpush1.bf16.msra.mxu0 0
        %1427 = vmatprep.subr.bf16.mxu0 0
        %1428 = vmatpush1.bf16.msra.mxu0 0
        %1429 = vmatprep.subr.bf16.mxu0 0
        %1430 = vmatpush1.bf16.msra.mxu0 0
        %1431 = vmatprep.subr.bf16.mxu0 0
        %1432 = vmatpush1.bf16.msra.mxu0 0
        %1433 = vmatprep.subr.bf16.mxu0 0
        %1434 = vmatpush1.bf16.msra.mxu0 0
        %1435 = vmatprep.subr.bf16.mxu0 0
        %1436 = vmatpush1.bf16.msra.mxu0 0
        %1437 = vmatprep.mubr.bf16.mxu0 0
        %1438 = vmatmul.mubr.bf16.gmra.mrb[0].mxu0 %v1403
        %v1439 = vpop.f32.mrb[0].mxu0
        %v1440 = vadd.f32 0.0, %v1439
        %v1441 = vpop.f32.mrb[0].mxu0
        %v1442 = vpop.f32.mrb[0].mxu0
        %v1443 = vpop.f32.mrb[0].mxu0
        %1444 = vdwg.mxu0
        %v1445 = vpack.c.bf16 %v1440, %v1393
        %v1446 = vld [vmem:[%s970] sm:$0xf]
        %1448 = vrot.lane.b32.xlu0 %v1225, 120
        %v1449 = vpop.permute.xlu0 %1448
        %1450 = vrot.lane.b32.xlu0 %v1227, 120
        %v1451 = vpop.permute.xlu0 %1450
        %v1453 = vsel %vm1229, %v1449, 0
        %v1456 = vsel %vm1229, %v1451, 0
        %1458 = vmatprep.subr.bf16.mxu0 0
        %1459 = vmatpush1.bf16.xpose.msra.mxu0 %v1456
        %1460 = vmatprep.subr.bf16.mxu0 0
        %1461 = vmatpush1.bf16.xpose.msra.mxu0 0
        %1462 = vmatprep.subr.bf16.mxu0 0
        %1463 = vmatpush1.bf16.xpose.msra.mxu0 0
        %1464 = vmatprep.subr.bf16.mxu0 0
        %1465 = vmatpush1.bf16.xpose.msra.mxu0 0
        %1466 = vmatprep.subr.bf16.mxu0 0
        %1467 = vmatpush1.bf16.xpose.msra.mxu0 0
        %1468 = vmatprep.subr.bf16.mxu0 0
        %1469 = vmatpush1.bf16.xpose.msra.mxu0 0
        %1470 = vmatprep.subr.bf16.mxu0 0
        %1471 = vmatpush1.bf16.xpose.msra.mxu0 0
        %1472 = vmatprep.subr.bf16.mxu0 0
        %1473 = vmatpush1.bf16.xpose.msra.mxu0 0
        %1474 = vmatprep.subr.bf16.mxu0 0
        %1475 = vmatpush1.bf16.xpose.msra.mxu0 0
        %1476 = vmatprep.subr.bf16.mxu0 0
        %1477 = vmatpush1.bf16.xpose.msra.mxu0 0
        %1478 = vmatprep.subr.bf16.mxu0 0
        %1479 = vmatpush1.bf16.xpose.msra.mxu0 0
        %1480 = vmatprep.subr.bf16.mxu0 0
        %1481 = vmatpush1.bf16.xpose.msra.mxu0 0
        %1482 = vmatprep.subr.bf16.mxu0 0
        %1483 = vmatpush1.bf16.xpose.msra.mxu0 0
        %1484 = vmatprep.subr.bf16.mxu0 0
        %1485 = vmatpush1.bf16.xpose.msra.mxu0 0
        %1486 = vmatprep.subr.bf16.mxu0 0
        %1487 = vmatpush1.bf16.xpose.msra.mxu0 0
        %1488 = vmatprep.subr.bf16.mxu0 0
        %1489 = vmatpush1.bf16.xpose.msra.mxu0 0
        %1490 = vmatprep.mubr.bf16.mxu0 0
        %1491 = vmatmul.mubr.bf16.gmra.mrb[0].mxu0 %v1453
        %v1492 = vpop.f32.mrb[0].mxu0
        %v1493 = vadd.f32 0.0, %v1492
        %v1494 = vpop.f32.mrb[0].mxu0
        %v1495 = vpop.f32.mrb[0].mxu0
        %v1496 = vpop.f32.mrb[0].mxu0
        %1497 = vdwg.mxu0
        %1499 = vrot.lane.b32.xlu0 %v1226, 120
        %v1500 = vpop.permute.xlu0 %1499
        %1501 = vrot.lane.b32.xlu0 %v1228, 120
        %v1502 = vpop.permute.xlu0 %1501
        %v1504 = vsel %vm1229, %v1500, 0
        %v1507 = vsel %vm1229, %v1502, 0
        %1509 = vmatprep.subr.bf16.mxu0 0
        %1510 = vmatpush1.bf16.xpose.msra.mxu0 %v1507
        %1511 = vmatprep.subr.bf16.mxu0 0
        %1512 = vmatpush1.bf16.xpose.msra.mxu0 0
        %1513 = vmatprep.subr.bf16.mxu0 0
        %1514 = vmatpush1.bf16.xpose.msra.mxu0 0
        %1515 = vmatprep.subr.bf16.mxu0 0
        %1516 = vmatpush1.bf16.xpose.msra.mxu0 0
        %1517 = vmatprep.subr.bf16.mxu0 0
        %1518 = vmatpush1.bf16.xpose.msra.mxu0 0
        %1519 = vmatprep.subr.bf16.mxu0 0
        %1520 = vmatpush1.bf16.xpose.msra.mxu0 0
        %1521 = vmatprep.subr.bf16.mxu0 0
        %1522 = vmatpush1.bf16.xpose.msra.mxu0 0
        %1523 = vmatprep.subr.bf16.mxu0 0
        %1524 = vmatpush1.bf16.xpose.msra.mxu0 0
        %1525 = vmatprep.subr.bf16.mxu0 0
        %1526 = vmatpush1.bf16.xpose.msra.mxu0 0
        %1527 = vmatprep.subr.bf16.mxu0 0
        %1528 = vmatpush1.bf16.xpose.msra.mxu0 0
        %1529 = vmatprep.subr.bf16.mxu0 0
        %1530 = vmatpush1.bf16.xpose.msra.mxu0 0
        %1531 = vmatprep.subr.bf16.mxu0 0
        %1532 = vmatpush1.bf16.xpose.msra.mxu0 0
        %1533 = vmatprep.subr.bf16.mxu0 0
        %1534 = vmatpush1.bf16.xpose.msra.mxu0 0
        %1535 = vmatprep.subr.bf16.mxu0 0
        %1536 = vmatpush1.bf16.xpose.msra.mxu0 0
        %1537 = vmatprep.subr.bf16.mxu0 0
        %1538 = vmatpush1.bf16.xpose.msra.mxu0 0
        %1539 = vmatprep.subr.bf16.mxu0 0
        %1540 = vmatpush1.bf16.xpose.msra.mxu0 0
        %1541 = vmatprep.mubr.bf16.mxu0 0
        %1542 = vmatmul.mubr.bf16.gmra.mrb[0].mxu0 %v1504
        %v1543 = vpop.f32.mrb[0].mxu0
        %v1544 = vadd.f32 0.0, %v1543
        %v1545 = vpop.f32.mrb[0].mxu0
        %v1546 = vpop.f32.mrb[0].mxu0
        %v1547 = vpop.f32.mrb[0].mxu0
        %1548 = vdwg.mxu0
        %v1549 = vmul.f32 %v1493, 0.35355338
        %v1550 = vmul.f32 %v1544, 0.35355338
        %v1551 = vadd.f32 %v1549, %v1069
        %v1552 = vadd.f32 %v1550, %v1069
        %v1553 = vsel %vm1326, %v1551, -inf
        %1554 = vmax.xlane.f32.xlu0 %v1553
        %v1555 = vpop.xlane.xlu0 %1554
        %v1556 = vsel %vm1326, %v1552, -inf
        %1557 = vmax.xlane.f32.xlu0 %v1556
        %v1558 = vpop.xlane.xlu0 %1557
        %v1559 = vsub.f32 %v1551, %v1555
        %v1560 = vsub.f32 %v1552, %v1558
        %v1561 = vmul.f32 %v1559, 1.442695
        %v1562 = vpow.pop %v1561
        %v1563 = vmul.f32 %v1560, 1.442695
        %v1564 = vpow.pop %v1563
        %v1565 = vsel %vm1326, %v1562, 0.0
        %1566 = vadd.xlane.f32.xlu0 %v1565
        %v1567 = vpop.xlane.xlu0 %1566
        %v1568 = vsel %vm1326, %v1564, 0.0
        %1569 = vadd.xlane.f32.xlu0 %v1568
        %v1570 = vpop.xlane.xlu0 %1569
        %v1571 = vrcp.pop %v1567
        %v1572 = vrcp.pop %v1570
        %v1573 = vmul.f32 %v1562, %v1571
        %v1574 = vmul.f32 %v1564, %v1572
        %v1575 = vpack.c.bf16 %v1573, %v1573
        %v1576 = vpack.c.bf16 %v1574, %v1574
        %1577 = vrot.lane.b32.xlu0 %v1227, 88
        %v1578 = vpop.permute.xlu0 %1577
        %v1581 = vsel %vm1326, %v1575, 0
        %1583 = vmatprep.subr.bf16.mxu0 0
        %1584 = vmatpush1.bf16.msra.mxu0 %v1578
        %1585 = vmatprep.subr.bf16.mxu0 0
        %1586 = vmatpush1.bf16.msra.mxu0 0
        %1587 = vmatprep.subr.bf16.mxu0 0
        %1588 = vmatpush1.bf16.msra.mxu0 0
        %1589 = vmatprep.subr.bf16.mxu0 0
        %1590 = vmatpush1.bf16.msra.mxu0 0
        %1591 = vmatprep.subr.bf16.mxu0 0
        %1592 = vmatpush1.bf16.msra.mxu0 0
        %1593 = vmatprep.subr.bf16.mxu0 0
        %1594 = vmatpush1.bf16.msra.mxu0 0
        %1595 = vmatprep.subr.bf16.mxu0 0
        %1596 = vmatpush1.bf16.msra.mxu0 0
        %1597 = vmatprep.subr.bf16.mxu0 0
        %1598 = vmatpush1.bf16.msra.mxu0 0
        %1599 = vmatprep.subr.bf16.mxu0 0
        %1600 = vmatpush1.bf16.msra.mxu0 0
        %1601 = vmatprep.subr.bf16.mxu0 0
        %1602 = vmatpush1.bf16.msra.mxu0 0
        %1603 = vmatprep.subr.bf16.mxu0 0
        %1604 = vmatpush1.bf16.msra.mxu0 0
        %1605 = vmatprep.subr.bf16.mxu0 0
        %1606 = vmatpush1.bf16.msra.mxu0 0
        %1607 = vmatprep.subr.bf16.mxu0 0
        %1608 = vmatpush1.bf16.msra.mxu0 0
        %1609 = vmatprep.subr.bf16.mxu0 0
        %1610 = vmatpush1.bf16.msra.mxu0 0
        %1611 = vmatprep.subr.bf16.mxu0 0
        %1612 = vmatpush1.bf16.msra.mxu0 0
        %1613 = vmatprep.subr.bf16.mxu0 0
        %1614 = vmatpush1.bf16.msra.mxu0 0
        %1615 = vmatprep.mubr.bf16.mxu0 0
        %1616 = vmatmul.mubr.bf16.gmra.mrb[0].mxu0 %v1581
        %v1617 = vpop.f32.mrb[0].mxu0
        %v1618 = vadd.f32 0.0, %v1617
        %v1619 = vpop.f32.mrb[0].mxu0
        %v1620 = vpop.f32.mrb[0].mxu0
        %v1621 = vpop.f32.mrb[0].mxu0
        %1622 = vdwg.mxu0
        %1623 = vrot.lane.b32.xlu0 %v1228, 88
        %v1624 = vpop.permute.xlu0 %1623
        %v1627 = vsel %vm1326, %v1576, 0
        %1629 = vmatprep.subr.bf16.mxu0 0
        %1630 = vmatpush1.bf16.msra.mxu0 %v1624
        %1631 = vmatprep.subr.bf16.mxu0 0
        %1632 = vmatpush1.bf16.msra.mxu0 0
        %1633 = vmatprep.subr.bf16.mxu0 0
        %1634 = vmatpush1.bf16.msra.mxu0 0
        %1635 = vmatprep.subr.bf16.mxu0 0
        %1636 = vmatpush1.bf16.msra.mxu0 0
        %1637 = vmatprep.subr.bf16.mxu0 0
        %1638 = vmatpush1.bf16.msra.mxu0 0
        %1639 = vmatprep.subr.bf16.mxu0 0
        %1640 = vmatpush1.bf16.msra.mxu0 0
        %1641 = vmatprep.subr.bf16.mxu0 0
        %1642 = vmatpush1.bf16.msra.mxu0 0
        %1643 = vmatprep.subr.bf16.mxu0 0
        %1644 = vmatpush1.bf16.msra.mxu0 0
        %1645 = vmatprep.subr.bf16.mxu0 0
        %1646 = vmatpush1.bf16.msra.mxu0 0
        %1647 = vmatprep.subr.bf16.mxu0 0
        %1648 = vmatpush1.bf16.msra.mxu0 0
        %1649 = vmatprep.subr.bf16.mxu0 0
        %1650 = vmatpush1.bf16.msra.mxu0 0
        %1651 = vmatprep.subr.bf16.mxu0 0
        %1652 = vmatpush1.bf16.msra.mxu0 0
        %1653 = vmatprep.subr.bf16.mxu0 0
        %1654 = vmatpush1.bf16.msra.mxu0 0
        %1655 = vmatprep.subr.bf16.mxu0 0
        %1656 = vmatpush1.bf16.msra.mxu0 0
        %1657 = vmatprep.subr.bf16.mxu0 0
        %1658 = vmatpush1.bf16.msra.mxu0 0
        %1659 = vmatprep.subr.bf16.mxu0 0
        %1660 = vmatpush1.bf16.msra.mxu0 0
        %1661 = vmatprep.mubr.bf16.mxu0 0
        %1662 = vmatmul.mubr.bf16.gmra.mrb[0].mxu0 %v1627
        %v1663 = vpop.f32.mrb[0].mxu0
        %v1664 = vadd.f32 0.0, %v1663
        %v1665 = vpop.f32.mrb[0].mxu0
        %v1666 = vpop.f32.mrb[0].mxu0
        %v1667 = vpop.f32.mrb[0].mxu0
        %1668 = vdwg.mxu0
        %v1669 = vpack.c.bf16 %v1664, %v1618
        %s1670 = scalar_lea.vmem %s970, 4
        %v1671 = vld [vmem:[%s1670] sm:$0xf]
        %v1673 = vsel %vm1229, %v1669, 0
        %vm1675 = vcmask 1043456
        %v1677 = vsel %vm1675, %v1671, 0
        %1679 = vmatprep.subr.bf16.mxu0 0
        %1680 = vmatpush1.bf16.msra.mxu0 %v1677
        %1681 = vmatprep.subr.bf16.mxu0 0
        %1682 = vmatpush1.bf16.msra.mxu0 0
        %1683 = vmatprep.subr.bf16.mxu0 0
        %1684 = vmatpush1.bf16.msra.mxu0 0
        %1685 = vmatprep.subr.bf16.mxu0 0
        %1686 = vmatpush1.bf16.msra.mxu0 0
        %1687 = vmatprep.subr.bf16.mxu0 0
        %1688 = vmatpush1.bf16.msra.mxu0 0
        %1689 = vmatprep.subr.bf16.mxu0 0
        %1690 = vmatpush1.bf16.msra.mxu0 0
        %1691 = vmatprep.subr.bf16.mxu0 0
        %1692 = vmatpush1.bf16.msra.mxu0 0
        %1693 = vmatprep.subr.bf16.mxu0 0
        %1694 = vmatpush1.bf16.msra.mxu0 0
        %1695 = vmatprep.subr.bf16.mxu0 0
        %1696 = vmatpush1.bf16.msra.mxu0 0
        %1697 = vmatprep.subr.bf16.mxu0 0
        %1698 = vmatpush1.bf16.msra.mxu0 0
        %1699 = vmatprep.subr.bf16.mxu0 0
        %1700 = vmatpush1.bf16.msra.mxu0 0
        %1701 = vmatprep.subr.bf16.mxu0 0
        %1702 = vmatpush1.bf16.msra.mxu0 0
        %1703 = vmatprep.subr.bf16.mxu0 0
        %1704 = vmatpush1.bf16.msra.mxu0 0
        %1705 = vmatprep.subr.bf16.mxu0 0
        %1706 = vmatpush1.bf16.msra.mxu0 0
        %1707 = vmatprep.subr.bf16.mxu0 0
        %1708 = vmatpush1.bf16.msra.mxu0 0
        %1709 = vmatprep.subr.bf16.mxu0 0
        %1710 = vmatpush1.bf16.msra.mxu0 0
        %1711 = vmatprep.mubr.bf16.mxu0 0
        %1712 = vmatmul.mubr.bf16.gmra.mrb[0].mxu0 %v1673
        %v1713 = vpop.f32.mrb[0].mxu0
        %v1714 = vadd.f32 0.0, %v1713
        %v1715 = vpop.f32.mrb[0].mxu0
        %v1716 = vpop.f32.mrb[0].mxu0
        %v1717 = vadd.f32 0.0, %v1716
        %v1718 = vpop.f32.mrb[0].mxu0
        %1719 = vdwg.mxu0
        %v1721 = vsel %vm1229, %v1445, 0
        %v1724 = vsel %vm1675, %v1446, 0
        %1726 = vmatprep.subr.bf16.mxu0 0
        %1727 = vmatpush1.bf16.msra.mxu0 %v1724
        %1728 = vmatprep.subr.bf16.mxu0 0
        %1729 = vmatpush1.bf16.msra.mxu0 0
        %1730 = vmatprep.subr.bf16.mxu0 0
        %1731 = vmatpush1.bf16.msra.mxu0 0
        %1732 = vmatprep.subr.bf16.mxu0 0
        %1733 = vmatpush1.bf16.msra.mxu0 0
        %1734 = vmatprep.subr.bf16.mxu0 0
        %1735 = vmatpush1.bf16.msra.mxu0 0
        %1736 = vmatprep.subr.bf16.mxu0 0
        %1737 = vmatpush1.bf16.msra.mxu0 0
        %1738 = vmatprep.subr.bf16.mxu0 0
        %1739 = vmatpush1.bf16.msra.mxu0 0
        %1740 = vmatprep.subr.bf16.mxu0 0
        %1741 = vmatpush1.bf16.msra.mxu0 0
        %1742 = vmatprep.subr.bf16.mxu0 0
        %1743 = vmatpush1.bf16.msra.mxu0 0
        %1744 = vmatprep.subr.bf16.mxu0 0
        %1745 = vmatpush1.bf16.msra.mxu0 0
        %1746 = vmatprep.subr.bf16.mxu0 0
        %1747 = vmatpush1.bf16.msra.mxu0 0
        %1748 = vmatprep.subr.bf16.mxu0 0
        %1749 = vmatpush1.bf16.msra.mxu0 0
        %1750 = vmatprep.subr.bf16.mxu0 0
        %1751 = vmatpush1.bf16.msra.mxu0 0
        %1752 = vmatprep.subr.bf16.mxu0 0
        %1753 = vmatpush1.bf16.msra.mxu0 0
        %1754 = vmatprep.subr.bf16.mxu0 0
        %1755 = vmatpush1.bf16.msra.mxu0 0
        %1756 = vmatprep.subr.bf16.mxu0 0
        %1757 = vmatpush1.bf16.msra.mxu0 0
        %1758 = vmatprep.mubr.bf16.mxu0 0
        %1759 = vmatmul.mubr.bf16.gmra.mrb[0].mxu0 %v1721
        %v1760 = vpop.f32.mrb[0].mxu0
        %v1761 = vadd.f32 %v1714, %v1760
        %v1762 = vpop.f32.mrb[0].mxu0
        %v1763 = vpop.f32.mrb[0].mxu0
        %v1764 = vadd.f32 %v1717, %v1763
        %v1765 = vpop.f32.mrb[0].mxu0
        %1766 = vdwg.mxu0
        %1767 = vrot.lane.b32.xlu0 %v1225, 112
        %v1768 = vpop.permute.xlu0 %1767
        %1769 = vrot.lane.b32.xlu0 %v1227, 112
        %v1770 = vpop.permute.xlu0 %1769
        %v1772 = vsel %vm1229, %v1768, 0
        %v1775 = vsel %vm1229, %v1770, 0
        %1777 = vmatprep.subr.bf16.mxu0 0
        %1778 = vmatpush1.bf16.xpose.msra.mxu0 %v1775
        %1779 = vmatprep.subr.bf16.mxu0 0
        %1780 = vmatpush1.bf16.xpose.msra.mxu0 0
        %1781 = vmatprep.subr.bf16.mxu0 0
        %1782 = vmatpush1.bf16.xpose.msra.mxu0 0
        %1783 = vmatprep.subr.bf16.mxu0 0
        %1784 = vmatpush1.bf16.xpose.msra.mxu0 0
        %1785 = vmatprep.subr.bf16.mxu0 0
        %1786 = vmatpush1.bf16.xpose.msra.mxu0 0
        %1787 = vmatprep.subr.bf16.mxu0 0
        %1788 = vmatpush1.bf16.xpose.msra.mxu0 0
        %1789 = vmatprep.subr.bf16.mxu0 0
        %1790 = vmatpush1.bf16.xpose.msra.mxu0 0
        %1791 = vmatprep.subr.bf16.mxu0 0
        %1792 = vmatpush1.bf16.xpose.msra.mxu0 0
        %1793 = vmatprep.subr.bf16.mxu0 0
        %1794 = vmatpush1.bf16.xpose.msra.mxu0 0
        %1795 = vmatprep.subr.bf16.mxu0 0
        %1796 = vmatpush1.bf16.xpose.msra.mxu0 0
        %1797 = vmatprep.subr.bf16.mxu0 0
        %1798 = vmatpush1.bf16.xpose.msra.mxu0 0
        %1799 = vmatprep.subr.bf16.mxu0 0
        %1800 = vmatpush1.bf16.xpose.msra.mxu0 0
        %1801 = vmatprep.subr.bf16.mxu0 0
        %1802 = vmatpush1.bf16.xpose.msra.mxu0 0
        %1803 = vmatprep.subr.bf16.mxu0 0
        %1804 = vmatpush1.bf16.xpose.msra.mxu0 0
        %1805 = vmatprep.subr.bf16.mxu0 0
        %1806 = vmatpush1.bf16.xpose.msra.mxu0 0
        %1807 = vmatprep.subr.bf16.mxu0 0
        %1808 = vmatpush1.bf16.xpose.msra.mxu0 0
        %1809 = vmatprep.mubr.bf16.mxu0 0
        %1810 = vmatmul.mubr.bf16.gmra.mrb[0].mxu0 %v1772
        %v1811 = vpop.f32.mrb[0].mxu0
        %v1812 = vadd.f32 0.0, %v1811
        %v1813 = vpop.f32.mrb[0].mxu0
        %v1814 = vpop.f32.mrb[0].mxu0
        %v1815 = vpop.f32.mrb[0].mxu0
        %1816 = vdwg.mxu0
        %1817 = vrot.lane.b32.xlu0 %v1226, 112
        %v1818 = vpop.permute.xlu0 %1817
        %1819 = vrot.lane.b32.xlu0 %v1228, 112
        %v1820 = vpop.permute.xlu0 %1819
        %v1822 = vsel %vm1229, %v1818, 0
        %v1825 = vsel %vm1229, %v1820, 0
        %1827 = vmatprep.subr.bf16.mxu0 0
        %1828 = vmatpush1.bf16.xpose.msra.mxu0 %v1825
        %1829 = vmatprep.subr.bf16.mxu0 0
        %1830 = vmatpush1.bf16.xpose.msra.mxu0 0
        %1831 = vmatprep.subr.bf16.mxu0 0
        %1832 = vmatpush1.bf16.xpose.msra.mxu0 0
        %1833 = vmatprep.subr.bf16.mxu0 0
        %1834 = vmatpush1.bf16.xpose.msra.mxu0 0
        %1835 = vmatprep.subr.bf16.mxu0 0
        %1836 = vmatpush1.bf16.xpose.msra.mxu0 0
        %1837 = vmatprep.subr.bf16.mxu0 0
        %1838 = vmatpush1.bf16.xpose.msra.mxu0 0
        %1839 = vmatprep.subr.bf16.mxu0 0
        %1840 = vmatpush1.bf16.xpose.msra.mxu0 0
        %1841 = vmatprep.subr.bf16.mxu0 0
        %1842 = vmatpush1.bf16.xpose.msra.mxu0 0
        %1843 = vmatprep.subr.bf16.mxu0 0
        %1844 = vmatpush1.bf16.xpose.msra.mxu0 0
        %1845 = vmatprep.subr.bf16.mxu0 0
        %1846 = vmatpush1.bf16.xpose.msra.mxu0 0
        %1847 = vmatprep.subr.bf16.mxu0 0
        %1848 = vmatpush1.bf16.xpose.msra.mxu0 0
        %1849 = vmatprep.subr.bf16.mxu0 0
        %1850 = vmatpush1.bf16.xpose.msra.mxu0 0
        %1851 = vmatprep.subr.bf16.mxu0 0
        %1852 = vmatpush1.bf16.xpose.msra.mxu0 0
        %1853 = vmatprep.subr.bf16.mxu0 0
        %1854 = vmatpush1.bf16.xpose.msra.mxu0 0
        %1855 = vmatprep.subr.bf16.mxu0 0
        %1856 = vmatpush1.bf16.xpose.msra.mxu0 0
        %1857 = vmatprep.subr.bf16.mxu0 0
        %1858 = vmatpush1.bf16.xpose.msra.mxu0 0
        %1859 = vmatprep.mubr.bf16.mxu0 0
        %1860 = vmatmul.mubr.bf16.gmra.mrb[0].mxu0 %v1822
        %v1861 = vpop.f32.mrb[0].mxu0
        %v1862 = vadd.f32 0.0, %v1861
        %v1863 = vpop.f32.mrb[0].mxu0
        %v1864 = vpop.f32.mrb[0].mxu0
        %v1865 = vpop.f32.mrb[0].mxu0
        %1866 = vdwg.mxu0
        %v1867 = vmul.f32 %v1812, 0.35355338
        %v1868 = vmul.f32 %v1862, 0.35355338
        %v1869 = vadd.f32 %v1867, %v1069
        %v1870 = vadd.f32 %v1868, %v1069
        %v1871 = vsel %vm1326, %v1869, -inf
        %1872 = vmax.xlane.f32.xlu0 %v1871
        %v1873 = vpop.xlane.xlu0 %1872
        %v1874 = vsel %vm1326, %v1870, -inf
        %1875 = vmax.xlane.f32.xlu0 %v1874
        %v1876 = vpop.xlane.xlu0 %1875
        %v1877 = vsub.f32 %v1869, %v1873
        %v1878 = vsub.f32 %v1870, %v1876
        %v1879 = vmul.f32 %v1877, 1.442695
        %v1880 = vpow.pop %v1879
        %v1881 = vmul.f32 %v1878, 1.442695
        %v1882 = vpow.pop %v1881
        %v1883 = vsel %vm1326, %v1880, 0.0
        %1884 = vadd.xlane.f32.xlu0 %v1883
        %v1885 = vpop.xlane.xlu0 %1884
        %v1886 = vsel %vm1326, %v1882, 0.0
        %1887 = vadd.xlane.f32.xlu0 %v1886
        %v1888 = vpop.xlane.xlu0 %1887
        %v1889 = vrcp.pop %v1885
        %v1890 = vrcp.pop %v1888
        %v1891 = vmul.f32 %v1880, %v1889
        %v1892 = vmul.f32 %v1882, %v1890
        %v1893 = vpack.c.bf16 %v1891, %v1891
        %v1894 = vpack.c.bf16 %v1892, %v1892
        %1895 = vrot.lane.b32.xlu0 %v1227, 80
        %v1896 = vpop.permute.xlu0 %1895
        %v1899 = vsel %vm1326, %v1893, 0
        %1901 = vmatprep.subr.bf16.mxu0 0
        %1902 = vmatpush1.bf16.msra.mxu0 %v1896
        %1903 = vmatprep.subr.bf16.mxu0 0
        %1904 = vmatpush1.bf16.msra.mxu0 0
        %1905 = vmatprep.subr.bf16.mxu0 0
        %1906 = vmatpush1.bf16.msra.mxu0 0
        %1907 = vmatprep.subr.bf16.mxu0 0
        %1908 = vmatpush1.bf16.msra.mxu0 0
        %1909 = vmatprep.subr.bf16.mxu0 0
        %1910 = vmatpush1.bf16.msra.mxu0 0
        %1911 = vmatprep.subr.bf16.mxu0 0
        %1912 = vmatpush1.bf16.msra.mxu0 0
        %1913 = vmatprep.subr.bf16.mxu0 0
        %1914 = vmatpush1.bf16.msra.mxu0 0
        %1915 = vmatprep.subr.bf16.mxu0 0
        %1916 = vmatpush1.bf16.msra.mxu0 0
        %1917 = vmatprep.subr.bf16.mxu0 0
        %1918 = vmatpush1.bf16.msra.mxu0 0
        %1919 = vmatprep.subr.bf16.mxu0 0
        %1920 = vmatpush1.bf16.msra.mxu0 0
        %1921 = vmatprep.subr.bf16.mxu0 0
        %1922 = vmatpush1.bf16.msra.mxu0 0
        %1923 = vmatprep.subr.bf16.mxu0 0
        %1924 = vmatpush1.bf16.msra.mxu0 0
        %1925 = vmatprep.subr.bf16.mxu0 0
        %1926 = vmatpush1.bf16.msra.mxu0 0
        %1927 = vmatprep.subr.bf16.mxu0 0
        %1928 = vmatpush1.bf16.msra.mxu0 0
        %1929 = vmatprep.subr.bf16.mxu0 0
        %1930 = vmatpush1.bf16.msra.mxu0 0
        %1931 = vmatprep.subr.bf16.mxu0 0
        %1932 = vmatpush1.bf16.msra.mxu0 0
        %1933 = vmatprep.mubr.bf16.mxu0 0
        %1934 = vmatmul.mubr.bf16.gmra.mrb[0].mxu0 %v1899
        %v1935 = vpop.f32.mrb[0].mxu0
        %v1936 = vadd.f32 0.0, %v1935
        %v1937 = vpop.f32.mrb[0].mxu0
        %v1938 = vpop.f32.mrb[0].mxu0
        %v1939 = vpop.f32.mrb[0].mxu0
        %1940 = vdwg.mxu0
        %1941 = vrot.lane.b32.xlu0 %v1228, 80
        %v1942 = vpop.permute.xlu0 %1941
        %v1945 = vsel %vm1326, %v1894, 0
        %1947 = vmatprep.subr.bf16.mxu0 0
        %1948 = vmatpush1.bf16.msra.mxu0 %v1942
        %1949 = vmatprep.subr.bf16.mxu0 0
        %1950 = vmatpush1.bf16.msra.mxu0 0
        %1951 = vmatprep.subr.bf16.mxu0 0
        %1952 = vmatpush1.bf16.msra.mxu0 0
        %1953 = vmatprep.subr.bf16.mxu0 0
        %1954 = vmatpush1.bf16.msra.mxu0 0
        %1955 = vmatprep.subr.bf16.mxu0 0
        %1956 = vmatpush1.bf16.msra.mxu0 0
        %1957 = vmatprep.subr.bf16.mxu0 0
        %1958 = vmatpush1.bf16.msra.mxu0 0
        %1959 = vmatprep.subr.bf16.mxu0 0
        %1960 = vmatpush1.bf16.msra.mxu0 0
        %1961 = vmatprep.subr.bf16.mxu0 0
        %1962 = vmatpush1.bf16.msra.mxu0 0
        %1963 = vmatprep.subr.bf16.mxu0 0
        %1964 = vmatpush1.bf16.msra.mxu0 0
        %1965 = vmatprep.subr.bf16.mxu0 0
        %1966 = vmatpush1.bf16.msra.mxu0 0
        %1967 = vmatprep.subr.bf16.mxu0 0
        %1968 = vmatpush1.bf16.msra.mxu0 0
        %1969 = vmatprep.subr.bf16.mxu0 0
        %1970 = vmatpush1.bf16.msra.mxu0 0
        %1971 = vmatprep.subr.bf16.mxu0 0
        %1972 = vmatpush1.bf16.msra.mxu0 0
        %1973 = vmatprep.subr.bf16.mxu0 0
        %1974 = vmatpush1.bf16.msra.mxu0 0
        %1975 = vmatprep.subr.bf16.mxu0 0
        %1976 = vmatpush1.bf16.msra.mxu0 0
        %1977 = vmatprep.subr.bf16.mxu0 0
        %1978 = vmatpush1.bf16.msra.mxu0 0
        %1979 = vmatprep.mubr.bf16.mxu0 0
        %1980 = vmatmul.mubr.bf16.gmra.mrb[0].mxu0 %v1945
        %v1981 = vpop.f32.mrb[0].mxu0
        %v1982 = vadd.f32 0.0, %v1981
        %v1983 = vpop.f32.mrb[0].mxu0
        %v1984 = vpop.f32.mrb[0].mxu0
        %v1985 = vpop.f32.mrb[0].mxu0
        %1986 = vdwg.mxu0
        %v1987 = vpack.c.bf16 %v1982, %v1936
        %s1988 = scalar_lea.vmem %s970, 8
        %v1989 = vld [vmem:[%s1988] sm:$0xf]
        %v1991 = vsel %vm1229, %v1987, 0
        %v1994 = vsel %vm1675, %v1989, 0
        %1996 = vmatprep.subr.bf16.mxu0 0
        %1997 = vmatpush1.bf16.msra.mxu0 %v1994
        %1998 = vmatprep.subr.bf16.mxu0 0
        %1999 = vmatpush1.bf16.msra.mxu0 0
        %2000 = vmatprep.subr.bf16.mxu0 0
        %2001 = vmatpush1.bf16.msra.mxu0 0
        %2002 = vmatprep.subr.bf16.mxu0 0
        %2003 = vmatpush1.bf16.msra.mxu0 0
        %2004 = vmatprep.subr.bf16.mxu0 0
        %2005 = vmatpush1.bf16.msra.mxu0 0
        %2006 = vmatprep.subr.bf16.mxu0 0
        %2007 = vmatpush1.bf16.msra.mxu0 0
        %2008 = vmatprep.subr.bf16.mxu0 0
        %2009 = vmatpush1.bf16.msra.mxu0 0
        %2010 = vmatprep.subr.bf16.mxu0 0
        %2011 = vmatpush1.bf16.msra.mxu0 0
        %2012 = vmatprep.subr.bf16.mxu0 0
        %2013 = vmatpush1.bf16.msra.mxu0 0
        %2014 = vmatprep.subr.bf16.mxu0 0
        %2015 = vmatpush1.bf16.msra.mxu0 0
        %2016 = vmatprep.subr.bf16.mxu0 0
        %2017 = vmatpush1.bf16.msra.mxu0 0
        %2018 = vmatprep.subr.bf16.mxu0 0
        %2019 = vmatpush1.bf16.msra.mxu0 0
        %2020 = vmatprep.subr.bf16.mxu0 0
        %2021 = vmatpush1.bf16.msra.mxu0 0
        %2022 = vmatprep.subr.bf16.mxu0 0
        %2023 = vmatpush1.bf16.msra.mxu0 0
        %2024 = vmatprep.subr.bf16.mxu0 0
        %2025 = vmatpush1.bf16.msra.mxu0 0
        %2026 = vmatprep.subr.bf16.mxu0 0
        %2027 = vmatpush1.bf16.msra.mxu0 0
        %2028 = vmatprep.mubr.bf16.mxu0 0
        %2029 = vmatmul.mubr.bf16.gmra.mrb[0].mxu0 %v1991
        %v2030 = vpop.f32.mrb[0].mxu0
        %v2031 = vadd.f32 0.0, %v2030
        %v2032 = vpop.f32.mrb[0].mxu0
        %v2033 = vpop.f32.mrb[0].mxu0
        %v2034 = vadd.f32 0.0, %v2033
        %v2035 = vpop.f32.mrb[0].mxu0
        %2036 = vdwg.mxu0
        %v2037 = vadd.f32 %v1761, %v2031
        %v2038 = vadd.f32 %v1764, %v2034
        %2039 = vrot.lane.b32.xlu0 %v1225, 104
        %v2040 = vpop.permute.xlu0 %2039
        %2041 = vrot.lane.b32.xlu0 %v1227, 104
        %v2042 = vpop.permute.xlu0 %2041
        %v2044 = vsel %vm1229, %v2040, 0
        %v2047 = vsel %vm1229, %v2042, 0
        %2049 = vmatprep.subr.bf16.mxu0 0
        %2050 = vmatpush1.bf16.xpose.msra.mxu0 %v2047
        %2051 = vmatprep.subr.bf16.mxu0 0
        %2052 = vmatpush1.bf16.xpose.msra.mxu0 0
        %2053 = vmatprep.subr.bf16.mxu0 0
        %2054 = vmatpush1.bf16.xpose.msra.mxu0 0
        %2055 = vmatprep.subr.bf16.mxu0 0
        %2056 = vmatpush1.bf16.xpose.msra.mxu0 0
        %2057 = vmatprep.subr.bf16.mxu0 0
        %2058 = vmatpush1.bf16.xpose.msra.mxu0 0
        %2059 = vmatprep.subr.bf16.mxu0 0
        %2060 = vmatpush1.bf16.xpose.msra.mxu0 0
        %2061 = vmatprep.subr.bf16.mxu0 0
        %2062 = vmatpush1.bf16.xpose.msra.mxu0 0
        %2063 = vmatprep.subr.bf16.mxu0 0
        %2064 = vmatpush1.bf16.xpose.msra.mxu0 0
        %2065 = vmatprep.subr.bf16.mxu0 0
        %2066 = vmatpush1.bf16.xpose.msra.mxu0 0
        %2067 = vmatprep.subr.bf16.mxu0 0
        %2068 = vmatpush1.bf16.xpose.msra.mxu0 0
        %2069 = vmatprep.subr.bf16.mxu0 0
        %2070 = vmatpush1.bf16.xpose.msra.mxu0 0
        %2071 = vmatprep.subr.bf16.mxu0 0
        %2072 = vmatpush1.bf16.xpose.msra.mxu0 0
        %2073 = vmatprep.subr.bf16.mxu0 0
        %2074 = vmatpush1.bf16.xpose.msra.mxu0 0
        %2075 = vmatprep.subr.bf16.mxu0 0
        %2076 = vmatpush1.bf16.xpose.msra.mxu0 0
        %2077 = vmatprep.subr.bf16.mxu0 0
        %2078 = vmatpush1.bf16.xpose.msra.mxu0 0
        %2079 = vmatprep.subr.bf16.mxu0 0
        %2080 = vmatpush1.bf16.xpose.msra.mxu0 0
        %2081 = vmatprep.mubr.bf16.mxu0 0
        %2082 = vmatmul.mubr.bf16.gmra.mrb[0].mxu0 %v2044
        %v2083 = vpop.f32.mrb[0].mxu0
        %v2084 = vadd.f32 0.0, %v2083
        %v2085 = vpop.f32.mrb[0].mxu0
        %v2086 = vpop.f32.mrb[0].mxu0
        %v2087 = vpop.f32.mrb[0].mxu0
        %2088 = vdwg.mxu0
        %2089 = vrot.lane.b32.xlu0 %v1226, 104
        %v2090 = vpop.permute.xlu0 %2089
        %2091 = vrot.lane.b32.xlu0 %v1228, 104
        %v2092 = vpop.permute.xlu0 %2091
        %v2094 = vsel %vm1229, %v2090, 0
        %v2097 = vsel %vm1229, %v2092, 0
        %2099 = vmatprep.subr.bf16.mxu0 0
        %2100 = vmatpush1.bf16.xpose.msra.mxu0 %v2097
        %2101 = vmatprep.subr.bf16.mxu0 0
        %2102 = vmatpush1.bf16.xpose.msra.mxu0 0
        %2103 = vmatprep.subr.bf16.mxu0 0
        %2104 = vmatpush1.bf16.xpose.msra.mxu0 0
        %2105 = vmatprep.subr.bf16.mxu0 0
        %2106 = vmatpush1.bf16.xpose.msra.mxu0 0
        %2107 = vmatprep.subr.bf16.mxu0 0
        %2108 = vmatpush1.bf16.xpose.msra.mxu0 0
        %2109 = vmatprep.subr.bf16.mxu0 0
        %2110 = vmatpush1.bf16.xpose.msra.mxu0 0
        %2111 = vmatprep.subr.bf16.mxu0 0
        %2112 = vmatpush1.bf16.xpose.msra.mxu0 0
        %2113 = vmatprep.subr.bf16.mxu0 0
        %2114 = vmatpush1.bf16.xpose.msra.mxu0 0
        %2115 = vmatprep.subr.bf16.mxu0 0
        %2116 = vmatpush1.bf16.xpose.msra.mxu0 0
        %2117 = vmatprep.subr.bf16.mxu0 0
        %2118 = vmatpush1.bf16.xpose.msra.mxu0 0
        %2119 = vmatprep.subr.bf16.mxu0 0
        %2120 = vmatpush1.bf16.xpose.msra.mxu0 0
        %2121 = vmatprep.subr.bf16.mxu0 0
        %2122 = vmatpush1.bf16.xpose.msra.mxu0 0
        %2123 = vmatprep.subr.bf16.mxu0 0
        %2124 = vmatpush1.bf16.xpose.msra.mxu0 0
        %2125 = vmatprep.subr.bf16.mxu0 0
        %2126 = vmatpush1.bf16.xpose.msra.mxu0 0
        %2127 = vmatprep.subr.bf16.mxu0 0
        %2128 = vmatpush1.bf16.xpose.msra.mxu0 0
        %2129 = vmatprep.subr.bf16.mxu0 0
        %2130 = vmatpush1.bf16.xpose.msra.mxu0 0
        %2131 = vmatprep.mubr.bf16.mxu0 0
        %2132 = vmatmul.mubr.bf16.gmra.mrb[0].mxu0 %v2094
        %v2133 = vpop.f32.mrb[0].mxu0
        %v2134 = vadd.f32 0.0, %v2133
        %v2135 = vpop.f32.mrb[0].mxu0
        %v2136 = vpop.f32.mrb[0].mxu0
        %v2137 = vpop.f32.mrb[0].mxu0
        %2138 = vdwg.mxu0
        %v2139 = vmul.f32 %v2084, 0.35355338
        %v2140 = vmul.f32 %v2134, 0.35355338
        %v2141 = vadd.f32 %v2139, %v1069
        %v2142 = vadd.f32 %v2140, %v1069
        %v2143 = vsel %vm1326, %v2141, -inf
        %2144 = vmax.xlane.f32.xlu0 %v2143
        %v2145 = vpop.xlane.xlu0 %2144
        %v2146 = vsel %vm1326, %v2142, -inf
        %2147 = vmax.xlane.f32.xlu0 %v2146
        %v2148 = vpop.xlane.xlu0 %2147
        %v2149 = vsub.f32 %v2141, %v2145
        %v2150 = vsub.f32 %v2142, %v2148
        %v2151 = vmul.f32 %v2149, 1.442695
        %v2152 = vpow.pop %v2151
        %v2153 = vmul.f32 %v2150, 1.442695
        %v2154 = vpow.pop %v2153
        %v2155 = vsel %vm1326, %v2152, 0.0
        %2156 = vadd.xlane.f32.xlu0 %v2155
        %v2157 = vpop.xlane.xlu0 %2156
        %v2158 = vsel %vm1326, %v2154, 0.0
        %2159 = vadd.xlane.f32.xlu0 %v2158
        %v2160 = vpop.xlane.xlu0 %2159
        %v2161 = vrcp.pop %v2157
        %v2162 = vrcp.pop %v2160
        %v2163 = vmul.f32 %v2152, %v2161
        %v2164 = vmul.f32 %v2154, %v2162
        %v2165 = vpack.c.bf16 %v2163, %v2163
        %v2166 = vpack.c.bf16 %v2164, %v2164
        %2167 = vrot.lane.b32.xlu0 %v1227, 72
        %v2168 = vpop.permute.xlu0 %2167
        %v2171 = vsel %vm1326, %v2165, 0
        %2173 = vmatprep.subr.bf16.mxu0 0
        %2174 = vmatpush1.bf16.msra.mxu0 %v2168
        %2175 = vmatprep.subr.bf16.mxu0 0
        %2176 = vmatpush1.bf16.msra.mxu0 0
        %2177 = vmatprep.subr.bf16.mxu0 0
        %2178 = vmatpush1.bf16.msra.mxu0 0
        %2179 = vmatprep.subr.bf16.mxu0 0
        %2180 = vmatpush1.bf16.msra.mxu0 0
        %2181 = vmatprep.subr.bf16.mxu0 0
        %2182 = vmatpush1.bf16.msra.mxu0 0
        %2183 = vmatprep.subr.bf16.mxu0 0
        %2184 = vmatpush1.bf16.msra.mxu0 0
        %2185 = vmatprep.subr.bf16.mxu0 0
        %2186 = vmatpush1.bf16.msra.mxu0 0
        %2187 = vmatprep.subr.bf16.mxu0 0
        %2188 = vmatpush1.bf16.msra.mxu0 0
        %2189 = vmatprep.subr.bf16.mxu0 0
        %2190 = vmatpush1.bf16.msra.mxu0 0
        %2191 = vmatprep.subr.bf16.mxu0 0
        %2192 = vmatpush1.bf16.msra.mxu0 0
        %2193 = vmatprep.subr.bf16.mxu0 0
        %2194 = vmatpush1.bf16.msra.mxu0 0
        %2195 = vmatprep.subr.bf16.mxu0 0
        %2196 = vmatpush1.bf16.msra.mxu0 0
        %2197 = vmatprep.subr.bf16.mxu0 0
        %2198 = vmatpush1.bf16.msra.mxu0 0
        %2199 = vmatprep.subr.bf16.mxu0 0
        %2200 = vmatpush1.bf16.msra.mxu0 0
        %2201 = vmatprep.subr.bf16.mxu0 0
        %2202 = vmatpush1.bf16.msra.mxu0 0
        %2203 = vmatprep.subr.bf16.mxu0 0
        %2204 = vmatpush1.bf16.msra.mxu0 0
        %2205 = vmatprep.mubr.bf16.mxu0 0
        %2206 = vmatmul.mubr.bf16.gmra.mrb[0].mxu0 %v2171
        %v2207 = vpop.f32.mrb[0].mxu0
        %v2208 = vadd.f32 0.0, %v2207
        %v2209 = vpop.f32.mrb[0].mxu0
        %v2210 = vpop.f32.mrb[0].mxu0
        %v2211 = vpop.f32.mrb[0].mxu0
        %2212 = vdwg.mxu0
        %2213 = vrot.lane.b32.xlu0 %v1228, 72
        %v2214 = vpop.permute.xlu0 %2213
        %v2217 = vsel %vm1326, %v2166, 0
        %2219 = vmatprep.subr.bf16.mxu0 0
        %2220 = vmatpush1.bf16.msra.mxu0 %v2214
        %2221 = vmatprep.subr.bf16.mxu0 0
        %2222 = vmatpush1.bf16.msra.mxu0 0
        %2223 = vmatprep.subr.bf16.mxu0 0
        %2224 = vmatpush1.bf16.msra.mxu0 0
        %2225 = vmatprep.subr.bf16.mxu0 0
        %2226 = vmatpush1.bf16.msra.mxu0 0
        %2227 = vmatprep.subr.bf16.mxu0 0
        %2228 = vmatpush1.bf16.msra.mxu0 0
        %2229 = vmatprep.subr.bf16.mxu0 0
        %2230 = vmatpush1.bf16.msra.mxu0 0
        %2231 = vmatprep.subr.bf16.mxu0 0
        %2232 = vmatpush1.bf16.msra.mxu0 0
        %2233 = vmatprep.subr.bf16.mxu0 0
        %2234 = vmatpush1.bf16.msra.mxu0 0
        %2235 = vmatprep.subr.bf16.mxu0 0
        %2236 = vmatpush1.bf16.msra.mxu0 0
        %2237 = vmatprep.subr.bf16.mxu0 0
        %2238 = vmatpush1.bf16.msra.mxu0 0
        %2239 = vmatprep.subr.bf16.mxu0 0
        %2240 = vmatpush1.bf16.msra.mxu0 0
        %2241 = vmatprep.subr.bf16.mxu0 0
        %2242 = vmatpush1.bf16.msra.mxu0 0
        %2243 = vmatprep.subr.bf16.mxu0 0
        %2244 = vmatpush1.bf16.msra.mxu0 0
        %2245 = vmatprep.subr.bf16.mxu0 0
        %2246 = vmatpush1.bf16.msra.mxu0 0
        %2247 = vmatprep.subr.bf16.mxu0 0
        %2248 = vmatpush1.bf16.msra.mxu0 0
        %2249 = vmatprep.subr.bf16.mxu0 0
        %2250 = vmatpush1.bf16.msra.mxu0 0
        %2251 = vmatprep.mubr.bf16.mxu0 0
        %2252 = vmatmul.mubr.bf16.gmra.mrb[0].mxu0 %v2217
        %v2253 = vpop.f32.mrb[0].mxu0
        %v2254 = vadd.f32 0.0, %v2253
        %v2255 = vpop.f32.mrb[0].mxu0
        %v2256 = vpop.f32.mrb[0].mxu0
        %v2257 = vpop.f32.mrb[0].mxu0
        %2258 = vdwg.mxu0
        %v2259 = vpack.c.bf16 %v2254, %v2208
        %s2260 = scalar_lea.vmem %s970, 12
        %v2261 = vld [vmem:[%s2260] sm:$0xf]
        %v2263 = vsel %vm1229, %v2259, 0
        %v2266 = vsel %vm1675, %v2261, 0
        %2268 = vmatprep.subr.bf16.mxu0 0
        %2269 = vmatpush1.bf16.msra.mxu0 %v2266
        %2270 = vmatprep.subr.bf16.mxu0 0
        %2271 = vmatpush1.bf16.msra.mxu0 0
        %2272 = vmatprep.subr.bf16.mxu0 0
        %2273 = vmatpush1.bf16.msra.mxu0 0
        %2274 = vmatprep.subr.bf16.mxu0 0
        %2275 = vmatpush1.bf16.msra.mxu0 0
        %2276 = vmatprep.subr.bf16.mxu0 0
        %2277 = vmatpush1.bf16.msra.mxu0 0
        %2278 = vmatprep.subr.bf16.mxu0 0
        %2279 = vmatpush1.bf16.msra.mxu0 0
        %2280 = vmatprep.subr.bf16.mxu0 0
        %2281 = vmatpush1.bf16.msra.mxu0 0
        %2282 = vmatprep.subr.bf16.mxu0 0
        %2283 = vmatpush1.bf16.msra.mxu0 0
        %2284 = vmatprep.subr.bf16.mxu0 0
        %2285 = vmatpush1.bf16.msra.mxu0 0
        %2286 = vmatprep.subr.bf16.mxu0 0
        %2287 = vmatpush1.bf16.msra.mxu0 0
        %2288 = vmatprep.subr.bf16.mxu0 0
        %2289 = vmatpush1.bf16.msra.mxu0 0
        %2290 = vmatprep.subr.bf16.mxu0 0
        %2291 = vmatpush1.bf16.msra.mxu0 0
        %2292 = vmatprep.subr.bf16.mxu0 0
        %2293 = vmatpush1.bf16.msra.mxu0 0
        %2294 = vmatprep.subr.bf16.mxu0 0
        %2295 = vmatpush1.bf16.msra.mxu0 0
        %2296 = vmatprep.subr.bf16.mxu0 0
        %2297 = vmatpush1.bf16.msra.mxu0 0
        %2298 = vmatprep.subr.bf16.mxu0 0
        %2299 = vmatpush1.bf16.msra.mxu0 0
        %2300 = vmatprep.mubr.bf16.mxu0 0
        %2301 = vmatmul.mubr.bf16.gmra.mrb[0].mxu0 %v2263
        %v2302 = vpop.f32.mrb[0].mxu0
        %v2303 = vadd.f32 0.0, %v2302
        %v2304 = vpop.f32.mrb[0].mxu0
        %v2305 = vpop.f32.mrb[0].mxu0
        %v2306 = vadd.f32 0.0, %v2305
        %v2307 = vpop.f32.mrb[0].mxu0
        %2308 = vdwg.mxu0
        %v2309 = vadd.f32 %v2037, %v2303
        %v2310 = vadd.f32 %v2038, %v2306
        %v2311 = vld [vmem:[%s973] sm:$0x1]
        %v2313 = vlaneseq
        %v2314 = vshrl.u32 %v2313, 7
        %v2315 = vsub.s32 0, %v2314
        %v2316 = vrot.slane %v2311, %v2315
        %v2318 = vadd.f32 %v2309, %v2316
        %v2319 = vadd.f32 %v2310, %v2316
        %v2320 = vadd.f32 %v1055, %v2318
        %v2321 = vadd.f32 %v1056, %v2319
        %v2322 = vld [vmem:[%s976] sm:$0x1]
        %v2323 = vld [vmem:[%s822] sm:$0x1]
        %v2324 = vsel %vm1094, %v2320, 0.0
        %2325 = vadd.xlane.f32.xlu0 %v2324
        %v2326 = vpop.xlane.xlu0 %2325
        %v2327 = vsel %vm1094, %v2321, 0.0
        %2328 = vadd.xlane.f32.xlu0 %v2327
        %v2329 = vpop.xlane.xlu0 %2328
        %v2330 = vrcp.pop 32.0
        %v2331 = vmul.f32 %v2326, %v2330
        %v2332 = vmul.f32 %v2329, %v2330
        %v2333 = vsub.f32 %v2320, %v2331
        %v2334 = vsub.f32 %v2321, %v2332
        %v2335 = vmul.f32 %v2333, %v2333
        %v2336 = vmul.f32 %v2334, %v2334
        %v2337 = vsel %vm1094, %v2335, 0.0
        %2338 = vadd.xlane.f32.xlu0 %v2337
        %v2339 = vpop.xlane.xlu0 %2338
        %v2340 = vsel %vm1094, %v2336, 0.0
        %2341 = vadd.xlane.f32.xlu0 %v2340
        %v2342 = vpop.xlane.xlu0 %2341
        %v2343 = vmul.f32 %v2339, %v2330
        %v2344 = vmul.f32 %v2342, %v2330
        %v2345 = vadd.f32 %v2343, 1e-05
        %v2346 = vadd.f32 %v2344, 1e-05
        %v2347 = vrsqrt.pop %v2345
        %v2348 = vrsqrt.pop %v2346
        %v2349 = vmul.f32 %v2333, %v2347
        %v2350 = vmul.f32 %v2334, %v2348
        %v2352 = vlaneseq
        %v2353 = vshrl.u32 %v2352, 7
        %v2354 = vsub.s32 0, %v2353
        %v2355 = vrot.slane %v2322, %v2354
        %v2357 = vmul.f32 %v2349, %v2355
        %v2358 = vmul.f32 %v2350, %v2355
        %v2360 = vlaneseq
        %v2361 = vshrl.u32 %v2360, 7
        %v2362 = vsub.s32 0, %v2361
        %v2363 = vrot.slane %v2323, %v2362
        %v2365 = vadd.f32 %v2357, %v2363
        %v2366 = vadd.f32 %v2358, %v2363
        %v2367 = vpack.c.bf16 %v2366, %v2365
        %v2368 = vld [vmem:[%s981] sm:$0xf]
        %v2369 = vld [vmem:[%s981 + $0x4] sm:$0xf]
        %v2370 = vld [vmem:[%s981 + $0x8] sm:$0xf]
        %v2371 = vld [vmem:[%s981 + $0xc] sm:$0xf]
        %v2372 = vld [vmem:[%s830] sm:$0x1]
        %v2374 = vlaneseq
        %v2375 = vshrl.u32 %v2374, 7
        %v2376 = vsub.s32 0, %v2375
        %v2377 = vrot.slane %v2372, %v2376
        %v2383 = vunpack.c.l.b16 %v2368
        %v2384 = vunpack.c.l.b16 %v2369
        %v2385 = vunpack.c.l.b16 %v2370
        %v2386 = vunpack.c.l.b16 %v2371
        %v2387 = vpack.c.b16 %v2384, %v2383
        %v2388 = vpack.c.b16 %v2386, %v2385
        %v2392 = vsel %vm1094, %v2367, 0
        %2394 = vmatprep.subr.bf16.mxu0 0
        %2395 = vmatpush1.bf16.msra.mxu0 %v2387
        %2396 = vmatprep.subr.bf16.mxu0 0
        %2397 = vmatpush1.bf16.msra.mxu0 %v2388
        %2398 = vmatprep.subr.bf16.mxu0 0
        %2399 = vmatpush1.bf16.msra.mxu0 0
        %2400 = vmatprep.subr.bf16.mxu0 0
        %2401 = vmatpush1.bf16.msra.mxu0 0
        %2402 = vmatprep.subr.bf16.mxu0 0
        %2403 = vmatpush1.bf16.msra.mxu0 0
        %2404 = vmatprep.subr.bf16.mxu0 0
        %2405 = vmatpush1.bf16.msra.mxu0 0
        %2406 = vmatprep.subr.bf16.mxu0 0
        %2407 = vmatpush1.bf16.msra.mxu0 0
        %2408 = vmatprep.subr.bf16.mxu0 0
        %2409 = vmatpush1.bf16.msra.mxu0 0
        %2410 = vmatprep.subr.bf16.mxu0 0
        %2411 = vmatpush1.bf16.msra.mxu0 0
        %2412 = vmatprep.subr.bf16.mxu0 0
        %2413 = vmatpush1.bf16.msra.mxu0 0
        %2414 = vmatprep.subr.bf16.mxu0 0
        %2415 = vmatpush1.bf16.msra.mxu0 0
        %2416 = vmatprep.subr.bf16.mxu0 0
        %2417 = vmatpush1.bf16.msra.mxu0 0
        %2418 = vmatprep.subr.bf16.mxu0 0
        %2419 = vmatpush1.bf16.msra.mxu0 0
        %2420 = vmatprep.subr.bf16.mxu0 0
        %2421 = vmatpush1.bf16.msra.mxu0 0
        %2422 = vmatprep.subr.bf16.mxu0 0
        %2423 = vmatpush1.bf16.msra.mxu0 0
        %2424 = vmatprep.subr.bf16.mxu0 0
        %2425 = vmatpush1.bf16.msra.mxu0 0
        %2426 = vmatprep.mubr.bf16.mxu0 0
        %2427 = vmatmul.mubr.bf16.gmra.mrb[0].mxu0 %v2392
        %v2428 = vpop.f32.mrb[0].mxu0
        %v2429 = vadd.f32 %v2377, %v2428
        %v2430 = vpop.f32.mrb[0].mxu0
        %v2431 = vpop.f32.mrb[0].mxu0
        %v2432 = vadd.f32 %v2377, %v2431
        %v2433 = vpop.f32.mrb[0].mxu0
        %2434 = vdwg.mxu0
        %v2435 = vmul.f32 %v2429, 0.5
        %v2436 = vmul.f32 %v2432, 0.5
        %v2437 = vmul.f32 %v2429, 0.70710677
        %v2438 = vmul.f32 %v2432, 0.70710677
        %vm2439 = vcmp.ge.f32.partialorder %v2437, 0.0
        %vm2440 = vcmp.ge.f32.partialorder %v2438, 0.0
        %v2441 = vsel %vm2439, 1.0, -1.0
        %v2442 = vsel %vm2440, 1.0, -1.0
        %v2443 = vand.u32 2147483647, %v2437
        %v2444 = vand.u32 2147483647, %v2438
        %v2445 = vmul.f32 %v2443, 0.3275911
        %v2446 = vmul.f32 %v2444, 0.3275911
        %v2447 = vadd.f32 %v2445, 1.0
        %v2448 = vadd.f32 %v2446, 1.0
        %v2449 = vrcp.pop %v2447
        %v2450 = vmul.f32 1.0, %v2449
        %v2451 = vrcp.pop %v2448
        %v2452 = vmul.f32 1.0, %v2451
        %v2453 = vmul.f32 %v2450, 1.0614054
        %v2454 = vmul.f32 %v2452, 1.0614054
        %v2455 = vadd.f32 %v2453, -1.4531521
        %v2456 = vadd.f32 %v2454, -1.4531521
        %v2457 = vmul.f32 %v2455, %v2450
        %v2458 = vmul.f32 %v2456, %v2452
        %v2459 = vadd.f32 %v2457, 1.4214138
        %v2460 = vadd.f32 %v2458, 1.4214138
        %v2461 = vmul.f32 %v2459, %v2450
        %v2462 = vmul.f32 %v2460, %v2452
        %v2463 = vadd.f32 %v2461, -0.28449672
        %v2464 = vadd.f32 %v2462, -0.28449672
        %v2465 = vmul.f32 %v2463, %v2450
        %v2466 = vmul.f32 %v2464, %v2452
        %v2467 = vadd.f32 %v2465, 0.2548296
        %v2468 = vadd.f32 %v2466, 0.2548296
        %v2469 = vmul.f32 %v2467, %v2450
        %v2470 = vmul.f32 %v2468, %v2452
        %v2471 = vsub.f32 0.0, %v2443
        %v2472 = vsub.f32 0.0, %v2444
        %v2473 = vmul.f32 %v2471, %v2443
        %v2474 = vmul.f32 %v2472, %v2444
        %v2475 = vmul.f32 %v2473, 1.442695
        %v2476 = vpow.pop %v2475
        %v2477 = vmul.f32 %v2474, 1.442695
        %v2478 = vpow.pop %v2477
        %v2479 = vmul.f32 %v2469, %v2476
        %v2480 = vmul.f32 %v2470, %v2478
        %v2481 = vsub.f32 1.0, %v2479
        %v2482 = vsub.f32 1.0, %v2480
        %v2483 = vmul.f32 %v2441, %v2481
        %v2484 = vmul.f32 %v2442, %v2482
        %v2485 = vadd.f32 %v2483, 1.0
        %v2486 = vadd.f32 %v2484, 1.0
        %v2487 = vmul.f32 %v2435, %v2485
        %v2488 = vmul.f32 %v2436, %v2486
        %v2489 = vpack.c.bf16 %v2488, %v2487
        %v2490 = vld [vmem:[%s986] sm:$0xf]
        %v2491 = vld [vmem:[%s986 + $0x4] sm:$0xf]
        %v2492 = vld [vmem:[%s986 + $0x8] sm:$0xf]
        %v2493 = vld [vmem:[%s986 + $0xc] sm:$0xf]
        %v2494 = vld [vmem:[%s986 + $0x10] sm:$0xf]
        %v2495 = vld [vmem:[%s986 + $0x14] sm:$0xf]
        %v2496 = vld [vmem:[%s986 + $0x18] sm:$0xf]
        %v2497 = vld [vmem:[%s986 + $0x1c] sm:$0xf]
        %v2498 = vld [vmem:[%s986 + $0x20] sm:$0xf]
        %v2499 = vld [vmem:[%s986 + $0x24] sm:$0xf]
        %v2500 = vld [vmem:[%s986 + $0x28] sm:$0xf]
        %v2501 = vld [vmem:[%s986 + $0x2c] sm:$0xf]
        %v2502 = vld [vmem:[%s986 + $0x30] sm:$0xf]
        %v2503 = vld [vmem:[%s986 + $0x34] sm:$0xf]
        %v2504 = vld [vmem:[%s986 + $0x38] sm:$0xf]
        %v2505 = vld [vmem:[%s986 + $0x3c] sm:$0xf]
        %v2506 = vld [vmem:[%s989] sm:$0x1]
        %v2508 = vlaneseq
        %v2509 = vshrl.u32 %v2508, 7
        %v2510 = vsub.s32 0, %v2509
        %v2511 = vrot.slane %v2506, %v2510
        %v2529 = vunpack.c.l.b16 %v2490
        %v2530 = vunpack.c.l.b16 %v2491
        %v2531 = vunpack.c.l.b16 %v2492
        %v2532 = vunpack.c.l.b16 %v2493
        %v2533 = vunpack.c.l.b16 %v2494
        %v2534 = vunpack.c.l.b16 %v2495
        %v2535 = vunpack.c.l.b16 %v2496
        %v2536 = vunpack.c.l.b16 %v2497
        %v2537 = vunpack.c.l.b16 %v2498
        %v2538 = vunpack.c.l.b16 %v2499
        %v2539 = vunpack.c.l.b16 %v2500
        %v2540 = vunpack.c.l.b16 %v2501
        %v2541 = vunpack.c.l.b16 %v2502
        %v2542 = vunpack.c.l.b16 %v2503
        %v2543 = vunpack.c.l.b16 %v2504
        %v2544 = vunpack.c.l.b16 %v2505
        %v2545 = vpack.c.b16 %v2530, %v2529
        %v2546 = vpack.c.b16 %v2532, %v2531
        %v2547 = vpack.c.b16 %v2534, %v2533
        %v2548 = vpack.c.b16 %v2536, %v2535
        %v2549 = vpack.c.b16 %v2538, %v2537
        %v2550 = vpack.c.b16 %v2540, %v2539
        %v2551 = vpack.c.b16 %v2542, %v2541
        %v2552 = vpack.c.b16 %v2544, %v2543
        %2561 = vmatprep.subr.bf16.mxu0 0
        %2562 = vmatpush1.bf16.msra.mxu0 %v2545
        %2563 = vmatprep.subr.bf16.mxu0 0
        %2564 = vmatpush1.bf16.msra.mxu0 %v2546
        %2565 = vmatprep.subr.bf16.mxu0 0
        %2566 = vmatpush1.bf16.msra.mxu0 %v2547
        %2567 = vmatprep.subr.bf16.mxu0 0
        %2568 = vmatpush1.bf16.msra.mxu0 %v2548
        %2569 = vmatprep.subr.bf16.mxu0 0
        %2570 = vmatpush1.bf16.msra.mxu0 %v2549
        %2571 = vmatprep.subr.bf16.mxu0 0
        %2572 = vmatpush1.bf16.msra.mxu0 %v2550
        %2573 = vmatprep.subr.bf16.mxu0 0
        %2574 = vmatpush1.bf16.msra.mxu0 %v2551
        %2575 = vmatprep.subr.bf16.mxu0 0
        %2576 = vmatpush1.bf16.msra.mxu0 %v2552
        %2577 = vmatprep.subr.bf16.mxu0 0
        %2578 = vmatpush1.bf16.msra.mxu0 0
        %2579 = vmatprep.subr.bf16.mxu0 0
        %2580 = vmatpush1.bf16.msra.mxu0 0
        %2581 = vmatprep.subr.bf16.mxu0 0
        %2582 = vmatpush1.bf16.msra.mxu0 0
        %2583 = vmatprep.subr.bf16.mxu0 0
        %2584 = vmatpush1.bf16.msra.mxu0 0
        %2585 = vmatprep.subr.bf16.mxu0 0
        %2586 = vmatpush1.bf16.msra.mxu0 0
        %2587 = vmatprep.subr.bf16.mxu0 0
        %2588 = vmatpush1.bf16.msra.mxu0 0
        %2589 = vmatprep.subr.bf16.mxu0 0
        %2590 = vmatpush1.bf16.msra.mxu0 0
        %2591 = vmatprep.subr.bf16.mxu0 0
        %2592 = vmatpush1.bf16.msra.mxu0 0
        %2593 = vmatprep.mubr.bf16.mxu0 0
        %2594 = vmatmul.mubr.bf16.gmra.mrb[0].mxu0 %v2489
        %v2595 = vpop.f32.mrb[0].mxu0
        %v2596 = vadd.f32 %v2511, %v2595
        %v2597 = vpop.f32.mrb[0].mxu0
        %v2598 = vpop.f32.mrb[0].mxu0
        %v2599 = vadd.f32 %v2511, %v2598
        %v2600 = vpop.f32.mrb[0].mxu0
        %2601 = vdwg.mxu0
        %v2602 = vadd.f32 %v2365, %v2596
        %v2603 = vadd.f32 %v2366, %v2599
        %v2604 = vld [vmem:[%s992] sm:$0x1]
        %v2605 = vld [vmem:[%s995] sm:$0x1]
        %v2606 = vsel %vm1094, %v2602, 0.0
        %2607 = vadd.xlane.f32.xlu0 %v2606
        %v2608 = vpop.xlane.xlu0 %2607
        %v2609 = vsel %vm1094, %v2603, 0.0
        %2610 = vadd.xlane.f32.xlu0 %v2609
        %v2611 = vpop.xlane.xlu0 %2610
        %v2612 = vmul.f32 %v2608, %v2330
        %v2613 = vmul.f32 %v2611, %v2330
        %v2614 = vsub.f32 %v2602, %v2612
        %v2615 = vsub.f32 %v2603, %v2613
        %v2616 = vmul.f32 %v2614, %v2614
        %v2617 = vmul.f32 %v2615, %v2615
        %v2618 = vsel %vm1094, %v2616, 0.0
        %2619 = vadd.xlane.f32.xlu0 %v2618
        %v2620 = vpop.xlane.xlu0 %2619
        %v2621 = vsel %vm1094, %v2617, 0.0
        %2622 = vadd.xlane.f32.xlu0 %v2621
        %v2623 = vpop.xlane.xlu0 %2622
        %v2624 = vmul.f32 %v2620, %v2330
        %v2625 = vmul.f32 %v2623, %v2330
        %v2626 = vadd.f32 %v2624, 1e-05
        %v2627 = vadd.f32 %v2625, 1e-05
        %v2628 = vrsqrt.pop %v2626
        %v2629 = vrsqrt.pop %v2627
        %v2630 = vmul.f32 %v2614, %v2628
        %v2631 = vmul.f32 %v2615, %v2629
        %v2633 = vlaneseq
        %v2634 = vshrl.u32 %v2633, 7
        %v2635 = vsub.s32 0, %v2634
        %v2636 = vrot.slane %v2604, %v2635
        %v2638 = vmul.f32 %v2630, %v2636
        %v2639 = vmul.f32 %v2631, %v2636
        %v2641 = vlaneseq
        %v2642 = vshrl.u32 %v2641, 7
        %v2643 = vsub.s32 0, %v2642
        %v2644 = vrot.slane %v2605, %v2643
        %v2646 = vadd.f32 %v2638, %v2644
        %v2647 = vadd.f32 %v2639, %v2644
        %2648 = vst.msk [vmem:[#allocation2] sm:$0xff] %vm1094, %v2646
        %2649 = vst.msk [vmem:[#allocation2 + $0x8] sm:$0xff] %vm1094, %v2647
        %p2650 = scmp.eq.s32.totalorder %s41, 1
        // Predicated region
        $region133: #{tpu_custom_call.1} parent=103 // pred_check
          %p2651 = pneg %p2650
        $region134: #{tpu_custom_call.1} parent=103 // pred_check_branch
          %2653 = sbr.rel (%p2651) target = $region136
        $region135: #{tpu_custom_call.1} parent=103 // pred_region
          %v2654 = vpack.c.bf16 %v2647, %v2646
          %v2655 = vld [vmem:[%s19] sm:$0xf]
          %v2656 = vld [vmem:[%s19 + $0x4] sm:$0xf]
          %v2657 = vld [vmem:[%s19 + $0x8] sm:$0xf]
          %v2658 = vld [vmem:[%s19 + $0xc] sm:$0xf]
          %v2659 = vld [vmem:[%s20] sm:$0x1]
          %v2661 = vlaneseq
          %v2662 = vshrl.u32 %v2661, 7
          %v2663 = vsub.s32 0, %v2662
          %v2664 = vrot.slane %v2659, %v2663
          %v2670 = vunpack.c.l.b16 %v2655
          %v2671 = vunpack.c.l.b16 %v2656
          %v2672 = vunpack.c.l.b16 %v2657
          %v2673 = vunpack.c.l.b16 %v2658
          %v2674 = vpack.c.b16 %v2671, %v2670
          %v2675 = vpack.c.b16 %v2673, %v2672
          %v2679 = vsel %vm1094, %v2654, 0
          %2681 = vmatprep.subr.bf16.mxu0 0
          %2682 = vmatpush1.bf16.msra.mxu0 %v2674
          %2683 = vmatprep.subr.bf16.mxu0 0
          %2684 = vmatpush1.bf16.msra.mxu0 %v2675
          %2685 = vmatprep.subr.bf16.mxu0 0
          %2686 = vmatpush1.bf16.msra.mxu0 0
          %2687 = vmatprep.subr.bf16.mxu0 0
          %2688 = vmatpush1.bf16.msra.mxu0 0
          %2689 = vmatprep.subr.bf16.mxu0 0
          %2690 = vmatpush1.bf16.msra.mxu0 0
          %2691 = vmatprep.subr.bf16.mxu0 0
          %2692 = vmatpush1.bf16.msra.mxu0 0
          %2693 = vmatprep.subr.bf16.mxu0 0
          %2694 = vmatpush1.bf16.msra.mxu0 0
          %2695 = vmatprep.subr.bf16.mxu0 0
          %2696 = vmatpush1.bf16.msra.mxu0 0
          %2697 = vmatprep.subr.bf16.mxu0 0
          %2698 = vmatpush1.bf16.msra.mxu0 0
          %2699 = vmatprep.subr.bf16.mxu0 0
          %2700 = vmatpush1.bf16.msra.mxu0 0
          %2701 = vmatprep.subr.bf16.mxu0 0
          %2702 = vmatpush1.bf16.msra.mxu0 0
          %2703 = vmatprep.subr.bf16.mxu0 0
          %2704 = vmatpush1.bf16.msra.mxu0 0
          %2705 = vmatprep.subr.bf16.mxu0 0
          %2706 = vmatpush1.bf16.msra.mxu0 0
          %2707 = vmatprep.subr.bf16.mxu0 0
          %2708 = vmatpush1.bf16.msra.mxu0 0
          %2709 = vmatprep.subr.bf16.mxu0 0
          %2710 = vmatpush1.bf16.msra.mxu0 0
          %2711 = vmatprep.subr.bf16.mxu0 0
          %2712 = vmatpush1.bf16.msra.mxu0 0
          %2713 = vmatprep.mubr.bf16.mxu0 0
          %2714 = vmatmul.mubr.bf16.gmra.mrb[0].mxu0 %v2679
          %v2715 = vpop.f32.mrb[0].mxu0
          %v2716 = vadd.f32 %v2664, %v2715
          %v2717 = vpop.f32.mrb[0].mxu0
          %v2718 = vpop.f32.mrb[0].mxu0
          %v2719 = vadd.f32 %v2664, %v2718
          %v2720 = vpop.f32.mrb[0].mxu0
          %2721 = vdwg.mxu0
          %v2722 = vsel %vm1094, %v2716, -inf
          %2723 = vmax.xlane.f32.xlu0 %v2722
          %v2724 = vpop.xlane.xlu0 %2723
          %v2725 = vsel %vm1094, %v2719, -inf
          %2726 = vmax.xlane.f32.xlu0 %v2725
          %v2727 = vpop.xlane.xlu0 %2726
          %v2728 = vsub.f32 %v2716, %v2724
          %v2729 = vsub.f32 %v2719, %v2727
          %v2730 = vmul.f32 %v2728, 1.442695
          %v2731 = vpow.pop %v2730
          %v2732 = vmul.f32 %v2729, 1.442695
          %v2733 = vpow.pop %v2732
          %v2734 = vsel %vm1094, %v2731, 0.0
          %2735 = vadd.xlane.f32.xlu0 %v2734
          %v2736 = vpop.xlane.xlu0 %2735
          %v2737 = vsel %vm1094, %v2733, 0.0
          %2738 = vadd.xlane.f32.xlu0 %v2737
          %v2739 = vpop.xlane.xlu0 %2738
          %v2740 = vrcp.pop %v2736
          %v2741 = vmul.f32 %v2731, %v2740
          %v2742 = vrcp.pop %v2739
          %v2743 = vmul.f32 %v2733, %v2742
          %vm2744 = vcmask 523520
          %v2745 = vsel %vm2744, %v2716, -inf
          %2746 = vmax.xlane.f32.xlu0 %v2745
          %v2747 = vpop.xlane.xlu0 %2746
          %v2748 = vsel %vm2744, %v2719, -inf
          %2749 = vmax.xlane.f32.xlu0 %v2748
          %v2750 = vpop.xlane.xlu0 %2749
          %v2751 = vsub.f32 %v2716, %v2747
          %v2752 = vsub.f32 %v2719, %v2750
          %v2753 = vmul.f32 %v2751, 1.442695
          %v2754 = vpow.pop %v2753
          %v2755 = vmul.f32 %v2752, 1.442695
          %v2756 = vpow.pop %v2755
          %2759 = vrot.lane.b32.xlu0 %v2754, 96
          %v2760 = vpop.permute.xlu0 %2759
          %2761 = vrot.lane.b32.xlu0 %v2756, 96
          %v2762 = vpop.permute.xlu0 %2761
          %v2765 = vsel %vm1094, %v2760, 0.0
          %2766 = vadd.xlane.f32.xlu0 %v2765
          %v2767 = vpop.xlane.xlu0 %2766
          %v2768 = vsel %vm1094, %v2762, 0.0
          %2769 = vadd.xlane.f32.xlu0 %v2768
          %v2770 = vpop.xlane.xlu0 %2769
          %v2771 = vrcp.pop %v2767
          %v2772 = vmul.f32 %v2754, %v2771
          %v2773 = vrcp.pop %v2770
          %v2774 = vmul.f32 %v2756, %v2773
          %vm2775 = vcmask 785920
          %v2776 = vsel %vm2775, %v2716, -inf
          %2777 = vmax.xlane.f32.xlu0 %v2776
          %v2778 = vpop.xlane.xlu0 %2777
          %v2779 = vsel %vm2775, %v2719, -inf
          %2780 = vmax.xlane.f32.xlu0 %v2779
          %v2781 = vpop.xlane.xlu0 %2780
          %v2782 = vsub.f32 %v2716, %v2778
          %v2783 = vsub.f32 %v2719, %v2781
          %v2784 = vmul.f32 %v2782, 1.442695
          %v2785 = vpow.pop %v2784
          %v2786 = vmul.f32 %v2783, 1.442695
          %v2787 = vpow.pop %v2786
          %2790 = vrot.lane.b32.xlu0 %v2785, 64
          %v2791 = vpop.permute.xlu0 %2790
          %2792 = vrot.lane.b32.xlu0 %v2787, 64
          %v2793 = vpop.permute.xlu0 %2792
          %v2796 = vsel %vm1094, %v2791, 0.0
          %2797 = vadd.xlane.f32.xlu0 %v2796
          %v2798 = vpop.xlane.xlu0 %2797
          %v2799 = vsel %vm1094, %v2793, 0.0
          %2800 = vadd.xlane.f32.xlu0 %v2799
          %v2801 = vpop.xlane.xlu0 %2800
          %v2802 = vrcp.pop %v2798
          %v2803 = vmul.f32 %v2785, %v2802
          %v2804 = vrcp.pop %v2801
          %v2805 = vmul.f32 %v2787, %v2804
          %vm2806 = vcmask 1048320
          %v2807 = vsel %vm2806, %v2716, -inf
          %2808 = vmax.xlane.f32.xlu0 %v2807
          %v2809 = vpop.xlane.xlu0 %2808
          %v2810 = vsel %vm2806, %v2719, -inf
          %2811 = vmax.xlane.f32.xlu0 %v2810
          %v2812 = vpop.xlane.xlu0 %2811
          %v2813 = vsub.f32 %v2716, %v2809
          %v2814 = vsub.f32 %v2719, %v2812
          %v2815 = vmul.f32 %v2813, 1.442695
          %v2816 = vpow.pop %v2815
          %v2817 = vmul.f32 %v2814, 1.442695
          %v2818 = vpow.pop %v2817
          %2821 = vrot.lane.b32.xlu0 %v2816, 32
          %v2822 = vpop.permute.xlu0 %2821
          %2823 = vrot.lane.b32.xlu0 %v2818, 32
          %v2824 = vpop.permute.xlu0 %2823
          %v2827 = vsel %vm1094, %v2822, 0.0
          %2828 = vadd.xlane.f32.xlu0 %v2827
          %v2829 = vpop.xlane.xlu0 %2828
          %v2830 = vsel %vm1094, %v2824, 0.0
          %2831 = vadd.xlane.f32.xlu0 %v2830
          %v2832 = vpop.xlane.xlu0 %2831
          %v2833 = vrcp.pop %v2829
          %v2834 = vmul.f32 %v2816, %v2833
          %v2835 = vrcp.pop %v2832
          %v2836 = vmul.f32 %v2818, %v2835
          %v2837 = vsel %vm1094, %v2741, %v2772
          %v2838 = vsel %vm1094, %v2743, %v2774
          %vm2839 = vcmask 523264
          %v2840 = vsel %vm2839, %v2837, %v2803
          %v2841 = vsel %vm2839, %v2838, %v2805
          %vm2842 = vcmask 785408
          %v2843 = vsel %vm2842, %v2840, %v2834
          %v2844 = vsel %vm2842, %v2841, %v2836
          %2845 = vst [vmem:[#allocation13] sm:$0xff] %v2843
          %2846 = vst [vmem:[#allocation13 + $0x8] sm:$0xff] %v2844
        $region136: #{tpu_custom_call.1} parent=103 // pred_fallthru
          _
        %s2847 = sand.u32 %s586, 1
        %s2848 = scalar_lea.sflag [#allocation15], %s2847
        %s2849 = sand.u32 %s586, 1
        %s2850 = smul.addr %s2849, 32
        %s2851 = scalar_lea.vmem [#allocation14], %s2850
        // Predicated region
        $region137: #{tpu_custom_call.1} parent=103 // pred_check
          %p2852 = pneg %p570
        $region138: #{tpu_custom_call.1} parent=103 // pred_check_branch
          %2854 = sbr.rel (%p2852) target = $region140
        $region139: #{tpu_custom_call.1} parent=103 // pred_region
          %s2856 = ssub.s32 256, 256
          %2857 = vsyncadd [#allocation5], %s2856
          %s2858 = sshll.u32 [#allocation13], 4
          %s2859 = int_to_ptr.vmem [resolvable:$true] %s2858
          %2864 = dma.vmem_to_hbm [thread:$0]  %s2859, 256, %s21, [#allocation5], 128, 128, 8
        $region140: #{tpu_custom_call.1} parent=103 // pred_fallthru
          _
        // Predicated region
        $region141: #{tpu_custom_call.1} parent=103 // pred_check
          %p2865 = pneg %p596
        $region142: #{tpu_custom_call.1} parent=103 // pred_check_branch
          %2867 = sbr.rel (%p2865) target = $region144
        $region143: #{tpu_custom_call.1} parent=103 // pred_region
          %s2869 = ssub.s32 512, 512
          %2870 = vsyncadd %s2848, %s2869
          %s2871 = smul.addr %s41, 4
          %s2872 = smul.addr %s2871, 128
          %s2873 = scalar_lea.hbm %s22, %s2872
          %s2874 = sshll.u32 %s2851, 4
          %s2875 = int_to_ptr.vmem [resolvable:$true] %s2874
          %2880 = dma.vmem_to_hbm [thread:$0]  %s2875, 512, %s2873, %s2848, 128, 128, 8
        $region144: #{tpu_custom_call.1} parent=103 // pred_fallthru
          _
        // Predicated region
        $region145: #{tpu_custom_call.1} parent=103 // pred_check
          %p2881 = pneg %p570
        $region146: #{tpu_custom_call.1} parent=103 // pred_check_branch
          %2883 = sbr.rel (%p2881) target = $region148
        $region147: #{tpu_custom_call.1} parent=103 // pred_region
          %2884 = dma.done [#allocation5], 256
        $region148: #{tpu_custom_call.1} parent=103 // pred_fallthru
          _
      $region104: #{tpu_custom_call.1} parent=5 // pred_fallthru
        _
      %p2885 = scmp.le.s32.totalorder 2, %s36
      // Predicated region
      $region149: #{tpu_custom_call.1} parent=5 // pred_check
        %p2886 = pneg %p2885
      $region150: #{tpu_custom_call.1} parent=5 // pred_check_branch
        %2888 = sbr.rel (%p2886) target = $region152
      $region151: #{tpu_custom_call.1} parent=5 // pred_region
        %s2889 = ssub.s32 %s36, 2
        // Predicated region
        $region153: #{tpu_custom_call.1} parent=151 // pred_check
          %p2890 = pneg %p602
        $region154: #{tpu_custom_call.1} parent=151 // pred_check_branch
          %2892 = sbr.rel (%p2890) target = $region156
        $region155: #{tpu_custom_call.1} parent=151 // pred_region
          %s2893 = sand.u32 %s587, 1
          %s2894 = scalar_lea.sflag [#allocation15], %s2893
          %s2895 = sand.u32 %s587, 1
          %s2896 = smul.addr %s2895, 32
          %s2897 = scalar_lea.vmem [#allocation14], %s2896
          %2898 = dma.done %s2894, 512
        $region156: #{tpu_custom_call.1} parent=151 // pred_fallthru
          _
      $region152: #{tpu_custom_call.1} parent=5 // pred_fallthru
        _
    $region6: #{tpu_custom_call.1} parent=1 // loop_footer
      %s40 = sadd.s32 1, %s36
    $region7: #{tpu_custom_call.1} parent=1 // loop_footer_branch
      %35 = sbr.rel target = $region3
    $region8: #{tpu_custom_call.1} parent=1 // loop_exit
      _
    %2899 = vsyncpa [#allocation4], 1
    %s2900 = scalar_lea.sflag [#allocation4], 1
    %2901 = vsyncpa %s2900, 1
    %2902 = vsyncpa [#allocation7], 1
    %2903 = vsyncpa [#allocation10], 1
    %2904 = vsyncpa [#allocation5], 1
    %s2905 = scalar_lea.sflag [#allocation5], 1
    %2906 = vsyncpa %s2905, 1
    %2907 = vsyncpa [#allocation15], 1
    %s2908 = scalar_lea.sflag [#allocation15], 1
    %2909 = vsyncpa %s2908, 1

</llo_original>
